<compile_context>
chip_gen: v7x
topology: tpu7x:2x2x1
jax: 0.10.0
libtpu: 0.0.40
codegen_flags: <defaults>
</compile_context>

<pallas_src>
import functools
import math

import jax
import jax.numpy as jnp
from jax.experimental import pallas as pl
from jax.experimental.pallas import tpu as pltpu


CFG = dict(
    vocab=100, max_pos=16, type_vocab=2,
    hidden=32, heads=2, head_dim=16, intermediate=64,
    layers=2, num_labels=2,
)


# ----------------------------- fused kernel -----------------------------

def _fused_bert_kernel(*refs, cfg, batch, seq, with_loss):
    H, NH, DH = cfg["hidden"], cfg["heads"], cfg["head_dim"]
    L = cfg["layers"]
    B, S = batch, seq
    BS = B * S
    scale = 1.0 / math.sqrt(DH)
    bf16 = jnp.bfloat16

    (x_ref, eg_ref, eb_ref,
     wq_ref, bq_ref, wk_ref, bk_ref, wv_ref, bv_ref,
     wo_ref, bo_ref, ln1g_ref, ln1b_ref,
     w1_ref, b1_ref, w2_ref, b2_ref, ln2g_ref, ln2b_ref,
     pw_ref, pb_ref, cw_ref, cb_ref) = refs[:23]
    k = 23
    if with_loss:
        y_ref = refs[k]
        logits_ref, loss_ref = refs[k + 1], refs[k + 2]
    else:
        logits_ref = refs[k]

    def layer_norm(v, g, b):
        # mean/var on the XLU and rsqrt on the EUP -> nearly free next to the MXU work
        mu = jnp.mean(v, axis=-1, keepdims=True)
        var = jnp.mean((v - mu) ** 2, axis=-1, keepdims=True)
        return (v - mu) * jax.lax.rsqrt(var + 1e-12) * g + b

    def mm(a_f32, w_bf16):
        # bf16 MXU matmul with f32 accumulation
        return jnp.dot(a_f32.astype(bf16), w_bf16, preferred_element_type=jnp.float32)

    # ---- embeddings LayerNorm (embedding gather/sum was done in JAX glue) ----
    x = layer_norm(x_ref[...], eg_ref[...], eb_ref[...])          # (BS, H) f32

    # ---- transformer encoder (statically unrolled, VMEM/vreg-resident x) ----
    # TODO(synk): convert to a grid axis / lax.fori_loop at L=12 to bound
    #             vreg live ranges and enable per-layer weight streaming.
    for l in range(L):
        # --- multi-head self-attention: full-width QKV, per-head batched attn ---
        xb = x.astype(bf16)
        q = jnp.dot(xb, wq_ref[l], preferred_element_type=jnp.float32) + bq_ref[l]
        kk = jnp.dot(xb, wk_ref[l], preferred_element_type=jnp.float32) + bk_ref[l]
        v = jnp.dot(xb, wv_ref[l], preferred_element_type=jnp.float32) + bv_ref[l]

        ctx_heads = []
        for h in range(NH):
            sl = slice(h * DH, (h + 1) * DH)
            q_h = q[:, sl].reshape(B, S, DH).astype(bf16)
            k_h = kk[:, sl].reshape(B, S, DH).astype(bf16)
            v_h = v[:, sl].reshape(B, S, DH).astype(bf16)
            # scores: (B,S,DH) x (B,S,DH) -> (B,S,S), batched over B
            s = jax.lax.dot_general(q_h, k_h, (((2,), (2,)), ((0,), (0,))),
                                    preferred_element_type=jnp.float32) * scale
            s = s - jnp.max(s, axis=-1, keepdims=True)
            p = jnp.exp(s)
            p = p * pl.reciprocal(jnp.sum(p, axis=-1, keepdims=True), approx=True)
            # context: (B,S,S) x (B,S,DH) -> (B,S,DH), batched over B
            ctx_h = jax.lax.dot_general(p.astype(bf16), v_h,
                                        (((2,), (1,)), ((0,), (0,))),
                                        preferred_element_type=jnp.float32)
            ctx_heads.append(ctx_h.reshape(BS, DH))
        ctx = jnp.concatenate(ctx_heads, axis=-1)                  # (BS, H) f32
        attn_out = mm(ctx, wo_ref[l]) + bo_ref[l]
        # fused residual + LayerNorm (f32)
        x = layer_norm(x + attn_out, ln1g_ref[l], ln1b_ref[l])

        # --- feed-forward block (bias + GELU fused, then residual + LayerNorm) ---
        h1 = mm(x, w1_ref[l]) + b1_ref[l]
        h1 = jax.nn.gelu(h1, approximate=True)   # TODO(synk): exact erf GELU as in HF BERT
        ff = mm(h1, w2_ref[l]) + b2_ref[l]
        x = layer_norm(x + ff, ln2g_ref[l], ln2b_ref[l])

    # ---- pooler (CLS token) + classifier, fused in the same kernel ----
    cls = x.reshape(B, S, H)[:, 0, :]                              # (B, H), static slice
    pooled = jnp.tanh(mm(cls, pw_ref[...]) + pb_ref[...])
    # Dropout(p=0.2) is identity in eval mode.
    logits = mm(pooled, cw_ref[...]) + cb_ref[...]
    logits_ref[...] = logits

    if with_loss:
        y = y_ref[...]
        # BCEWithLogitsLoss (mean reduction), numerically stable form
        per = (jnp.maximum(logits, 0.0) - logits * y
               + jnp.log(1.0 + jnp.exp(-jnp.abs(logits))))
        loss_ref[...] = jnp.mean(per, axis=(0, 1), keepdims=True)


# ----------------------------- params & packing -----------------------------

def init_params(key, cfg):
    """Synthetic small-BERT weights in the conventional per-layer format."""
    H, I = cfg["hidden"], cfg["intermediate"]
    keys = iter(jax.random.split(key, 64))

    def nrm(shape):
        return (0.02 * jax.random.normal(next(keys), shape)).astype(jnp.float32)

    p = {
        "word_emb": nrm((cfg["vocab"], H)),
        "pos_emb": nrm((cfg["max_pos"], H)),
        "type_emb": nrm((cfg["type_vocab"], H)),
        "emb_ln_g": jnp.ones((H,), jnp.float32),
        "emb_ln_b": jnp.zeros((H,), jnp.float32),
        "pool_w": nrm((H, H)),
        "pool_b": jnp.zeros((H,), jnp.float32),
        "cls_w": nrm((H, cfg["num_labels"])),
        "cls_b": jnp.zeros((cfg["num_labels"],), jnp.float32),
        "layers": [],
    }
    for _ in range(cfg["layers"]):
        p["layers"].append({
            "wq": nrm((H, H)), "bq": jnp.zeros((H,), jnp.float32),
            "wk": nrm((H, H)), "bk": jnp.zeros((H,), jnp.float32),
            "wv": nrm((H, H)), "bv": jnp.zeros((H,), jnp.float32),
            "wo": nrm((H, H)), "bo": jnp.zeros((H,), jnp.float32),
            "ln1_g": jnp.ones((H,), jnp.float32), "ln1_b": jnp.zeros((H,), jnp.float32),
            "w1": nrm((H, I)), "b1": jnp.zeros((I,), jnp.float32),
            "w2": nrm((I, H)), "b2": jnp.zeros((H,), jnp.float32),
            "ln2_g": jnp.ones((H,), jnp.float32), "ln2_b": jnp.zeros((H,), jnp.float32),
        })
    return p


def pack_params(params, cfg):
    """One-time re-layout (outside the hot path):
    layer weights stacked on a leading layer axis, matmul weights in bf16,
    biases/LayerNorm params kept in f32 as (..., 1, N) broadcast rows."""
    H, I = cfg["hidden"], cfg["intermediate"]
    NL = cfg["num_labels"]
    Ls = params["layers"]
    bf16 = jnp.bfloat16

    def stack_w(name, dtype=bf16):
        return jnp.stack([l[name] for l in Ls], 0).astype(dtype)

    def stack_row(name, n):
        return jnp.stack([l[name].reshape(1, n) for l in Ls], 0)   # (L, 1, n) f32

    return dict(
        emb_ln_g=params["emb_ln_g"].reshape(1, H),
        emb_ln_b=params["emb_ln_b"].reshape(1, H),
        wq=stack_w("wq"), bq=stack_row("bq", H),                   # (L,H,H) bf16 / (L,1,H) f32
        wk=stack_w("wk"), bk=stack_row("bk", H),
        wv=stack_w("wv"), bv=stack_row("bv", H),
        wo=stack_w("wo"), bo=stack_row("bo", H),
        ln1_g=stack_row("ln1_g", H), ln1_b=stack_row("ln1_b", H),
        w1=stack_w("w1"), b1=stack_row("b1", I),                   # (L,H,I) bf16
        w2=stack_w("w2"), b2=stack_row("b2", H),                   # (L,I,H) bf16
        ln2_g=stack_row("ln2_g", H), ln2_b=stack_row("ln2_b", H),
        pool_w=params["pool_w"].astype(bf16),
        pool_b=params["pool_b"].reshape(1, H),
        cls_w=params["cls_w"].astype(bf16),
        cls_b=params["cls_b"].reshape(1, NL),
    )


def _estimate_flops(cfg, B, S):
    H, I, L = cfg["hidden"], cfg["intermediate"], cfg["layers"]
    NH, DH, NL = cfg["heads"], cfg["head_dim"], cfg["num_labels"]
    BS = B * S
    per_layer = (2 * BS * H * H * 3                 # Q/K/V projections
                 + 2 * B * NH * S * S * DH * 2      # scores + context
                 + 2 * BS * H * H                   # output projection
                 + 2 * BS * H * I * 2)              # FFN
    return L * per_layer + 2 * B * H * H + 2 * B * H * NL


# ----------------------------- forward wrapper -----------------------------

def bert_forward(params, input_ids, cfg, labels=None):
    """Whole BertForMultiLabelSequenceClassification forward in ONE pallas_call."""
    B, S = input_ids.shape
    H, NL = cfg["hidden"], cfg["num_labels"]
    assert cfg["heads"] * cfg["head_dim"] == H
    assert S <= cfg["max_pos"]

    pk = pack_params(params, cfg)

    # Embedding lookup (gather) stays in JAX glue; token_type_ids=None -> all type 0.
    # TODO(synk): at real scale, prefetch input_ids (SMEM) + DMA-gather rows in-kernel.
    x_emb = (params["word_emb"][input_ids]
             + params["pos_emb"][:S][None, :, :]
             + params["type_emb"][0][None, None, :]).reshape(B * S, H).astype(jnp.float32)

    with_loss = labels is not None

    inputs = [x_emb,
              pk["emb_ln_g"], pk["emb_ln_b"],
              pk["wq"], pk["bq"], pk["wk"], pk["bk"], pk["wv"], pk["bv"],
              pk["wo"], pk["bo"], pk["ln1_g"], pk["ln1_b"],
              pk["w1"], pk["b1"], pk["w2"], pk["b2"], pk["ln2_g"], pk["ln2_b"],
              pk["pool_w"], pk["pool_b"], pk["cls_w"], pk["cls_b"]]
    if with_loss:
        inputs.append(labels.reshape(B, NL).astype(jnp.float32))

    vmem = pl.BlockSpec(memory_space=pltpu.MemorySpace.VMEM)
    if with_loss:
        out_shape = (jax.ShapeDtypeStruct((B, NL), jnp.float32),
                     jax.ShapeDtypeStruct((1, 1), jnp.float32))
        out_specs = (vmem, vmem)
    else:
        out_shape = jax.ShapeDtypeStruct((B, NL), jnp.float32)
        out_specs = vmem

    kernel = functools.partial(_fused_bert_kernel, cfg=cfg, batch=B, seq=S,
                               with_loss=with_loss)

    bytes_accessed = int(sum(a.size * a.dtype.itemsize for a in inputs)) + 4 * (B * NL + 1)
    transcendentals = (cfg["layers"] * (cfg["heads"] * B * S * S
                                        + B * S * cfg["intermediate"]) + B * H)

    out = pl.pallas_call(
        kernel,
        out_shape=out_shape,
        in_specs=[vmem] * len(inputs),
        out_specs=out_specs,
        cost_estimate=pl.CostEstimate(flops=_estimate_flops(cfg, B, S),
                                      transcendentals=transcendentals,
                                      bytes_accessed=bytes_accessed),
    )(*inputs)

    if with_loss:
        return out[1][0, 0]   # scalar BCEWithLogitsLoss
    return out                # (B, num_labels) logits


# ----------------------------- main -----------------------------

if __name__ == "__main__":
    key = jax.random.PRNGKey(0)
    k_param, k_ids, k_lab = jax.random.split(key, 3)

    cfg = CFG
    params = init_params(k_param, cfg)

    B, S = 2, 8
    input_ids = jax.random.randint(k_ids, (B, S), 0, cfg["vocab"], dtype=jnp.int32)

    # labels=None path -> logits of shape (B, num_labels)
    logits = bert_forward(params, input_ids, cfg)
    logits = jax.block_until_ready(logits)
    assert logits.shape == (B, cfg["num_labels"])

    # labels path -> scalar BCEWithLogitsLoss
    labels = jax.random.bernoulli(k_lab, 0.5, (B, cfg["num_labels"])).astype(jnp.float32)
    loss = bert_forward(params, input_ids, cfg, labels=labels)
    loss = jax.block_until_ready(loss)
    assert loss.shape == ()

    print("KERNEL_OK")
</pallas_src>

<mosaic_0001>
module attributes {stable_mosaic.version = 11 : i64} {
  func.func @_fused_bert_kernel(%arg0: memref<16x32xf32, #tpu.memory_space<vmem>>, %arg1: memref<1x32xf32, #tpu.memory_space<vmem>>, %arg2: memref<1x32xf32, #tpu.memory_space<vmem>>, %arg3: memref<2x32x32xbf16, #tpu.memory_space<vmem>>, %arg4: memref<2x1x32xf32, #tpu.memory_space<vmem>>, %arg5: memref<2x32x32xbf16, #tpu.memory_space<vmem>>, %arg6: memref<2x1x32xf32, #tpu.memory_space<vmem>>, %arg7: memref<2x32x32xbf16, #tpu.memory_space<vmem>>, %arg8: memref<2x1x32xf32, #tpu.memory_space<vmem>>, %arg9: memref<2x32x32xbf16, #tpu.memory_space<vmem>>, %arg10: memref<2x1x32xf32, #tpu.memory_space<vmem>>, %arg11: memref<2x1x32xf32, #tpu.memory_space<vmem>>, %arg12: memref<2x1x32xf32, #tpu.memory_space<vmem>>, %arg13: memref<2x32x64xbf16, #tpu.memory_space<vmem>>, %arg14: memref<2x1x64xf32, #tpu.memory_space<vmem>>, %arg15: memref<2x64x32xbf16, #tpu.memory_space<vmem>>, %arg16: memref<2x1x32xf32, #tpu.memory_space<vmem>>, %arg17: memref<2x1x32xf32, #tpu.memory_space<vmem>>, %arg18: memref<2x1x32xf32, #tpu.memory_space<vmem>>, %arg19: memref<32x32xbf16, #tpu.memory_space<vmem>>, %arg20: memref<1x32xf32, #tpu.memory_space<vmem>>, %arg21: memref<32x2xbf16, #tpu.memory_space<vmem>>, %arg22: memref<1x2xf32, #tpu.memory_space<vmem>>, %arg23: memref<2x2xf32, #tpu.memory_space<vmem>>) attributes {dimension_semantics = [], scalar_prefetch = 0 : i64, scratch_operands = 0 : i64, tpu.core_type = #tpu.core_type<tc>} {
    %c0 = arith.constant 0 : index
    %c0_0 = arith.constant 0 : index
    %0 = vector.load %arg0[%c0, %c0_0] : memref<16x32xf32, #tpu.memory_space<vmem>>, vector<16x32xf32>
    %c0_1 = arith.constant 0 : index
    %c0_2 = arith.constant 0 : index
    %1 = vector.load %arg1[%c0_1, %c0_2] : memref<1x32xf32, #tpu.memory_space<vmem>>, vector<1x32xf32>
    %c0_3 = arith.constant 0 : index
    %c0_4 = arith.constant 0 : index
    %2 = vector.load %arg2[%c0_3, %c0_4] : memref<1x32xf32, #tpu.memory_space<vmem>>, vector<1x32xf32>
    %cst = arith.constant dense<0.000000e+00> : vector<16xf32>
    %3 = vector.multi_reduction <add>, %0, %cst [1] : vector<16x32xf32> to vector<16xf32>
    %4 = vector.shape_cast %3 : vector<16xf32> to vector<16x1xf32>
    %cst_5 = arith.constant 3.200000e+01 : f32
    %5 = vector.broadcast %cst_5 : f32 to vector<16x1xf32>
    %6 = arith.divf %4, %5 : vector<16x1xf32>
    %7 = vector.broadcast %6 : vector<16x1xf32> to vector<16x32xf32>
    %8 = arith.subf %0, %7 : vector<16x32xf32>
    %9 = arith.mulf %8, %8 : vector<16x32xf32>
    %cst_6 = arith.constant dense<0.000000e+00> : vector<16xf32>
    %10 = vector.multi_reduction <add>, %9, %cst_6 [1] : vector<16x32xf32> to vector<16xf32>
    %11 = vector.shape_cast %10 : vector<16xf32> to vector<16x1xf32>
    %cst_7 = arith.constant 3.200000e+01 : f32
    %12 = vector.broadcast %cst_7 : f32 to vector<16x1xf32>
    %13 = arith.divf %11, %12 : vector<16x1xf32>
    %14 = vector.broadcast %6 : vector<16x1xf32> to vector<16x32xf32>
    %15 = arith.subf %0, %14 : vector<16x32xf32>
    %cst_8 = arith.constant 9.99999996E-13 : f32
    %16 = vector.broadcast %cst_8 : f32 to vector<16x1xf32>
    %17 = arith.addf %13, %16 : vector<16x1xf32>
    %18 = math.rsqrt %17 : vector<16x1xf32>
    %19 = vector.broadcast %18 : vector<16x1xf32> to vector<16x32xf32>
    %20 = arith.mulf %15, %19 : vector<16x32xf32>
    %21 = vector.broadcast %1 : vector<1x32xf32> to vector<16x32xf32>
    %22 = arith.mulf %20, %21 : vector<16x32xf32>
    %23 = vector.broadcast %2 : vector<1x32xf32> to vector<16x32xf32>
    %24 = arith.addf %22, %23 : vector<16x32xf32>
    %25 = arith.truncf %24 : vector<16x32xf32> to vector<16x32xbf16>
    %c0_9 = arith.constant 0 : index
    %c0_10 = arith.constant 0 : index
    %c0_11 = arith.constant 0 : index
    %26 = vector.load %arg3[%c0_9, %c0_10, %c0_11] : memref<2x32x32xbf16, #tpu.memory_space<vmem>>, vector<1x32x32xbf16>
    %27 = vector.shape_cast %26 : vector<1x32x32xbf16> to vector<32x32xbf16>
    %cst_12 = arith.constant dense<0.000000e+00> : vector<16x32xf32>
    %28 = tpu.matmul %25, %27, %cst_12 {dimension_numbers = #tpu.dot_dimension_numbers<[1], [0], [0], [1], [0, 0, 1, 1], [], []>} : vector<16x32xbf16>, vector<32x32xbf16>, vector<16x32xf32> -> vector<16x32xf32>
    %c0_13 = arith.constant 0 : index
    %c0_14 = arith.constant 0 : index
    %c0_15 = arith.constant 0 : index
    %29 = vector.load %arg4[%c0_13, %c0_14, %c0_15] : memref<2x1x32xf32, #tpu.memory_space<vmem>>, vector<1x1x32xf32>
    %30 = vector.shape_cast %29 : vector<1x1x32xf32> to vector<1x32xf32>
    %31 = vector.broadcast %30 : vector<1x32xf32> to vector<16x32xf32>
    %32 = arith.addf %28, %31 : vector<16x32xf32>
    %c0_16 = arith.constant 0 : index
    %c0_17 = arith.constant 0 : index
    %c0_18 = arith.constant 0 : index
    %33 = vector.load %arg5[%c0_16, %c0_17, %c0_18] : memref<2x32x32xbf16, #tpu.memory_space<vmem>>, vector<1x32x32xbf16>
    %34 = vector.shape_cast %33 : vector<1x32x32xbf16> to vector<32x32xbf16>
    %cst_19 = arith.constant dense<0.000000e+00> : vector<16x32xf32>
    %35 = tpu.matmul %25, %34, %cst_19 {dimension_numbers = #tpu.dot_dimension_numbers<[1], [0], [0], [1], [0, 0, 1, 1], [], []>} : vector<16x32xbf16>, vector<32x32xbf16>, vector<16x32xf32> -> vector<16x32xf32>
    %c0_20 = arith.constant 0 : index
    %c0_21 = arith.constant 0 : index
    %c0_22 = arith.constant 0 : index
    %36 = vector.load %arg6[%c0_20, %c0_21, %c0_22] : memref<2x1x32xf32, #tpu.memory_space<vmem>>, vector<1x1x32xf32>
    %37 = vector.shape_cast %36 : vector<1x1x32xf32> to vector<1x32xf32>
    %38 = vector.broadcast %37 : vector<1x32xf32> to vector<16x32xf32>
    %39 = arith.addf %35, %38 : vector<16x32xf32>
    %c0_23 = arith.constant 0 : index
    %c0_24 = arith.constant 0 : index
    %c0_25 = arith.constant 0 : index
    %40 = vector.load %arg7[%c0_23, %c0_24, %c0_25] : memref<2x32x32xbf16, #tpu.memory_space<vmem>>, vector<1x32x32xbf16>
    %41 = vector.shape_cast %40 : vector<1x32x32xbf16> to vector<32x32xbf16>
    %cst_26 = arith.constant dense<0.000000e+00> : vector<16x32xf32>
    %42 = tpu.matmul %25, %41, %cst_26 {dimension_numbers = #tpu.dot_dimension_numbers<[1], [0], [0], [1], [0, 0, 1, 1], [], []>} : vector<16x32xbf16>, vector<32x32xbf16>, vector<16x32xf32> -> vector<16x32xf32>
    %c0_27 = arith.constant 0 : index
    %c0_28 = arith.constant 0 : index
    %c0_29 = arith.constant 0 : index
    %43 = vector.load %arg8[%c0_27, %c0_28, %c0_29] : memref<2x1x32xf32, #tpu.memory_space<vmem>>, vector<1x1x32xf32>
    %44 = vector.shape_cast %43 : vector<1x1x32xf32> to vector<1x32xf32>
    %45 = vector.broadcast %44 : vector<1x32xf32> to vector<16x32xf32>
    %46 = arith.addf %42, %45 : vector<16x32xf32>
    %47 = vector.extract_strided_slice %32 {offsets = [0, 0], sizes = [16, 16], strides = [1, 1]} : vector<16x32xf32> to vector<16x16xf32>
    %48 = vector.shape_cast %47 : vector<16x16xf32> to vector<2x8x16xf32>
    %49 = arith.truncf %48 : vector<2x8x16xf32> to vector<2x8x16xbf16>
    %50 = vector.extract_strided_slice %39 {offsets = [0, 0], sizes = [16, 16], strides = [1, 1]} : vector<16x32xf32> to vector<16x16xf32>
    %51 = vector.shape_cast %50 : vector<16x16xf32> to vector<2x8x16xf32>
    %52 = arith.truncf %51 : vector<2x8x16xf32> to vector<2x8x16xbf16>
    %53 = vector.extract_strided_slice %46 {offsets = [0, 0], sizes = [16, 16], strides = [1, 1]} : vector<16x32xf32> to vector<16x16xf32>
    %54 = vector.shape_cast %53 : vector<16x16xf32> to vector<2x8x16xf32>
    %55 = arith.truncf %54 : vector<2x8x16xf32> to vector<2x8x16xbf16>
    %cst_30 = arith.constant dense<0.000000e+00> : vector<2x8x8xf32>
    %56 = tpu.matmul %49, %52, %cst_30 {dimension_numbers = #tpu.dot_dimension_numbers<[2], [2], [1], [1], [0, 0, 0, 1, 1, 1], [0], [0]>} : vector<2x8x16xbf16>, vector<2x8x16xbf16>, vector<2x8x8xf32> -> vector<2x8x8xf32>
    %cst_31 = arith.constant 2.500000e-01 : f32
    %57 = vector.broadcast %cst_31 : f32 to vector<2x8x8xf32>
    %58 = arith.mulf %56, %57 : vector<2x8x8xf32>
    %cst_32 = arith.constant dense<0xFF800000> : vector<2x8xf32>
    %59 = vector.multi_reduction <maximumf>, %58, %cst_32 [2] : vector<2x8x8xf32> to vector<2x8xf32>
    %60 = vector.shape_cast %59 : vector<2x8xf32> to vector<2x8x1xf32>
    %61 = vector.broadcast %60 : vector<2x8x1xf32> to vector<2x8x8xf32>
    %62 = arith.subf %58, %61 : vector<2x8x8xf32>
    %63 = math.exp %62 : vector<2x8x8xf32>
    %cst_33 = arith.constant dense<0.000000e+00> : vector<2x8xf32>
    %64 = vector.multi_reduction <add>, %63, %cst_33 [2] : vector<2x8x8xf32> to vector<2x8xf32>
    %65 = vector.shape_cast %64 : vector<2x8xf32> to vector<2x8x1xf32>
    %66 = tpu.reciprocal %65 {approx = true} : vector<2x8x1xf32> -> vector<2x8x1xf32>
    %67 = vector.broadcast %66 : vector<2x8x1xf32> to vector<2x8x8xf32>
    %68 = arith.mulf %63, %67 : vector<2x8x8xf32>
    %69 = arith.truncf %68 : vector<2x8x8xf32> to vector<2x8x8xbf16>
    %cst_34 = arith.constant dense<0.000000e+00> : vector<2x8x16xf32>
    %70 = tpu.matmul %69, %55, %cst_34 {dimension_numbers = #tpu.dot_dimension_numbers<[2], [1], [1], [2], [0, 0, 0, 1, 1, 2], [0], [0]>} : vector<2x8x8xbf16>, vector<2x8x16xbf16>, vector<2x8x16xf32> -> vector<2x8x16xf32>
    %71 = vector.shape_cast %70 : vector<2x8x16xf32> to vector<16x16xf32>
    %72 = vector.extract_strided_slice %32 {offsets = [0, 16], sizes = [16, 16], strides = [1, 1]} : vector<16x32xf32> to vector<16x16xf32>
    %73 = vector.shape_cast %72 : vector<16x16xf32> to vector<2x8x16xf32>
    %74 = arith.truncf %73 : vector<2x8x16xf32> to vector<2x8x16xbf16>
    %75 = vector.extract_strided_slice %39 {offsets = [0, 16], sizes = [16, 16], strides = [1, 1]} : vector<16x32xf32> to vector<16x16xf32>
    %76 = vector.shape_cast %75 : vector<16x16xf32> to vector<2x8x16xf32>
    %77 = arith.truncf %76 : vector<2x8x16xf32> to vector<2x8x16xbf16>
    %78 = vector.extract_strided_slice %46 {offsets = [0, 16], sizes = [16, 16], strides = [1, 1]} : vector<16x32xf32> to vector<16x16xf32>
    %79 = vector.shape_cast %78 : vector<16x16xf32> to vector<2x8x16xf32>
    %80 = arith.truncf %79 : vector<2x8x16xf32> to vector<2x8x16xbf16>
    %cst_35 = arith.constant dense<0.000000e+00> : vector<2x8x8xf32>
    %81 = tpu.matmul %74, %77, %cst_35 {dimension_numbers = #tpu.dot_dimension_numbers<[2], [2], [1], [1], [0, 0, 0, 1, 1, 1], [0], [0]>} : vector<2x8x16xbf16>, vector<2x8x16xbf16>, vector<2x8x8xf32> -> vector<2x8x8xf32>
    %cst_36 = arith.constant 2.500000e-01 : f32
    %82 = vector.broadcast %cst_36 : f32 to vector<2x8x8xf32>
    %83 = arith.mulf %81, %82 : vector<2x8x8xf32>
    %cst_37 = arith.constant dense<0xFF800000> : vector<2x8xf32>
    %84 = vector.multi_reduction <maximumf>, %83, %cst_37 [2] : vector<2x8x8xf32> to vector<2x8xf32>
    %85 = vector.shape_cast %84 : vector<2x8xf32> to vector<2x8x1xf32>
    %86 = vector.broadcast %85 : vector<2x8x1xf32> to vector<2x8x8xf32>
    %87 = arith.subf %83, %86 : vector<2x8x8xf32>
    %88 = math.exp %87 : vector<2x8x8xf32>
    %cst_38 = arith.constant dense<0.000000e+00> : vector<2x8xf32>
    %89 = vector.multi_reduction <add>, %88, %cst_38 [2] : vector<2x8x8xf32> to vector<2x8xf32>
    %90 = vector.shape_cast %89 : vector<2x8xf32> to vector<2x8x1xf32>
    %91 = tpu.reciprocal %90 {approx = true} : vector<2x8x1xf32> -> vector<2x8x1xf32>
    %92 = vector.broadcast %91 : vector<2x8x1xf32> to vector<2x8x8xf32>
    %93 = arith.mulf %88, %92 : vector<2x8x8xf32>
    %94 = arith.truncf %93 : vector<2x8x8xf32> to vector<2x8x8xbf16>
    %cst_39 = arith.constant dense<0.000000e+00> : vector<2x8x16xf32>
    %95 = tpu.matmul %94, %80, %cst_39 {dimension_numbers = #tpu.dot_dimension_numbers<[2], [1], [1], [2], [0, 0, 0, 1, 1, 2], [0], [0]>} : vector<2x8x8xbf16>, vector<2x8x16xbf16>, vector<2x8x16xf32> -> vector<2x8x16xf32>
    %96 = vector.shape_cast %95 : vector<2x8x16xf32> to vector<16x16xf32>
    %97 = tpu.concatenate %71, %96 in 1 : vector<16x16xf32>, vector<16x16xf32> -> vector<16x32xf32>
    %c0_40 = arith.constant 0 : index
    %c0_41 = arith.constant 0 : index
    %c0_42 = arith.constant 0 : index
    %98 = vector.load %arg9[%c0_40, %c0_41, %c0_42] : memref<2x32x32xbf16, #tpu.memory_space<vmem>>, vector<1x32x32xbf16>
    %99 = vector.shape_cast %98 : vector<1x32x32xbf16> to vector<32x32xbf16>
    %100 = arith.truncf %97 : vector<16x32xf32> to vector<16x32xbf16>
    %cst_43 = arith.constant dense<0.000000e+00> : vector<16x32xf32>
    %101 = tpu.matmul %100, %99, %cst_43 {dimension_numbers = #tpu.dot_dimension_numbers<[1], [0], [0], [1], [0, 0, 1, 1], [], []>} : vector<16x32xbf16>, vector<32x32xbf16>, vector<16x32xf32> -> vector<16x32xf32>
    %c0_44 = arith.constant 0 : index
    %c0_45 = arith.constant 0 : index
    %c0_46 = arith.constant 0 : index
    %102 = vector.load %arg10[%c0_44, %c0_45, %c0_46] : memref<2x1x32xf32, #tpu.memory_space<vmem>>, vector<1x1x32xf32>
    %103 = vector.shape_cast %102 : vector<1x1x32xf32> to vector<1x32xf32>
    %104 = vector.broadcast %103 : vector<1x32xf32> to vector<16x32xf32>
    %105 = arith.addf %101, %104 : vector<16x32xf32>
    %106 = arith.addf %24, %105 : vector<16x32xf32>
    %c0_47 = arith.constant 0 : index
    %c0_48 = arith.constant 0 : index
    %c0_49 = arith.constant 0 : index
    %107 = vector.load %arg11[%c0_47, %c0_48, %c0_49] : memref<2x1x32xf32, #tpu.memory_space<vmem>>, vector<1x1x32xf32>
    %108 = vector.shape_cast %107 : vector<1x1x32xf32> to vector<1x32xf32>
    %c0_50 = arith.constant 0 : index
    %c0_51 = arith.constant 0 : index
    %c0_52 = arith.constant 0 : index
    %109 = vector.load %arg12[%c0_50, %c0_51, %c0_52] : memref<2x1x32xf32, #tpu.memory_space<vmem>>, vector<1x1x32xf32>
    %110 = vector.shape_cast %109 : vector<1x1x32xf32> to vector<1x32xf32>
    %cst_53 = arith.constant dense<0.000000e+00> : vector<16xf32>
    %111 = vector.multi_reduction <add>, %106, %cst_53 [1] : vector<16x32xf32> to vector<16xf32>
    %112 = vector.shape_cast %111 : vector<16xf32> to vector<16x1xf32>
    %cst_54 = arith.constant 3.200000e+01 : f32
    %113 = vector.broadcast %cst_54 : f32 to vector<16x1xf32>
    %114 = arith.divf %112, %113 : vector<16x1xf32>
    %115 = vector.broadcast %114 : vector<16x1xf32> to vector<16x32xf32>
    %116 = arith.subf %106, %115 : vector<16x32xf32>
    %117 = arith.mulf %116, %116 : vector<16x32xf32>
    %cst_55 = arith.constant dense<0.000000e+00> : vector<16xf32>
    %118 = vector.multi_reduction <add>, %117, %cst_55 [1] : vector<16x32xf32> to vector<16xf32>
    %119 = vector.shape_cast %118 : vector<16xf32> to vector<16x1xf32>
    %cst_56 = arith.constant 3.200000e+01 : f32
    %120 = vector.broadcast %cst_56 : f32 to vector<16x1xf32>
    %121 = arith.divf %119, %120 : vector<16x1xf32>
    %122 = vector.broadcast %114 : vector<16x1xf32> to vector<16x32xf32>
    %123 = arith.subf %106, %122 : vector<16x32xf32>
    %cst_57 = arith.constant 9.99999996E-13 : f32
    %124 = vector.broadcast %cst_57 : f32 to vector<16x1xf32>
    %125 = arith.addf %121, %124 : vector<16x1xf32>
    %126 = math.rsqrt %125 : vector<16x1xf32>
    %127 = vector.broadcast %126 : vector<16x1xf32> to vector<16x32xf32>
    %128 = arith.mulf %123, %127 : vector<16x32xf32>
    %129 = vector.broadcast %108 : vector<1x32xf32> to vector<16x32xf32>
    %130 = arith.mulf %128, %129 : vector<16x32xf32>
    %131 = vector.broadcast %110 : vector<1x32xf32> to vector<16x32xf32>
    %132 = arith.addf %130, %131 : vector<16x32xf32>
    %c0_58 = arith.constant 0 : index
    %c0_59 = arith.constant 0 : index
    %c0_60 = arith.constant 0 : index
    %133 = vector.load %arg13[%c0_58, %c0_59, %c0_60] : memref<2x32x64xbf16, #tpu.memory_space<vmem>>, vector<1x32x64xbf16>
    %134 = vector.shape_cast %133 : vector<1x32x64xbf16> to vector<32x64xbf16>
    %135 = arith.truncf %132 : vector<16x32xf32> to vector<16x32xbf16>
    %cst_61 = arith.constant dense<0.000000e+00> : vector<16x64xf32>
    %136 = tpu.matmul %135, %134, %cst_61 {dimension_numbers = #tpu.dot_dimension_numbers<[1], [0], [0], [1], [0, 0, 1, 1], [], []>} : vector<16x32xbf16>, vector<32x64xbf16>, vector<16x64xf32> -> vector<16x64xf32>
    %c0_62 = arith.constant 0 : index
    %c0_63 = arith.constant 0 : index
    %c0_64 = arith.constant 0 : index
    %137 = vector.load %arg14[%c0_62, %c0_63, %c0_64] : memref<2x1x64xf32, #tpu.memory_space<vmem>>, vector<1x1x64xf32>
    %138 = vector.shape_cast %137 : vector<1x1x64xf32> to vector<1x64xf32>
    %139 = vector.broadcast %138 : vector<1x64xf32> to vector<16x64xf32>
    %140 = arith.addf %136, %139 : vector<16x64xf32>
    %141 = arith.mulf %140, %140 : vector<16x64xf32>
    %142 = arith.mulf %140, %141 : vector<16x64xf32>
    %cst_65 = arith.constant 4.471500e-02 : f32
    %143 = vector.broadcast %cst_65 : f32 to vector<16x64xf32>
    %144 = arith.mulf %143, %142 : vector<16x64xf32>
    %145 = arith.addf %140, %144 : vector<16x64xf32>
    %cst_66 = arith.constant 0.797884583 : f32
    %146 = vector.broadcast %cst_66 : f32 to vector<16x64xf32>
    %147 = arith.mulf %146, %145 : vector<16x64xf32>
    %148 = math.tanh %147 : vector<16x64xf32>
    %cst_67 = arith.constant 1.000000e+00 : f32
    %149 = vector.broadcast %cst_67 : f32 to vector<16x64xf32>
    %150 = arith.addf %149, %148 : vector<16x64xf32>
    %cst_68 = arith.constant 5.000000e-01 : f32
    %151 = vector.broadcast %cst_68 : f32 to vector<16x64xf32>
    %152 = arith.mulf %151, %150 : vector<16x64xf32>
    %153 = arith.mulf %140, %152 : vector<16x64xf32>
    %c0_69 = arith.constant 0 : index
    %c0_70 = arith.constant 0 : index
    %c0_71 = arith.constant 0 : index
    %154 = vector.load %arg15[%c0_69, %c0_70, %c0_71] : memref<2x64x32xbf16, #tpu.memory_space<vmem>>, vector<1x64x32xbf16>
    %155 = vector.shape_cast %154 : vector<1x64x32xbf16> to vector<64x32xbf16>
    %156 = arith.truncf %153 : vector<16x64xf32> to vector<16x64xbf16>
    %cst_72 = arith.constant dense<0.000000e+00> : vector<16x32xf32>
    %157 = tpu.matmul %156, %155, %cst_72 {dimension_numbers = #tpu.dot_dimension_numbers<[1], [0], [0], [1], [0, 0, 1, 1], [], []>} : vector<16x64xbf16>, vector<64x32xbf16>, vector<16x32xf32> -> vector<16x32xf32>
    %c0_73 = arith.constant 0 : index
    %c0_74 = arith.constant 0 : index
    %c0_75 = arith.constant 0 : index
    %158 = vector.load %arg16[%c0_73, %c0_74, %c0_75] : memref<2x1x32xf32, #tpu.memory_space<vmem>>, vector<1x1x32xf32>
    %159 = vector.shape_cast %158 : vector<1x1x32xf32> to vector<1x32xf32>
    %160 = vector.broadcast %159 : vector<1x32xf32> to vector<16x32xf32>
    %161 = arith.addf %157, %160 : vector<16x32xf32>
    %162 = arith.addf %132, %161 : vector<16x32xf32>
    %c0_76 = arith.constant 0 : index
    %c0_77 = arith.constant 0 : index
    %c0_78 = arith.constant 0 : index
    %163 = vector.load %arg17[%c0_76, %c0_77, %c0_78] : memref<2x1x32xf32, #tpu.memory_space<vmem>>, vector<1x1x32xf32>
    %164 = vector.shape_cast %163 : vector<1x1x32xf32> to vector<1x32xf32>
    %c0_79 = arith.constant 0 : index
    %c0_80 = arith.constant 0 : index
    %c0_81 = arith.constant 0 : index
    %165 = vector.load %arg18[%c0_79, %c0_80, %c0_81] : memref<2x1x32xf32, #tpu.memory_space<vmem>>, vector<1x1x32xf32>
    %166 = vector.shape_cast %165 : vector<1x1x32xf32> to vector<1x32xf32>
    %cst_82 = arith.constant dense<0.000000e+00> : vector<16xf32>
    %167 = vector.multi_reduction <add>, %162, %cst_82 [1] : vector<16x32xf32> to vector<16xf32>
    %168 = vector.shape_cast %167 : vector<16xf32> to vector<16x1xf32>
    %cst_83 = arith.constant 3.200000e+01 : f32
    %169 = vector.broadcast %cst_83 : f32 to vector<16x1xf32>
    %170 = arith.divf %168, %169 : vector<16x1xf32>
    %171 = vector.broadcast %170 : vector<16x1xf32> to vector<16x32xf32>
    %172 = arith.subf %162, %171 : vector<16x32xf32>
    %173 = arith.mulf %172, %172 : vector<16x32xf32>
    %cst_84 = arith.constant dense<0.000000e+00> : vector<16xf32>
    %174 = vector.multi_reduction <add>, %173, %cst_84 [1] : vector<16x32xf32> to vector<16xf32>
    %175 = vector.shape_cast %174 : vector<16xf32> to vector<16x1xf32>
    %cst_85 = arith.constant 3.200000e+01 : f32
    %176 = vector.broadcast %cst_85 : f32 to vector<16x1xf32>
    %177 = arith.divf %175, %176 : vector<16x1xf32>
    %178 = vector.broadcast %170 : vector<16x1xf32> to vector<16x32xf32>
    %179 = arith.subf %162, %178 : vector<16x32xf32>
    %cst_86 = arith.constant 9.99999996E-13 : f32
    %180 = vector.broadcast %cst_86 : f32 to vector<16x1xf32>
    %181 = arith.addf %177, %180 : vector<16x1xf32>
    %182 = math.rsqrt %181 : vector<16x1xf32>
    %183 = vector.broadcast %182 : vector<16x1xf32> to vector<16x32xf32>
    %184 = arith.mulf %179, %183 : vector<16x32xf32>
    %185 = vector.broadcast %164 : vector<1x32xf32> to vector<16x32xf32>
    %186 = arith.mulf %184, %185 : vector<16x32xf32>
    %187 = vector.broadcast %166 : vector<1x32xf32> to vector<16x32xf32>
    %188 = arith.addf %186, %187 : vector<16x32xf32>
    %189 = arith.truncf %188 : vector<16x32xf32> to vector<16x32xbf16>
    %c1 = arith.constant 1 : index
    %c0_87 = arith.constant 0 : index
    %c0_88 = arith.constant 0 : index
    %190 = vector.load %arg3[%c1, %c0_87, %c0_88] : memref<2x32x32xbf16, #tpu.memory_space<vmem>>, vector<1x32x32xbf16>
    %191 = vector.shape_cast %190 : vector<1x32x32xbf16> to vector<32x32xbf16>
    %cst_89 = arith.constant dense<0.000000e+00> : vector<16x32xf32>
    %192 = tpu.matmul %189, %191, %cst_89 {dimension_numbers = #tpu.dot_dimension_numbers<[1], [0], [0], [1], [0, 0, 1, 1], [], []>} : vector<16x32xbf16>, vector<32x32xbf16>, vector<16x32xf32> -> vector<16x32xf32>
    %c1_90 = arith.constant 1 : index
    %c0_91 = arith.constant 0 : index
    %c0_92 = arith.constant 0 : index
    %193 = vector.load %arg4[%c1_90, %c0_91, %c0_92] : memref<2x1x32xf32, #tpu.memory_space<vmem>>, vector<1x1x32xf32>
    %194 = vector.shape_cast %193 : vector<1x1x32xf32> to vector<1x32xf32>
    %195 = vector.broadcast %194 : vector<1x32xf32> to vector<16x32xf32>
    %196 = arith.addf %192, %195 : vector<16x32xf32>
    %c1_93 = arith.constant 1 : index
    %c0_94 = arith.constant 0 : index
    %c0_95 = arith.constant 0 : index
    %197 = vector.load %arg5[%c1_93, %c0_94, %c0_95] : memref<2x32x32xbf16, #tpu.memory_space<vmem>>, vector<1x32x32xbf16>
    %198 = vector.shape_cast %197 : vector<1x32x32xbf16> to vector<32x32xbf16>
    %cst_96 = arith.constant dense<0.000000e+00> : vector<16x32xf32>
    %199 = tpu.matmul %189, %198, %cst_96 {dimension_numbers = #tpu.dot_dimension_numbers<[1], [0], [0], [1], [0, 0, 1, 1], [], []>} : vector<16x32xbf16>, vector<32x32xbf16>, vector<16x32xf32> -> vector<16x32xf32>
    %c1_97 = arith.constant 1 : index
    %c0_98 = arith.constant 0 : index
    %c0_99 = arith.constant 0 : index
    %200 = vector.load %arg6[%c1_97, %c0_98, %c0_99] : memref<2x1x32xf32, #tpu.memory_space<vmem>>, vector<1x1x32xf32>
    %201 = vector.shape_cast %200 : vector<1x1x32xf32> to vector<1x32xf32>
    %202 = vector.broadcast %201 : vector<1x32xf32> to vector<16x32xf32>
    %203 = arith.addf %199, %202 : vector<16x32xf32>
    %c1_100 = arith.constant 1 : index
    %c0_101 = arith.constant 0 : index
    %c0_102 = arith.constant 0 : index
    %204 = vector.load %arg7[%c1_100, %c0_101, %c0_102] : memref<2x32x32xbf16, #tpu.memory_space<vmem>>, vector<1x32x32xbf16>
    %205 = vector.shape_cast %204 : vector<1x32x32xbf16> to vector<32x32xbf16>
    %cst_103 = arith.constant dense<0.000000e+00> : vector<16x32xf32>
    %206 = tpu.matmul %189, %205, %cst_103 {dimension_numbers = #tpu.dot_dimension_numbers<[1], [0], [0], [1], [0, 0, 1, 1], [], []>} : vector<16x32xbf16>, vector<32x32xbf16>, vector<16x32xf32> -> vector<16x32xf32>
    %c1_104 = arith.constant 1 : index
    %c0_105 = arith.constant 0 : index
    %c0_106 = arith.constant 0 : index
    %207 = vector.load %arg8[%c1_104, %c0_105, %c0_106] : memref<2x1x32xf32, #tpu.memory_space<vmem>>, vector<1x1x32xf32>
    %208 = vector.shape_cast %207 : vector<1x1x32xf32> to vector<1x32xf32>
    %209 = vector.broadcast %208 : vector<1x32xf32> to vector<16x32xf32>
    %210 = arith.addf %206, %209 : vector<16x32xf32>
    %211 = vector.extract_strided_slice %196 {offsets = [0, 0], sizes = [16, 16], strides = [1, 1]} : vector<16x32xf32> to vector<16x16xf32>
    %212 = vector.shape_cast %211 : vector<16x16xf32> to vector<2x8x16xf32>
    %213 = arith.truncf %212 : vector<2x8x16xf32> to vector<2x8x16xbf16>
    %214 = vector.extract_strided_slice %203 {offsets = [0, 0], sizes = [16, 16], strides = [1, 1]} : vector<16x32xf32> to vector<16x16xf32>
    %215 = vector.shape_cast %214 : vector<16x16xf32> to vector<2x8x16xf32>
    %216 = arith.truncf %215 : vector<2x8x16xf32> to vector<2x8x16xbf16>
    %217 = vector.extract_strided_slice %210 {offsets = [0, 0], sizes = [16, 16], strides = [1, 1]} : vector<16x32xf32> to vector<16x16xf32>
    %218 = vector.shape_cast %217 : vector<16x16xf32> to vector<2x8x16xf32>
    %219 = arith.truncf %218 : vector<2x8x16xf32> to vector<2x8x16xbf16>
    %cst_107 = arith.constant dense<0.000000e+00> : vector<2x8x8xf32>
    %220 = tpu.matmul %213, %216, %cst_107 {dimension_numbers = #tpu.dot_dimension_numbers<[2], [2], [1], [1], [0, 0, 0, 1, 1, 1], [0], [0]>} : vector<2x8x16xbf16>, vector<2x8x16xbf16>, vector<2x8x8xf32> -> vector<2x8x8xf32>
    %cst_108 = arith.constant 2.500000e-01 : f32
    %221 = vector.broadcast %cst_108 : f32 to vector<2x8x8xf32>
    %222 = arith.mulf %220, %221 : vector<2x8x8xf32>
    %cst_109 = arith.constant dense<0xFF800000> : vector<2x8xf32>
    %223 = vector.multi_reduction <maximumf>, %222, %cst_109 [2] : vector<2x8x8xf32> to vector<2x8xf32>
    %224 = vector.shape_cast %223 : vector<2x8xf32> to vector<2x8x1xf32>
    %225 = vector.broadcast %224 : vector<2x8x1xf32> to vector<2x8x8xf32>
    %226 = arith.subf %222, %225 : vector<2x8x8xf32>
    %227 = math.exp %226 : vector<2x8x8xf32>
    %cst_110 = arith.constant dense<0.000000e+00> : vector<2x8xf32>
    %228 = vector.multi_reduction <add>, %227, %cst_110 [2] : vector<2x8x8xf32> to vector<2x8xf32>
    %229 = vector.shape_cast %228 : vector<2x8xf32> to vector<2x8x1xf32>
    %230 = tpu.reciprocal %229 {approx = true} : vector<2x8x1xf32> -> vector<2x8x1xf32>
    %231 = vector.broadcast %230 : vector<2x8x1xf32> to vector<2x8x8xf32>
    %232 = arith.mulf %227, %231 : vector<2x8x8xf32>
    %233 = arith.truncf %232 : vector<2x8x8xf32> to vector<2x8x8xbf16>
    %cst_111 = arith.constant dense<0.000000e+00> : vector<2x8x16xf32>
    %234 = tpu.matmul %233, %219, %cst_111 {dimension_numbers = #tpu.dot_dimension_numbers<[2], [1], [1], [2], [0, 0, 0, 1, 1, 2], [0], [0]>} : vector<2x8x8xbf16>, vector<2x8x16xbf16>, vector<2x8x16xf32> -> vector<2x8x16xf32>
    %235 = vector.shape_cast %234 : vector<2x8x16xf32> to vector<16x16xf32>
    %236 = vector.extract_strided_slice %196 {offsets = [0, 16], sizes = [16, 16], strides = [1, 1]} : vector<16x32xf32> to vector<16x16xf32>
    %237 = vector.shape_cast %236 : vector<16x16xf32> to vector<2x8x16xf32>
    %238 = arith.truncf %237 : vector<2x8x16xf32> to vector<2x8x16xbf16>
    %239 = vector.extract_strided_slice %203 {offsets = [0, 16], sizes = [16, 16], strides = [1, 1]} : vector<16x32xf32> to vector<16x16xf32>
    %240 = vector.shape_cast %239 : vector<16x16xf32> to vector<2x8x16xf32>
    %241 = arith.truncf %240 : vector<2x8x16xf32> to vector<2x8x16xbf16>
    %242 = vector.extract_strided_slice %210 {offsets = [0, 16], sizes = [16, 16], strides = [1, 1]} : vector<16x32xf32> to vector<16x16xf32>
    %243 = vector.shape_cast %242 : vector<16x16xf32> to vector<2x8x16xf32>
    %244 = arith.truncf %243 : vector<2x8x16xf32> to vector<2x8x16xbf16>
    %cst_112 = arith.constant dense<0.000000e+00> : vector<2x8x8xf32>
    %245 = tpu.matmul %238, %241, %cst_112 {dimension_numbers = #tpu.dot_dimension_numbers<[2], [2], [1], [1], [0, 0, 0, 1, 1, 1], [0], [0]>} : vector<2x8x16xbf16>, vector<2x8x16xbf16>, vector<2x8x8xf32> -> vector<2x8x8xf32>
    %cst_113 = arith.constant 2.500000e-01 : f32
    %246 = vector.broadcast %cst_113 : f32 to vector<2x8x8xf32>
    %247 = arith.mulf %245, %246 : vector<2x8x8xf32>
    %cst_114 = arith.constant dense<0xFF800000> : vector<2x8xf32>
    %248 = vector.multi_reduction <maximumf>, %247, %cst_114 [2] : vector<2x8x8xf32> to vector<2x8xf32>
    %249 = vector.shape_cast %248 : vector<2x8xf32> to vector<2x8x1xf32>
    %250 = vector.broadcast %249 : vector<2x8x1xf32> to vector<2x8x8xf32>
    %251 = arith.subf %247, %250 : vector<2x8x8xf32>
    %252 = math.exp %251 : vector<2x8x8xf32>
    %cst_115 = arith.constant dense<0.000000e+00> : vector<2x8xf32>
    %253 = vector.multi_reduction <add>, %252, %cst_115 [2] : vector<2x8x8xf32> to vector<2x8xf32>
    %254 = vector.shape_cast %253 : vector<2x8xf32> to vector<2x8x1xf32>
    %255 = tpu.reciprocal %254 {approx = true} : vector<2x8x1xf32> -> vector<2x8x1xf32>
    %256 = vector.broadcast %255 : vector<2x8x1xf32> to vector<2x8x8xf32>
    %257 = arith.mulf %252, %256 : vector<2x8x8xf32>
    %258 = arith.truncf %257 : vector<2x8x8xf32> to vector<2x8x8xbf16>
    %cst_116 = arith.constant dense<0.000000e+00> : vector<2x8x16xf32>
    %259 = tpu.matmul %258, %244, %cst_116 {dimension_numbers = #tpu.dot_dimension_numbers<[2], [1], [1], [2], [0, 0, 0, 1, 1, 2], [0], [0]>} : vector<2x8x8xbf16>, vector<2x8x16xbf16>, vector<2x8x16xf32> -> vector<2x8x16xf32>
    %260 = vector.shape_cast %259 : vector<2x8x16xf32> to vector<16x16xf32>
    %261 = tpu.concatenate %235, %260 in 1 : vector<16x16xf32>, vector<16x16xf32> -> vector<16x32xf32>
    %c1_117 = arith.constant 1 : index
    %c0_118 = arith.constant 0 : index
    %c0_119 = arith.constant 0 : index
    %262 = vector.load %arg9[%c1_117, %c0_118, %c0_119] : memref<2x32x32xbf16, #tpu.memory_space<vmem>>, vector<1x32x32xbf16>
    %263 = vector.shape_cast %262 : vector<1x32x32xbf16> to vector<32x32xbf16>
    %264 = arith.truncf %261 : vector<16x32xf32> to vector<16x32xbf16>
    %cst_120 = arith.constant dense<0.000000e+00> : vector<16x32xf32>
    %265 = tpu.matmul %264, %263, %cst_120 {dimension_numbers = #tpu.dot_dimension_numbers<[1], [0], [0], [1], [0, 0, 1, 1], [], []>} : vector<16x32xbf16>, vector<32x32xbf16>, vector<16x32xf32> -> vector<16x32xf32>
    %c1_121 = arith.constant 1 : index
    %c0_122 = arith.constant 0 : index
    %c0_123 = arith.constant 0 : index
    %266 = vector.load %arg10[%c1_121, %c0_122, %c0_123] : memref<2x1x32xf32, #tpu.memory_space<vmem>>, vector<1x1x32xf32>
    %267 = vector.shape_cast %266 : vector<1x1x32xf32> to vector<1x32xf32>
    %268 = vector.broadcast %267 : vector<1x32xf32> to vector<16x32xf32>
    %269 = arith.addf %265, %268 : vector<16x32xf32>
    %270 = arith.addf %188, %269 : vector<16x32xf32>
    %c1_124 = arith.constant 1 : index
    %c0_125 = arith.constant 0 : index
    %c0_126 = arith.constant 0 : index
    %271 = vector.load %arg11[%c1_124, %c0_125, %c0_126] : memref<2x1x32xf32, #tpu.memory_space<vmem>>, vector<1x1x32xf32>
    %272 = vector.shape_cast %271 : vector<1x1x32xf32> to vector<1x32xf32>
    %c1_127 = arith.constant 1 : index
    %c0_128 = arith.constant 0 : index
    %c0_129 = arith.constant 0 : index
    %273 = vector.load %arg12[%c1_127, %c0_128, %c0_129] : memref<2x1x32xf32, #tpu.memory_space<vmem>>, vector<1x1x32xf32>
    %274 = vector.shape_cast %273 : vector<1x1x32xf32> to vector<1x32xf32>
    %cst_130 = arith.constant dense<0.000000e+00> : vector<16xf32>
    %275 = vector.multi_reduction <add>, %270, %cst_130 [1] : vector<16x32xf32> to vector<16xf32>
    %276 = vector.shape_cast %275 : vector<16xf32> to vector<16x1xf32>
    %cst_131 = arith.constant 3.200000e+01 : f32
    %277 = vector.broadcast %cst_131 : f32 to vector<16x1xf32>
    %278 = arith.divf %276, %277 : vector<16x1xf32>
    %279 = vector.broadcast %278 : vector<16x1xf32> to vector<16x32xf32>
    %280 = arith.subf %270, %279 : vector<16x32xf32>
    %281 = arith.mulf %280, %280 : vector<16x32xf32>
    %cst_132 = arith.constant dense<0.000000e+00> : vector<16xf32>
    %282 = vector.multi_reduction <add>, %281, %cst_132 [1] : vector<16x32xf32> to vector<16xf32>
    %283 = vector.shape_cast %282 : vector<16xf32> to vector<16x1xf32>
    %cst_133 = arith.constant 3.200000e+01 : f32
    %284 = vector.broadcast %cst_133 : f32 to vector<16x1xf32>
    %285 = arith.divf %283, %284 : vector<16x1xf32>
    %286 = vector.broadcast %278 : vector<16x1xf32> to vector<16x32xf32>
    %287 = arith.subf %270, %286 : vector<16x32xf32>
    %cst_134 = arith.constant 9.99999996E-13 : f32
    %288 = vector.broadcast %cst_134 : f32 to vector<16x1xf32>
    %289 = arith.addf %285, %288 : vector<16x1xf32>
    %290 = math.rsqrt %289 : vector<16x1xf32>
    %291 = vector.broadcast %290 : vector<16x1xf32> to vector<16x32xf32>
    %292 = arith.mulf %287, %291 : vector<16x32xf32>
    %293 = vector.broadcast %272 : vector<1x32xf32> to vector<16x32xf32>
    %294 = arith.mulf %292, %293 : vector<16x32xf32>
    %295 = vector.broadcast %274 : vector<1x32xf32> to vector<16x32xf32>
    %296 = arith.addf %294, %295 : vector<16x32xf32>
    %c1_135 = arith.constant 1 : index
    %c0_136 = arith.constant 0 : index
    %c0_137 = arith.constant 0 : index
    %297 = vector.load %arg13[%c1_135, %c0_136, %c0_137] : memref<2x32x64xbf16, #tpu.memory_space<vmem>>, vector<1x32x64xbf16>
    %298 = vector.shape_cast %297 : vector<1x32x64xbf16> to vector<32x64xbf16>
    %299 = arith.truncf %296 : vector<16x32xf32> to vector<16x32xbf16>
    %cst_138 = arith.constant dense<0.000000e+00> : vector<16x64xf32>
    %300 = tpu.matmul %299, %298, %cst_138 {dimension_numbers = #tpu.dot_dimension_numbers<[1], [0], [0], [1], [0, 0, 1, 1], [], []>} : vector<16x32xbf16>, vector<32x64xbf16>, vector<16x64xf32> -> vector<16x64xf32>
    %c1_139 = arith.constant 1 : index
    %c0_140 = arith.constant 0 : index
    %c0_141 = arith.constant 0 : index
    %301 = vector.load %arg14[%c1_139, %c0_140, %c0_141] : memref<2x1x64xf32, #tpu.memory_space<vmem>>, vector<1x1x64xf32>
    %302 = vector.shape_cast %301 : vector<1x1x64xf32> to vector<1x64xf32>
    %303 = vector.broadcast %302 : vector<1x64xf32> to vector<16x64xf32>
    %304 = arith.addf %300, %303 : vector<16x64xf32>
    %305 = arith.mulf %304, %304 : vector<16x64xf32>
    %306 = arith.mulf %304, %305 : vector<16x64xf32>
    %cst_142 = arith.constant 4.471500e-02 : f32
    %307 = vector.broadcast %cst_142 : f32 to vector<16x64xf32>
    %308 = arith.mulf %307, %306 : vector<16x64xf32>
    %309 = arith.addf %304, %308 : vector<16x64xf32>
    %cst_143 = arith.constant 0.797884583 : f32
    %310 = vector.broadcast %cst_143 : f32 to vector<16x64xf32>
    %311 = arith.mulf %310, %309 : vector<16x64xf32>
    %312 = math.tanh %311 : vector<16x64xf32>
    %cst_144 = arith.constant 1.000000e+00 : f32
    %313 = vector.broadcast %cst_144 : f32 to vector<16x64xf32>
    %314 = arith.addf %313, %312 : vector<16x64xf32>
    %cst_145 = arith.constant 5.000000e-01 : f32
    %315 = vector.broadcast %cst_145 : f32 to vector<16x64xf32>
    %316 = arith.mulf %315, %314 : vector<16x64xf32>
    %317 = arith.mulf %304, %316 : vector<16x64xf32>
    %c1_146 = arith.constant 1 : index
    %c0_147 = arith.constant 0 : index
    %c0_148 = arith.constant 0 : index
    %318 = vector.load %arg15[%c1_146, %c0_147, %c0_148] : memref<2x64x32xbf16, #tpu.memory_space<vmem>>, vector<1x64x32xbf16>
    %319 = vector.shape_cast %318 : vector<1x64x32xbf16> to vector<64x32xbf16>
    %320 = arith.truncf %317 : vector<16x64xf32> to vector<16x64xbf16>
    %cst_149 = arith.constant dense<0.000000e+00> : vector<16x32xf32>
    %321 = tpu.matmul %320, %319, %cst_149 {dimension_numbers = #tpu.dot_dimension_numbers<[1], [0], [0], [1], [0, 0, 1, 1], [], []>} : vector<16x64xbf16>, vector<64x32xbf16>, vector<16x32xf32> -> vector<16x32xf32>
    %c1_150 = arith.constant 1 : index
    %c0_151 = arith.constant 0 : index
    %c0_152 = arith.constant 0 : index
    %322 = vector.load %arg16[%c1_150, %c0_151, %c0_152] : memref<2x1x32xf32, #tpu.memory_space<vmem>>, vector<1x1x32xf32>
    %323 = vector.shape_cast %322 : vector<1x1x32xf32> to vector<1x32xf32>
    %324 = vector.broadcast %323 : vector<1x32xf32> to vector<16x32xf32>
    %325 = arith.addf %321, %324 : vector<16x32xf32>
    %326 = arith.addf %296, %325 : vector<16x32xf32>
    %c1_153 = arith.constant 1 : index
    %c0_154 = arith.constant 0 : index
    %c0_155 = arith.constant 0 : index
    %327 = vector.load %arg17[%c1_153, %c0_154, %c0_155] : memref<2x1x32xf32, #tpu.memory_space<vmem>>, vector<1x1x32xf32>
    %328 = vector.shape_cast %327 : vector<1x1x32xf32> to vector<1x32xf32>
    %c1_156 = arith.constant 1 : index
    %c0_157 = arith.constant 0 : index
    %c0_158 = arith.constant 0 : index
    %329 = vector.load %arg18[%c1_156, %c0_157, %c0_158] : memref<2x1x32xf32, #tpu.memory_space<vmem>>, vector<1x1x32xf32>
    %330 = vector.shape_cast %329 : vector<1x1x32xf32> to vector<1x32xf32>
    %cst_159 = arith.constant dense<0.000000e+00> : vector<16xf32>
    %331 = vector.multi_reduction <add>, %326, %cst_159 [1] : vector<16x32xf32> to vector<16xf32>
    %332 = vector.shape_cast %331 : vector<16xf32> to vector<16x1xf32>
    %cst_160 = arith.constant 3.200000e+01 : f32
    %333 = vector.broadcast %cst_160 : f32 to vector<16x1xf32>
    %334 = arith.divf %332, %333 : vector<16x1xf32>
    %335 = vector.broadcast %334 : vector<16x1xf32> to vector<16x32xf32>
    %336 = arith.subf %326, %335 : vector<16x32xf32>
    %337 = arith.mulf %336, %336 : vector<16x32xf32>
    %cst_161 = arith.constant dense<0.000000e+00> : vector<16xf32>
    %338 = vector.multi_reduction <add>, %337, %cst_161 [1] : vector<16x32xf32> to vector<16xf32>
    %339 = vector.shape_cast %338 : vector<16xf32> to vector<16x1xf32>
    %cst_162 = arith.constant 3.200000e+01 : f32
    %340 = vector.broadcast %cst_162 : f32 to vector<16x1xf32>
    %341 = arith.divf %339, %340 : vector<16x1xf32>
    %342 = vector.broadcast %334 : vector<16x1xf32> to vector<16x32xf32>
    %343 = arith.subf %326, %342 : vector<16x32xf32>
    %cst_163 = arith.constant 9.99999996E-13 : f32
    %344 = vector.broadcast %cst_163 : f32 to vector<16x1xf32>
    %345 = arith.addf %341, %344 : vector<16x1xf32>
    %346 = math.rsqrt %345 : vector<16x1xf32>
    %347 = vector.broadcast %346 : vector<16x1xf32> to vector<16x32xf32>
    %348 = arith.mulf %343, %347 : vector<16x32xf32>
    %349 = vector.broadcast %328 : vector<1x32xf32> to vector<16x32xf32>
    %350 = arith.mulf %348, %349 : vector<16x32xf32>
    %351 = vector.broadcast %330 : vector<1x32xf32> to vector<16x32xf32>
    %352 = arith.addf %350, %351 : vector<16x32xf32>
    %353 = vector.shape_cast %352 : vector<16x32xf32> to vector<2x8x32xf32>
    %354 = vector.extract_strided_slice %353 {offsets = [0, 0, 0], sizes = [2, 1, 32], strides = [1, 1, 1]} : vector<2x8x32xf32> to vector<2x1x32xf32>
    %355 = vector.shape_cast %354 : vector<2x1x32xf32> to vector<2x32xf32>
    %c0_164 = arith.constant 0 : index
    %c0_165 = arith.constant 0 : index
    %356 = vector.load %arg19[%c0_164, %c0_165] : memref<32x32xbf16, #tpu.memory_space<vmem>>, vector<32x32xbf16>
    %357 = arith.truncf %355 : vector<2x32xf32> to vector<2x32xbf16>
    %cst_166 = arith.constant dense<0.000000e+00> : vector<2x32xf32>
    %358 = tpu.matmul %357, %356, %cst_166 {dimension_numbers = #tpu.dot_dimension_numbers<[1], [0], [0], [1], [0, 0, 1, 1], [], []>} : vector<2x32xbf16>, vector<32x32xbf16>, vector<2x32xf32> -> vector<2x32xf32>
    %c0_167 = arith.constant 0 : index
    %c0_168 = arith.constant 0 : index
    %359 = vector.load %arg20[%c0_167, %c0_168] : memref<1x32xf32, #tpu.memory_space<vmem>>, vector<1x32xf32>
    %360 = vector.broadcast %359 : vector<1x32xf32> to vector<2x32xf32>
    %361 = arith.addf %358, %360 : vector<2x32xf32>
    %362 = math.tanh %361 : vector<2x32xf32>
    %c0_169 = arith.constant 0 : index
    %c0_170 = arith.constant 0 : index
    %363 = vector.load %arg21[%c0_169, %c0_170] : memref<32x2xbf16, #tpu.memory_space<vmem>>, vector<32x2xbf16>
    %364 = arith.truncf %362 : vector<2x32xf32> to vector<2x32xbf16>
    %cst_171 = arith.constant dense<0.000000e+00> : vector<2x2xf32>
    %365 = tpu.matmul %364, %363, %cst_171 {dimension_numbers = #tpu.dot_dimension_numbers<[1], [0], [0], [1], [0, 0, 1, 1], [], []>} : vector<2x32xbf16>, vector<32x2xbf16>, vector<2x2xf32> -> vector<2x2xf32>
    %c0_172 = arith.constant 0 : index
    %c0_173 = arith.constant 0 : index
    %366 = vector.load %arg22[%c0_172, %c0_173] : memref<1x2xf32, #tpu.memory_space<vmem>>, vector<1x2xf32>
    %367 = vector.broadcast %366 : vector<1x2xf32> to vector<2x2xf32>
    %368 = arith.addf %365, %367 : vector<2x2xf32>
    %c0_174 = arith.constant 0 : index
    %c0_175 = arith.constant 0 : index
    %369 = vector.load %arg23[%c0_174, %c0_175] : memref<2x2xf32, #tpu.memory_space<vmem>>, vector<2x2xf32>
    tpu.vector_store %arg23[%c0_174, %c0_175], %368 {strides = array<i32>} : memref<2x2xf32, #tpu.memory_space<vmem>>, vector<2x2xf32>,
    return
  }
}

</mosaic_0001>

<llo_original>
// kernel: tpu_custom_call.1
$region0: #{tpu_custom_call.1}
  #allocation0 [shape = 'u32[]', space=smem, size = 0x4, offset = 0x4, fixed_abs, tag = 'smem constant byte address 0x4 - core index']
  #allocation1 [shape = 'u32[144,128]{1,0:T(1,128)}', space=vmem, size = 0x12000, scoped, tag = 'internal scratch']
  %s0 = inlined_call_operand.hbm [shape: f32[16,32], index: 0, kind: input, shape index: {}]
  %s1 = inlined_call_operand.vmem [shape: f32[1,32], index: 1, kind: input, shape index: {}]
  %s2 = inlined_call_operand.hbm [shape: f32[1,32], index: 2, kind: input, shape index: {}]
  %s3 = inlined_call_operand.vmem [shape: bf16[2,32,32], index: 3, kind: input, shape index: {}]
  %s4 = inlined_call_operand.hbm [shape: f32[2,1,32], index: 4, kind: input, shape index: {}]
  %s5 = inlined_call_operand.vmem [shape: bf16[2,32,32], index: 5, kind: input, shape index: {}]
  %s6 = inlined_call_operand.hbm [shape: f32[2,1,32], index: 6, kind: input, shape index: {}]
  %s7 = inlined_call_operand.vmem [shape: bf16[2,32,32], index: 7, kind: input, shape index: {}]
  %s8 = inlined_call_operand.hbm [shape: f32[2,1,32], index: 8, kind: input, shape index: {}]
  %s9 = inlined_call_operand.hbm [shape: bf16[2,32,32], index: 9, kind: input, shape index: {}]
  %s10 = inlined_call_operand.hbm [shape: f32[2,1,32], index: 10, kind: input, shape index: {}]
  %s11 = inlined_call_operand.hbm [shape: f32[2,1,32], index: 11, kind: input, shape index: {}]
  %s12 = inlined_call_operand.hbm [shape: f32[2,1,32], index: 12, kind: input, shape index: {}]
  %s13 = inlined_call_operand.vmem [shape: bf16[2,32,64], index: 13, kind: input, shape index: {}]
  %s14 = inlined_call_operand.hbm [shape: f32[2,1,64], index: 14, kind: input, shape index: {}]
  %s15 = inlined_call_operand.vmem [shape: bf16[2,64,32], index: 15, kind: input, shape index: {}]
  %s16 = inlined_call_operand.hbm [shape: f32[2,1,32], index: 16, kind: input, shape index: {}]
  %s17 = inlined_call_operand.hbm [shape: f32[2,1,32], index: 17, kind: input, shape index: {}]
  %s18 = inlined_call_operand.vmem [shape: f32[2,1,32], index: 18, kind: input, shape index: {}]
  %s19 = inlined_call_operand.vmem [shape: bf16[32,32], index: 19, kind: input, shape index: {}]
  %s20 = inlined_call_operand.vmem [shape: f32[1,32], index: 20, kind: input, shape index: {}]
  %s21 = inlined_call_operand.vmem [shape: bf16[32,2], index: 21, kind: input, shape index: {}]
  %s22 = inlined_call_operand.vmem [shape: f32[1,2], index: 22, kind: input, shape index: {}]
  %s23 = inlined_call_operand.hbm [shape: f32[2,2], index: 23, kind: output, shape index: {}]
  %s24 = sld [smem:[#allocation0]]
  $region150: #{tpu_custom_call.1} parent=0
    _
  %s26 = ssub.s32 1, %s24
  %s27 = scalar_select 0, %s26, %s24
  $region1: #{tpu_custom_call.1} parent=0
    #allocation2 [shape = 'u8[8192]{0}', space=vmem, size = 0x2000, scoped, tag = 'input window, operand 0, single buffered']
    #allocation3 [shape = 's32[1]{0}', space=sflag, size = 0x4, scoped, tag = 'scoped memory for tpu_custom_call.1']
    #allocation4 [shape = 's32[1]{0}', space=sflag, size = 0x4, scoped, tag = 'scoped memory for tpu_custom_call.1']
    #allocation5 [shape = 'u8[512]{0}', space=vmem, size = 0x400, scoped, tag = 'input window, operand 2, single buffered']
    #allocation6 [shape = 's32[1]{0}', space=sflag, size = 0x4, scoped, tag = 'scoped memory for tpu_custom_call.1']
    #allocation7 [shape = 'u8[1024]{0}', space=vmem, size = 0x400, scoped, tag = 'input window, operand 4, single buffered']
    #allocation8 [shape = 'u8[1024]{0}', space=vmem, size = 0x400, scoped, tag = 'input window, operand 6, single buffered']
    #allocation9 [shape = 's32[1]{0}', space=sflag, size = 0x4, scoped, tag = 'scoped memory for tpu_custom_call.1']
    #allocation10 [shape = 'u8[1024]{0}', space=vmem, size = 0x400, scoped, tag = 'input window, operand 8, single buffered']
    #allocation11 [shape = 'u8[16384]{0}', space=vmem, size = 0x4000, scoped, tag = 'input window, operand 9, single buffered']
    #allocation12 [shape = 's32[1]{0}', space=sflag, size = 0x4, scoped, tag = 'scoped memory for tpu_custom_call.1']
    #allocation13 [shape = 'u8[1024]{0}', space=vmem, size = 0x400, scoped, tag = 'input window, operand 10, single buffered']
    #allocation14 [shape = 'u8[1024]{0}', space=vmem, size = 0x400, scoped, tag = 'input window, operand 11, single buffered']
    #allocation15 [shape = 's32[1]{0}', space=sflag, size = 0x4, scoped, tag = 'scoped memory for tpu_custom_call.1']
    #allocation16 [shape = 'u8[1024]{0}', space=vmem, size = 0x400, scoped, tag = 'input window, operand 12, single buffered']
    #allocation17 [shape = 'u8[1024]{0}', space=vmem, size = 0x400, scoped, tag = 'input window, operand 14, single buffered']
    #allocation18 [shape = 's32[1]{0}', space=sflag, size = 0x4, scoped, tag = 'scoped memory for tpu_custom_call.1']
    #allocation19 [shape = 'u8[1024]{0}', space=vmem, size = 0x400, scoped, tag = 'input window, operand 16, single buffered']
    #allocation20 [shape = 'u8[1024]{0}', space=vmem, size = 0x400, scoped, tag = 'input window, operand 17, single buffered']
    #allocation21 [shape = 's32[1]{0}', space=sflag, size = 0x4, scoped, tag = 'scoped memory for tpu_custom_call.1']
    #allocation22 [shape = 'u8[1024]{0}', space=vmem, size = 0x400, scoped, tag = 'output window, operand 0, single buffered']
    %28 = vsyncpa [#allocation3], 0
    %29 = vsyncpa [#allocation6], 0
    %30 = vsyncpa [#allocation9], 0
    %31 = vsyncpa [#allocation12], 0
    %32 = vsyncpa [#allocation15], 0
    %33 = vsyncpa [#allocation18], 0
    %34 = vsyncpa [#allocation21], 0
    %35 = vsyncpa [#allocation4], 0
    // Predicated region
    $region2: #{tpu_custom_call.1} parent=1 // pred_check
      _
    $region3: #{tpu_custom_call.1} parent=1 // pred_check_branch
      %37 = sbr.rel (0) target = $region5
    $region4: #{tpu_custom_call.1} parent=1 // pred_region
      %s39 = ssub.s32 256, 256
      %40 = vsyncadd [#allocation3], %s39
      %s41 = sshll.u32 [#allocation2], 4
      %s42 = int_to_ptr.vmem [resolvable:$true] %s41
      %47 = dma.hbm_to_vmem [thread:$0]  %s0, 256, %s42, [#allocation3], 128, 128, 8
    $region5: #{tpu_custom_call.1} parent=1 // pred_fallthru
      _
    // Predicated region
    $region6: #{tpu_custom_call.1} parent=1 // pred_check
      _
    $region7: #{tpu_custom_call.1} parent=1 // pred_check_branch
      %49 = sbr.rel (0) target = $region9
    $region8: #{tpu_custom_call.1} parent=1 // pred_region
      _
    $region9: #{tpu_custom_call.1} parent=1 // pred_fallthru
      _
    // Predicated region
    $region10: #{tpu_custom_call.1} parent=1 // pred_check
      _
    $region11: #{tpu_custom_call.1} parent=1 // pred_check_branch
      %51 = sbr.rel (0) target = $region13
    $region12: #{tpu_custom_call.1} parent=1 // pred_region
      %s53 = ssub.s32 16, 16
      %54 = vsyncadd [#allocation6], %s53
      %s56 = sshll.u32 [#allocation5], 4
      %s57 = int_to_ptr.vmem [resolvable:$true] %s56
      %59 = dma.hbm_to_vmem [thread:$0]  %s2, 16, %s57, [#allocation6]
    $region13: #{tpu_custom_call.1} parent=1 // pred_fallthru
      _
    // Predicated region
    $region14: #{tpu_custom_call.1} parent=1 // pred_check
      _
    $region15: #{tpu_custom_call.1} parent=1 // pred_check_branch
      %61 = sbr.rel (0) target = $region17
    $region16: #{tpu_custom_call.1} parent=1 // pred_region
      _
    $region17: #{tpu_custom_call.1} parent=1 // pred_fallthru
      _
    // Predicated region
    $region18: #{tpu_custom_call.1} parent=1 // pred_check
      _
    $region19: #{tpu_custom_call.1} parent=1 // pred_check_branch
      %63 = sbr.rel (0) target = $region21
    $region20: #{tpu_custom_call.1} parent=1 // pred_region
      %s65 = ssub.s32 32, 32
      %66 = vsyncadd [#allocation6], %s65
      %s67 = sshll.u32 [#allocation7], 4
      %s68 = int_to_ptr.vmem [resolvable:$true] %s67
      %73 = dma.hbm_to_vmem [thread:$0]  %s4, 32, %s68, [#allocation6], 16, 16, 1
    $region21: #{tpu_custom_call.1} parent=1 // pred_fallthru
      _
    // Predicated region
    $region22: #{tpu_custom_call.1} parent=1 // pred_check
      _
    $region23: #{tpu_custom_call.1} parent=1 // pred_check_branch
      %75 = sbr.rel (0) target = $region25
    $region24: #{tpu_custom_call.1} parent=1 // pred_region
      _
    $region25: #{tpu_custom_call.1} parent=1 // pred_fallthru
      _
    // Predicated region
    $region26: #{tpu_custom_call.1} parent=1 // pred_check
      _
    $region27: #{tpu_custom_call.1} parent=1 // pred_check_branch
      %77 = sbr.rel (0) target = $region29
    $region28: #{tpu_custom_call.1} parent=1 // pred_region
      %s79 = ssub.s32 32, 32
      %80 = vsyncadd [#allocation9], %s79
      %s81 = sshll.u32 [#allocation8], 4
      %s82 = int_to_ptr.vmem [resolvable:$true] %s81
      %87 = dma.hbm_to_vmem [thread:$0]  %s6, 32, %s82, [#allocation9], 16, 16, 1
    $region29: #{tpu_custom_call.1} parent=1 // pred_fallthru
      _
    // Predicated region
    $region30: #{tpu_custom_call.1} parent=1 // pred_check
      _
    $region31: #{tpu_custom_call.1} parent=1 // pred_check_branch
      %89 = sbr.rel (0) target = $region33
    $region32: #{tpu_custom_call.1} parent=1 // pred_region
      _
    $region33: #{tpu_custom_call.1} parent=1 // pred_fallthru
      _
    // Predicated region
    $region34: #{tpu_custom_call.1} parent=1 // pred_check
      _
    $region35: #{tpu_custom_call.1} parent=1 // pred_check_branch
      %91 = sbr.rel (0) target = $region37
    $region36: #{tpu_custom_call.1} parent=1 // pred_region
      %s93 = ssub.s32 32, 32
      %94 = vsyncadd [#allocation9], %s93
      %s95 = sshll.u32 [#allocation10], 4
      %s96 = int_to_ptr.vmem [resolvable:$true] %s95
      %101 = dma.hbm_to_vmem [thread:$0]  %s8, 32, %s96, [#allocation9], 16, 16, 1
    $region37: #{tpu_custom_call.1} parent=1 // pred_fallthru
      _
    // Predicated region
    $region38: #{tpu_custom_call.1} parent=1 // pred_check
      _
    $region39: #{tpu_custom_call.1} parent=1 // pred_check_branch
      %103 = sbr.rel (0) target = $region41
    $region40: #{tpu_custom_call.1} parent=1 // pred_region
      %s105 = ssub.s32 512, 512
      %106 = vsyncadd [#allocation12], %s105
      %s107 = sshll.u32 [#allocation11], 4
      %s108 = int_to_ptr.vmem [resolvable:$true] %s107
      %113 = dma.hbm_to_vmem [thread:$0]  %s9, 512, %s108, [#allocation12], 64, 64, 4
    $region41: #{tpu_custom_call.1} parent=1 // pred_fallthru
      _
    // Predicated region
    $region42: #{tpu_custom_call.1} parent=1 // pred_check
      _
    $region43: #{tpu_custom_call.1} parent=1 // pred_check_branch
      %115 = sbr.rel (0) target = $region45
    $region44: #{tpu_custom_call.1} parent=1 // pred_region
      %s117 = ssub.s32 32, 32
      %118 = vsyncadd [#allocation12], %s117
      %s119 = sshll.u32 [#allocation13], 4
      %s120 = int_to_ptr.vmem [resolvable:$true] %s119
      %125 = dma.hbm_to_vmem [thread:$0]  %s10, 32, %s120, [#allocation12], 16, 16, 1
    $region45: #{tpu_custom_call.1} parent=1 // pred_fallthru
      _
    // Predicated region
    $region46: #{tpu_custom_call.1} parent=1 // pred_check
      _
    $region47: #{tpu_custom_call.1} parent=1 // pred_check_branch
      %127 = sbr.rel (0) target = $region49
    $region48: #{tpu_custom_call.1} parent=1 // pred_region
      %s129 = ssub.s32 32, 32
      %130 = vsyncadd [#allocation15], %s129
      %s131 = sshll.u32 [#allocation14], 4
      %s132 = int_to_ptr.vmem [resolvable:$true] %s131
      %137 = dma.hbm_to_vmem [thread:$0]  %s11, 32, %s132, [#allocation15], 16, 16, 1
    $region49: #{tpu_custom_call.1} parent=1 // pred_fallthru
      _
    // Predicated region
    $region50: #{tpu_custom_call.1} parent=1 // pred_check
      _
    $region51: #{tpu_custom_call.1} parent=1 // pred_check_branch
      %139 = sbr.rel (0) target = $region53
    $region52: #{tpu_custom_call.1} parent=1 // pred_region
      %s141 = ssub.s32 32, 32
      %142 = vsyncadd [#allocation15], %s141
      %s143 = sshll.u32 [#allocation16], 4
      %s144 = int_to_ptr.vmem [resolvable:$true] %s143
      %149 = dma.hbm_to_vmem [thread:$0]  %s12, 32, %s144, [#allocation15], 16, 16, 1
    $region53: #{tpu_custom_call.1} parent=1 // pred_fallthru
      _
    // Predicated region
    $region54: #{tpu_custom_call.1} parent=1 // pred_check
      _
    $region55: #{tpu_custom_call.1} parent=1 // pred_check_branch
      %151 = sbr.rel (0) target = $region57
    $region56: #{tpu_custom_call.1} parent=1 // pred_region
      _
    $region57: #{tpu_custom_call.1} parent=1 // pred_fallthru
      _
    // Predicated region
    $region58: #{tpu_custom_call.1} parent=1 // pred_check
      _
    $region59: #{tpu_custom_call.1} parent=1 // pred_check_branch
      %153 = sbr.rel (0) target = $region61
    $region60: #{tpu_custom_call.1} parent=1 // pred_region
      %s155 = ssub.s32 32, 32
      %156 = vsyncadd [#allocation18], %s155
      %s157 = sshll.u32 [#allocation17], 4
      %s158 = int_to_ptr.vmem [resolvable:$true] %s157
      %163 = dma.hbm_to_vmem [thread:$0]  %s14, 32, %s158, [#allocation18], 16, 16, 1
    $region61: #{tpu_custom_call.1} parent=1 // pred_fallthru
      _
    // Predicated region
    $region62: #{tpu_custom_call.1} parent=1 // pred_check
      _
    $region63: #{tpu_custom_call.1} parent=1 // pred_check_branch
      %165 = sbr.rel (0) target = $region65
    $region64: #{tpu_custom_call.1} parent=1 // pred_region
      _
    $region65: #{tpu_custom_call.1} parent=1 // pred_fallthru
      _
    // Predicated region
    $region66: #{tpu_custom_call.1} parent=1 // pred_check
      _
    $region67: #{tpu_custom_call.1} parent=1 // pred_check_branch
      %167 = sbr.rel (0) target = $region69
    $region68: #{tpu_custom_call.1} parent=1 // pred_region
      %s169 = ssub.s32 32, 32
      %170 = vsyncadd [#allocation18], %s169
      %s171 = sshll.u32 [#allocation19], 4
      %s172 = int_to_ptr.vmem [resolvable:$true] %s171
      %177 = dma.hbm_to_vmem [thread:$0]  %s16, 32, %s172, [#allocation18], 16, 16, 1
    $region69: #{tpu_custom_call.1} parent=1 // pred_fallthru
      _
    // Predicated region
    $region70: #{tpu_custom_call.1} parent=1 // pred_check
      _
    $region71: #{tpu_custom_call.1} parent=1 // pred_check_branch
      %179 = sbr.rel (0) target = $region73
    $region72: #{tpu_custom_call.1} parent=1 // pred_region
      %s181 = ssub.s32 32, 32
      %182 = vsyncadd [#allocation21], %s181
      %s183 = sshll.u32 [#allocation20], 4
      %s184 = int_to_ptr.vmem [resolvable:$true] %s183
      %189 = dma.hbm_to_vmem [thread:$0]  %s17, 32, %s184, [#allocation21], 16, 16, 1
    $region73: #{tpu_custom_call.1} parent=1 // pred_fallthru
      _
    // Predicated region
    $region74: #{tpu_custom_call.1} parent=1 // pred_check
      _
    $region75: #{tpu_custom_call.1} parent=1 // pred_check_branch
      %191 = sbr.rel (0) target = $region77
    $region76: #{tpu_custom_call.1} parent=1 // pred_region
      _
    $region77: #{tpu_custom_call.1} parent=1 // pred_fallthru
      _
    // Predicated region
    $region78: #{tpu_custom_call.1} parent=1 // pred_check
      _
    $region79: #{tpu_custom_call.1} parent=1 // pred_check_branch
      %193 = sbr.rel (0) target = $region81
    $region80: #{tpu_custom_call.1} parent=1 // pred_region
      _
    $region81: #{tpu_custom_call.1} parent=1 // pred_fallthru
      _
    // Predicated region
    $region82: #{tpu_custom_call.1} parent=1 // pred_check
      _
    $region83: #{tpu_custom_call.1} parent=1 // pred_check_branch
      %195 = sbr.rel (0) target = $region85
    $region84: #{tpu_custom_call.1} parent=1 // pred_region
      _
    $region85: #{tpu_custom_call.1} parent=1 // pred_fallthru
      _
    // Predicated region
    $region86: #{tpu_custom_call.1} parent=1 // pred_check
      _
    $region87: #{tpu_custom_call.1} parent=1 // pred_check_branch
      %197 = sbr.rel (0) target = $region89
    $region88: #{tpu_custom_call.1} parent=1 // pred_region
      _
    $region89: #{tpu_custom_call.1} parent=1 // pred_fallthru
      _
    // Predicated region
    $region90: #{tpu_custom_call.1} parent=1 // pred_check
      _
    $region91: #{tpu_custom_call.1} parent=1 // pred_check_branch
      %199 = sbr.rel (0) target = $region93
    $region92: #{tpu_custom_call.1} parent=1 // pred_region
      _
    $region93: #{tpu_custom_call.1} parent=1 // pred_fallthru
      _
    // Predicated region
    $region94: #{tpu_custom_call.1} parent=1 // pred_check
      _
    $region95: #{tpu_custom_call.1} parent=1 // pred_check_branch
      %201 = sbr.rel (0) target = $region97
    $region96: #{tpu_custom_call.1} parent=1 // pred_region
      %202 = dma.done [#allocation3], 256
    $region97: #{tpu_custom_call.1} parent=1 // pred_fallthru
      _
    // Predicated region
    $region98: #{tpu_custom_call.1} parent=1 // pred_check
      _
    $region99: #{tpu_custom_call.1} parent=1 // pred_check_branch
      %204 = sbr.rel (0) target = $region101
    $region100: #{tpu_custom_call.1} parent=1 // pred_region
      %205 = dma.done [#allocation6], 16
    $region101: #{tpu_custom_call.1} parent=1 // pred_fallthru
      _
    // Predicated region
    $region102: #{tpu_custom_call.1} parent=1 // pred_check
      _
    $region103: #{tpu_custom_call.1} parent=1 // pred_check_branch
      %207 = sbr.rel (0) target = $region105
    $region104: #{tpu_custom_call.1} parent=1 // pred_region
      %208 = dma.done [#allocation6], 32
    $region105: #{tpu_custom_call.1} parent=1 // pred_fallthru
      _
    // Predicated region
    $region106: #{tpu_custom_call.1} parent=1 // pred_check
      _
    $region107: #{tpu_custom_call.1} parent=1 // pred_check_branch
      %210 = sbr.rel (0) target = $region109
    $region108: #{tpu_custom_call.1} parent=1 // pred_region
      %211 = dma.done [#allocation9], 32
    $region109: #{tpu_custom_call.1} parent=1 // pred_fallthru
      _
    // Predicated region
    $region110: #{tpu_custom_call.1} parent=1 // pred_check
      _
    $region111: #{tpu_custom_call.1} parent=1 // pred_check_branch
      %213 = sbr.rel (0) target = $region113
    $region112: #{tpu_custom_call.1} parent=1 // pred_region
      %214 = dma.done [#allocation9], 32
    $region113: #{tpu_custom_call.1} parent=1 // pred_fallthru
      _
    // Predicated region
    $region114: #{tpu_custom_call.1} parent=1 // pred_check
      _
    $region115: #{tpu_custom_call.1} parent=1 // pred_check_branch
      %216 = sbr.rel (0) target = $region117
    $region116: #{tpu_custom_call.1} parent=1 // pred_region
      %217 = dma.done [#allocation12], 512
    $region117: #{tpu_custom_call.1} parent=1 // pred_fallthru
      _
    // Predicated region
    $region118: #{tpu_custom_call.1} parent=1 // pred_check
      _
    $region119: #{tpu_custom_call.1} parent=1 // pred_check_branch
      %219 = sbr.rel (0) target = $region121
    $region120: #{tpu_custom_call.1} parent=1 // pred_region
      %220 = dma.done [#allocation12], 32
    $region121: #{tpu_custom_call.1} parent=1 // pred_fallthru
      _
    // Predicated region
    $region122: #{tpu_custom_call.1} parent=1 // pred_check
      _
    $region123: #{tpu_custom_call.1} parent=1 // pred_check_branch
      %222 = sbr.rel (0) target = $region125
    $region124: #{tpu_custom_call.1} parent=1 // pred_region
      %223 = dma.done [#allocation15], 32
    $region125: #{tpu_custom_call.1} parent=1 // pred_fallthru
      _
    // Predicated region
    $region126: #{tpu_custom_call.1} parent=1 // pred_check
      _
    $region127: #{tpu_custom_call.1} parent=1 // pred_check_branch
      %225 = sbr.rel (0) target = $region129
    $region128: #{tpu_custom_call.1} parent=1 // pred_region
      %226 = dma.done [#allocation15], 32
    $region129: #{tpu_custom_call.1} parent=1 // pred_fallthru
      _
    // Predicated region
    $region130: #{tpu_custom_call.1} parent=1 // pred_check
      _
    $region131: #{tpu_custom_call.1} parent=1 // pred_check_branch
      %228 = sbr.rel (0) target = $region133
    $region132: #{tpu_custom_call.1} parent=1 // pred_region
      %229 = dma.done [#allocation18], 32
    $region133: #{tpu_custom_call.1} parent=1 // pred_fallthru
      _
    // Predicated region
    $region134: #{tpu_custom_call.1} parent=1 // pred_check
      _
    $region135: #{tpu_custom_call.1} parent=1 // pred_check_branch
      %231 = sbr.rel (0) target = $region137
    $region136: #{tpu_custom_call.1} parent=1 // pred_region
      %232 = dma.done [#allocation18], 32
    $region137: #{tpu_custom_call.1} parent=1 // pred_fallthru
      _
    // Predicated region
    $region138: #{tpu_custom_call.1} parent=1 // pred_check
      _
    $region139: #{tpu_custom_call.1} parent=1 // pred_check_branch
      %234 = sbr.rel (0) target = $region141
    $region140: #{tpu_custom_call.1} parent=1 // pred_region
      %235 = dma.done [#allocation21], 32
    $region141: #{tpu_custom_call.1} parent=1 // pred_fallthru
      _
    %v237 = vld [vmem:[#allocation2] sm:$0xff]
    %v238 = vld [vmem:[#allocation2 + $0x8] sm:$0xff]
    %v239 = vld [vmem:[%s1] sm:$0x1]
    %v240 = vld [vmem:[#allocation5] sm:$0x1]
    %vm241 = vcmask 261120
    %v242 = vsel %vm241, %v237, 0.0
    %243 = vadd.xlane.f32.xlu0 %v242
    %v244 = vpop.xlane.xlu0 %243
    %v245 = vsel %vm241, %v238, 0.0
    %246 = vadd.xlane.f32.xlu0 %v245
    %v247 = vpop.xlane.xlu0 %246
    %v248 = vrcp.pop 32.0
    %v249 = vmul.f32 %v244, %v248
    %v250 = vmul.f32 %v247, %v248
    %v251 = vsub.f32 %v237, %v249
    %v252 = vsub.f32 %v238, %v250
    %v253 = vmul.f32 %v251, %v251
    %v254 = vmul.f32 %v252, %v252
    %v255 = vsel %vm241, %v253, 0.0
    %256 = vadd.xlane.f32.xlu0 %v255
    %v257 = vpop.xlane.xlu0 %256
    %v258 = vsel %vm241, %v254, 0.0
    %259 = vadd.xlane.f32.xlu0 %v258
    %v260 = vpop.xlane.xlu0 %259
    %v261 = vmul.f32 %v257, %v248
    %v262 = vmul.f32 %v260, %v248
    %v263 = vadd.f32 %v261, 1e-12
    %v264 = vadd.f32 %v262, 1e-12
    %v265 = vrsqrt.pop %v263
    %v266 = vrsqrt.pop %v264
    %v267 = vmul.f32 %v251, %v265
    %v268 = vmul.f32 %v252, %v266
    %v270 = vlaneseq
    %v271 = vshrl.u32 %v270, 7
    %v272 = vsub.s32 0, %v271
    %v273 = vrot.slane %v239, %v272
    %v275 = vmul.f32 %v267, %v273
    %v276 = vmul.f32 %v268, %v273
    %v278 = vlaneseq
    %v279 = vshrl.u32 %v278, 7
    %v280 = vsub.s32 0, %v279
    %v281 = vrot.slane %v240, %v280
    %v283 = vadd.f32 %v275, %v281
    %v284 = vadd.f32 %v276, %v281
    %v285 = vpack.c.bf16 %v284, %v283
    %v286 = vld [vmem:[%s3] sm:$0xf]
    %v287 = vld [vmem:[%s3 + $0x4] sm:$0xf]
    %v288 = vld [vmem:[%s3 + $0x8] sm:$0xf]
    %v289 = vld [vmem:[%s3 + $0xc] sm:$0xf]
    %v290 = vld [vmem:[#allocation7] sm:$0x1]
    %v292 = vlaneseq
    %v293 = vshrl.u32 %v292, 7
    %v294 = vsub.s32 0, %v293
    %v295 = vrot.slane %v290, %v294
    %v301 = vunpack.c.l.b16 %v286
    %v302 = vunpack.c.l.b16 %v287
    %v303 = vunpack.c.l.b16 %v288
    %v304 = vunpack.c.l.b16 %v289
    %v305 = vpack.c.b16 %v302, %v301
    %v306 = vpack.c.b16 %v304, %v303
    %v310 = vsel %vm241, %v285, 0
    %312 = vmatprep.subr.bf16.mxu0 0
    %313 = vmatpush1.bf16.msra.mxu0 %v305
    %314 = vmatprep.subr.bf16.mxu0 0
    %315 = vmatpush1.bf16.msra.mxu0 %v306
    %316 = vmatprep.subr.bf16.mxu0 0
    %317 = vmatpush1.bf16.msra.mxu0 0
    %318 = vmatprep.subr.bf16.mxu0 0
    %319 = vmatpush1.bf16.msra.mxu0 0
    %320 = vmatprep.subr.bf16.mxu0 0
    %321 = vmatpush1.bf16.msra.mxu0 0
    %322 = vmatprep.subr.bf16.mxu0 0
    %323 = vmatpush1.bf16.msra.mxu0 0
    %324 = vmatprep.subr.bf16.mxu0 0
    %325 = vmatpush1.bf16.msra.mxu0 0
    %326 = vmatprep.subr.bf16.mxu0 0
    %327 = vmatpush1.bf16.msra.mxu0 0
    %328 = vmatprep.subr.bf16.mxu0 0
    %329 = vmatpush1.bf16.msra.mxu0 0
    %330 = vmatprep.subr.bf16.mxu0 0
    %331 = vmatpush1.bf16.msra.mxu0 0
    %332 = vmatprep.subr.bf16.mxu0 0
    %333 = vmatpush1.bf16.msra.mxu0 0
    %334 = vmatprep.subr.bf16.mxu0 0
    %335 = vmatpush1.bf16.msra.mxu0 0
    %336 = vmatprep.subr.bf16.mxu0 0
    %337 = vmatpush1.bf16.msra.mxu0 0
    %338 = vmatprep.subr.bf16.mxu0 0
    %339 = vmatpush1.bf16.msra.mxu0 0
    %340 = vmatprep.subr.bf16.mxu0 0
    %341 = vmatpush1.bf16.msra.mxu0 0
    %342 = vmatprep.subr.bf16.mxu0 0
    %343 = vmatpush1.bf16.msra.mxu0 0
    %344 = vmatprep.mubr.bf16.mxu0 0
    %345 = vmatmul.mubr.bf16.gmra.mrb[0].mxu0 %v310
    %v346 = vpop.f32.mrb[0].mxu0
    %v347 = vadd.f32 %v295, %v346
    %v348 = vpop.f32.mrb[0].mxu0
    %v349 = vpop.f32.mrb[0].mxu0
    %v350 = vadd.f32 %v295, %v349
    %v351 = vpop.f32.mrb[0].mxu0
    %352 = vdwg.mxu0
    %v353 = vld [vmem:[%s5] sm:$0xf]
    %v354 = vld [vmem:[%s5 + $0x4] sm:$0xf]
    %v355 = vld [vmem:[%s5 + $0x8] sm:$0xf]
    %v356 = vld [vmem:[%s5 + $0xc] sm:$0xf]
    %v357 = vld [vmem:[#allocation8] sm:$0x1]
    %v359 = vlaneseq
    %v360 = vshrl.u32 %v359, 7
    %v361 = vsub.s32 0, %v360
    %v362 = vrot.slane %v357, %v361
    %v368 = vunpack.c.l.b16 %v353
    %v369 = vunpack.c.l.b16 %v354
    %v370 = vunpack.c.l.b16 %v355
    %v371 = vunpack.c.l.b16 %v356
    %v372 = vpack.c.b16 %v369, %v368
    %v373 = vpack.c.b16 %v371, %v370
    %376 = vmatprep.subr.bf16.mxu0 0
    %377 = vmatpush1.bf16.msra.mxu0 %v372
    %378 = vmatprep.subr.bf16.mxu0 0
    %379 = vmatpush1.bf16.msra.mxu0 %v373
    %380 = vmatprep.subr.bf16.mxu0 0
    %381 = vmatpush1.bf16.msra.mxu0 0
    %382 = vmatprep.subr.bf16.mxu0 0
    %383 = vmatpush1.bf16.msra.mxu0 0
    %384 = vmatprep.subr.bf16.mxu0 0
    %385 = vmatpush1.bf16.msra.mxu0 0
    %386 = vmatprep.subr.bf16.mxu0 0
    %387 = vmatpush1.bf16.msra.mxu0 0
    %388 = vmatprep.subr.bf16.mxu0 0
    %389 = vmatpush1.bf16.msra.mxu0 0
    %390 = vmatprep.subr.bf16.mxu0 0
    %391 = vmatpush1.bf16.msra.mxu0 0
    %392 = vmatprep.subr.bf16.mxu0 0
    %393 = vmatpush1.bf16.msra.mxu0 0
    %394 = vmatprep.subr.bf16.mxu0 0
    %395 = vmatpush1.bf16.msra.mxu0 0
    %396 = vmatprep.subr.bf16.mxu0 0
    %397 = vmatpush1.bf16.msra.mxu0 0
    %398 = vmatprep.subr.bf16.mxu0 0
    %399 = vmatpush1.bf16.msra.mxu0 0
    %400 = vmatprep.subr.bf16.mxu0 0
    %401 = vmatpush1.bf16.msra.mxu0 0
    %402 = vmatprep.subr.bf16.mxu0 0
    %403 = vmatpush1.bf16.msra.mxu0 0
    %404 = vmatprep.subr.bf16.mxu0 0
    %405 = vmatpush1.bf16.msra.mxu0 0
    %406 = vmatprep.subr.bf16.mxu0 0
    %407 = vmatpush1.bf16.msra.mxu0 0
    %408 = vmatprep.mubr.bf16.mxu0 0
    %409 = vmatmul.mubr.bf16.gmra.mrb[0].mxu0 %v310
    %v410 = vpop.f32.mrb[0].mxu0
    %v411 = vadd.f32 %v362, %v410
    %v412 = vpop.f32.mrb[0].mxu0
    %v413 = vpop.f32.mrb[0].mxu0
    %v414 = vadd.f32 %v362, %v413
    %v415 = vpop.f32.mrb[0].mxu0
    %416 = vdwg.mxu0
    %v417 = vld [vmem:[%s7] sm:$0xf]
    %v418 = vld [vmem:[%s7 + $0x4] sm:$0xf]
    %v419 = vld [vmem:[%s7 + $0x8] sm:$0xf]
    %v420 = vld [vmem:[%s7 + $0xc] sm:$0xf]
    %v421 = vld [vmem:[#allocation10] sm:$0x1]
    %v423 = vlaneseq
    %v424 = vshrl.u32 %v423, 7
    %v425 = vsub.s32 0, %v424
    %v426 = vrot.slane %v421, %v425
    %v432 = vunpack.c.l.b16 %v417
    %v433 = vunpack.c.l.b16 %v418
    %v434 = vunpack.c.l.b16 %v419
    %v435 = vunpack.c.l.b16 %v420
    %v436 = vpack.c.b16 %v433, %v432
    %v437 = vpack.c.b16 %v435, %v434
    %440 = vmatprep.subr.bf16.mxu0 0
    %441 = vmatpush1.bf16.msra.mxu0 %v436
    %442 = vmatprep.subr.bf16.mxu0 0
    %443 = vmatpush1.bf16.msra.mxu0 %v437
    %444 = vmatprep.subr.bf16.mxu0 0
    %445 = vmatpush1.bf16.msra.mxu0 0
    %446 = vmatprep.subr.bf16.mxu0 0
    %447 = vmatpush1.bf16.msra.mxu0 0
    %448 = vmatprep.subr.bf16.mxu0 0
    %449 = vmatpush1.bf16.msra.mxu0 0
    %450 = vmatprep.subr.bf16.mxu0 0
    %451 = vmatpush1.bf16.msra.mxu0 0
    %452 = vmatprep.subr.bf16.mxu0 0
    %453 = vmatpush1.bf16.msra.mxu0 0
    %454 = vmatprep.subr.bf16.mxu0 0
    %455 = vmatpush1.bf16.msra.mxu0 0
    %456 = vmatprep.subr.bf16.mxu0 0
    %457 = vmatpush1.bf16.msra.mxu0 0
    %458 = vmatprep.subr.bf16.mxu0 0
    %459 = vmatpush1.bf16.msra.mxu0 0
    %460 = vmatprep.subr.bf16.mxu0 0
    %461 = vmatpush1.bf16.msra.mxu0 0
    %462 = vmatprep.subr.bf16.mxu0 0
    %463 = vmatpush1.bf16.msra.mxu0 0
    %464 = vmatprep.subr.bf16.mxu0 0
    %465 = vmatpush1.bf16.msra.mxu0 0
    %466 = vmatprep.subr.bf16.mxu0 0
    %467 = vmatpush1.bf16.msra.mxu0 0
    %468 = vmatprep.subr.bf16.mxu0 0
    %469 = vmatpush1.bf16.msra.mxu0 0
    %470 = vmatprep.subr.bf16.mxu0 0
    %471 = vmatpush1.bf16.msra.mxu0 0
    %472 = vmatprep.mubr.bf16.mxu0 0
    %473 = vmatmul.mubr.bf16.gmra.mrb[0].mxu0 %v310
    %v474 = vpop.f32.mrb[0].mxu0
    %v475 = vadd.f32 %v426, %v474
    %v476 = vpop.f32.mrb[0].mxu0
    %v477 = vpop.f32.mrb[0].mxu0
    %v478 = vadd.f32 %v426, %v477
    %v479 = vpop.f32.mrb[0].mxu0
    %480 = vdwg.mxu0
    %v481 = vpack.c.bf16 %v347, %v347
    %v482 = vpack.c.bf16 %v350, %v350
    %v483 = vpack.c.bf16 %v411, %v411
    %v484 = vpack.c.bf16 %v414, %v414
    %v485 = vpack.c.bf16 %v475, %v475
    %v486 = vpack.c.bf16 %v478, %v478
    %vm487 = vcmask 130048
    %v489 = vsel %vm487, %v481, 0
    %v492 = vsel %vm487, %v483, 0
    %494 = vmatprep.subr.bf16.mxu0 0
    %495 = vmatpush1.bf16.xpose.msra.mxu0 %v492
    %496 = vmatprep.subr.bf16.mxu0 0
    %497 = vmatpush1.bf16.xpose.msra.mxu0 0
    %498 = vmatprep.subr.bf16.mxu0 0
    %499 = vmatpush1.bf16.xpose.msra.mxu0 0
    %500 = vmatprep.subr.bf16.mxu0 0
    %501 = vmatpush1.bf16.xpose.msra.mxu0 0
    %502 = vmatprep.subr.bf16.mxu0 0
    %503 = vmatpush1.bf16.xpose.msra.mxu0 0
    %504 = vmatprep.subr.bf16.mxu0 0
    %505 = vmatpush1.bf16.xpose.msra.mxu0 0
    %506 = vmatprep.subr.bf16.mxu0 0
    %507 = vmatpush1.bf16.xpose.msra.mxu0 0
    %508 = vmatprep.subr.bf16.mxu0 0
    %509 = vmatpush1.bf16.xpose.msra.mxu0 0
    %510 = vmatprep.subr.bf16.mxu0 0
    %511 = vmatpush1.bf16.xpose.msra.mxu0 0
    %512 = vmatprep.subr.bf16.mxu0 0
    %513 = vmatpush1.bf16.xpose.msra.mxu0 0
    %514 = vmatprep.subr.bf16.mxu0 0
    %515 = vmatpush1.bf16.xpose.msra.mxu0 0
    %516 = vmatprep.subr.bf16.mxu0 0
    %517 = vmatpush1.bf16.xpose.msra.mxu0 0
    %518 = vmatprep.subr.bf16.mxu0 0
    %519 = vmatpush1.bf16.xpose.msra.mxu0 0
    %520 = vmatprep.subr.bf16.mxu0 0
    %521 = vmatpush1.bf16.xpose.msra.mxu0 0
    %522 = vmatprep.subr.bf16.mxu0 0
    %523 = vmatpush1.bf16.xpose.msra.mxu0 0
    %524 = vmatprep.subr.bf16.mxu0 0
    %525 = vmatpush1.bf16.xpose.msra.mxu0 0
    %526 = vmatprep.mubr.bf16.mxu0 0
    %527 = vmatmul.mubr.bf16.gmra.mrb[0].mxu0 %v489
    %v528 = vpop.f32.mrb[0].mxu0
    %v529 = vadd.f32 0.0, %v528
    %v530 = vpop.f32.mrb[0].mxu0
    %v531 = vpop.f32.mrb[0].mxu0
    %v532 = vpop.f32.mrb[0].mxu0
    %533 = vdwg.mxu0
    %v535 = vsel %vm487, %v482, 0
    %v538 = vsel %vm487, %v484, 0
    %540 = vmatprep.subr.bf16.mxu0 0
    %541 = vmatpush1.bf16.xpose.msra.mxu0 %v538
    %542 = vmatprep.subr.bf16.mxu0 0
    %543 = vmatpush1.bf16.xpose.msra.mxu0 0
    %544 = vmatprep.subr.bf16.mxu0 0
    %545 = vmatpush1.bf16.xpose.msra.mxu0 0
    %546 = vmatprep.subr.bf16.mxu0 0
    %547 = vmatpush1.bf16.xpose.msra.mxu0 0
    %548 = vmatprep.subr.bf16.mxu0 0
    %549 = vmatpush1.bf16.xpose.msra.mxu0 0
    %550 = vmatprep.subr.bf16.mxu0 0
    %551 = vmatpush1.bf16.xpose.msra.mxu0 0
    %552 = vmatprep.subr.bf16.mxu0 0
    %553 = vmatpush1.bf16.xpose.msra.mxu0 0
    %554 = vmatprep.subr.bf16.mxu0 0
    %555 = vmatpush1.bf16.xpose.msra.mxu0 0
    %556 = vmatprep.subr.bf16.mxu0 0
    %557 = vmatpush1.bf16.xpose.msra.mxu0 0
    %558 = vmatprep.subr.bf16.mxu0 0
    %559 = vmatpush1.bf16.xpose.msra.mxu0 0
    %560 = vmatprep.subr.bf16.mxu0 0
    %561 = vmatpush1.bf16.xpose.msra.mxu0 0
    %562 = vmatprep.subr.bf16.mxu0 0
    %563 = vmatpush1.bf16.xpose.msra.mxu0 0
    %564 = vmatprep.subr.bf16.mxu0 0
    %565 = vmatpush1.bf16.xpose.msra.mxu0 0
    %566 = vmatprep.subr.bf16.mxu0 0
    %567 = vmatpush1.bf16.xpose.msra.mxu0 0
    %568 = vmatprep.subr.bf16.mxu0 0
    %569 = vmatpush1.bf16.xpose.msra.mxu0 0
    %570 = vmatprep.subr.bf16.mxu0 0
    %571 = vmatpush1.bf16.xpose.msra.mxu0 0
    %572 = vmatprep.mubr.bf16.mxu0 0
    %573 = vmatmul.mubr.bf16.gmra.mrb[0].mxu0 %v535
    %v574 = vpop.f32.mrb[0].mxu0
    %v575 = vadd.f32 0.0, %v574
    %v576 = vpop.f32.mrb[0].mxu0
    %v577 = vpop.f32.mrb[0].mxu0
    %v578 = vpop.f32.mrb[0].mxu0
    %579 = vdwg.mxu0
    %v580 = vmul.f32 %v529, 0.25
    %v581 = vmul.f32 %v575, 0.25
    %vm582 = vcmask 64512
    %v583 = vsel %vm582, %v580, -inf
    %584 = vmax.xlane.f32.xlu0 %v583
    %v585 = vpop.xlane.xlu0 %584
    %v586 = vsel %vm582, %v581, -inf
    %587 = vmax.xlane.f32.xlu0 %v586
    %v588 = vpop.xlane.xlu0 %587
    %v589 = vsub.f32 %v580, %v585
    %v590 = vsub.f32 %v581, %v588
    %v591 = vmul.f32 %v589, 1.442695
    %v592 = vpow.pop %v591
    %v593 = vmul.f32 %v590, 1.442695
    %v594 = vpow.pop %v593
    %v595 = vsel %vm582, %v592, 0.0
    %596 = vadd.xlane.f32.xlu0 %v595
    %v597 = vpop.xlane.xlu0 %596
    %v598 = vsel %vm582, %v594, 0.0
    %599 = vadd.xlane.f32.xlu0 %v598
    %v600 = vpop.xlane.xlu0 %599
    %v601 = vrcp.pop %v597
    %v602 = vrcp.pop %v600
    %v603 = vmul.f32 %v592, %v601
    %v604 = vmul.f32 %v594, %v602
    %v605 = vpack.c.bf16 %v603, %v603
    %v606 = vpack.c.bf16 %v604, %v604
    %v608 = vsel %vm582, %v605, 0
    %vm610 = vcmask 1043456
    %v612 = vsel %vm610, %v485, 0
    %614 = vmatprep.subr.bf16.mxu0 0
    %615 = vmatpush1.bf16.msra.mxu0 %v612
    %616 = vmatprep.subr.bf16.mxu0 0
    %617 = vmatpush1.bf16.msra.mxu0 0
    %618 = vmatprep.subr.bf16.mxu0 0
    %619 = vmatpush1.bf16.msra.mxu0 0
    %620 = vmatprep.subr.bf16.mxu0 0
    %621 = vmatpush1.bf16.msra.mxu0 0
    %622 = vmatprep.subr.bf16.mxu0 0
    %623 = vmatpush1.bf16.msra.mxu0 0
    %624 = vmatprep.subr.bf16.mxu0 0
    %625 = vmatpush1.bf16.msra.mxu0 0
    %626 = vmatprep.subr.bf16.mxu0 0
    %627 = vmatpush1.bf16.msra.mxu0 0
    %628 = vmatprep.subr.bf16.mxu0 0
    %629 = vmatpush1.bf16.msra.mxu0 0
    %630 = vmatprep.subr.bf16.mxu0 0
    %631 = vmatpush1.bf16.msra.mxu0 0
    %632 = vmatprep.subr.bf16.mxu0 0
    %633 = vmatpush1.bf16.msra.mxu0 0
    %634 = vmatprep.subr.bf16.mxu0 0
    %635 = vmatpush1.bf16.msra.mxu0 0
    %636 = vmatprep.subr.bf16.mxu0 0
    %637 = vmatpush1.bf16.msra.mxu0 0
    %638 = vmatprep.subr.bf16.mxu0 0
    %639 = vmatpush1.bf16.msra.mxu0 0
    %640 = vmatprep.subr.bf16.mxu0 0
    %641 = vmatpush1.bf16.msra.mxu0 0
    %642 = vmatprep.subr.bf16.mxu0 0
    %643 = vmatpush1.bf16.msra.mxu0 0
    %644 = vmatprep.subr.bf16.mxu0 0
    %645 = vmatpush1.bf16.msra.mxu0 0
    %646 = vmatprep.mubr.bf16.mxu0 0
    %647 = vmatmul.mubr.bf16.gmra.mrb[0].mxu0 %v608
    %v648 = vpop.f32.mrb[0].mxu0
    %v649 = vadd.f32 0.0, %v648
    %v650 = vpop.f32.mrb[0].mxu0
    %v651 = vpop.f32.mrb[0].mxu0
    %v652 = vpop.f32.mrb[0].mxu0
    %653 = vdwg.mxu0
    %v655 = vsel %vm582, %v606, 0
    %v658 = vsel %vm610, %v486, 0
    %660 = vmatprep.subr.bf16.mxu0 0
    %661 = vmatpush1.bf16.msra.mxu0 %v658
    %662 = vmatprep.subr.bf16.mxu0 0
    %663 = vmatpush1.bf16.msra.mxu0 0
    %664 = vmatprep.subr.bf16.mxu0 0
    %665 = vmatpush1.bf16.msra.mxu0 0
    %666 = vmatprep.subr.bf16.mxu0 0
    %667 = vmatpush1.bf16.msra.mxu0 0
    %668 = vmatprep.subr.bf16.mxu0 0
    %669 = vmatpush1.bf16.msra.mxu0 0
    %670 = vmatprep.subr.bf16.mxu0 0
    %671 = vmatpush1.bf16.msra.mxu0 0
    %672 = vmatprep.subr.bf16.mxu0 0
    %673 = vmatpush1.bf16.msra.mxu0 0
    %674 = vmatprep.subr.bf16.mxu0 0
    %675 = vmatpush1.bf16.msra.mxu0 0
    %676 = vmatprep.subr.bf16.mxu0 0
    %677 = vmatpush1.bf16.msra.mxu0 0
    %678 = vmatprep.subr.bf16.mxu0 0
    %679 = vmatpush1.bf16.msra.mxu0 0
    %680 = vmatprep.subr.bf16.mxu0 0
    %681 = vmatpush1.bf16.msra.mxu0 0
    %682 = vmatprep.subr.bf16.mxu0 0
    %683 = vmatpush1.bf16.msra.mxu0 0
    %684 = vmatprep.subr.bf16.mxu0 0
    %685 = vmatpush1.bf16.msra.mxu0 0
    %686 = vmatprep.subr.bf16.mxu0 0
    %687 = vmatpush1.bf16.msra.mxu0 0
    %688 = vmatprep.subr.bf16.mxu0 0
    %689 = vmatpush1.bf16.msra.mxu0 0
    %690 = vmatprep.subr.bf16.mxu0 0
    %691 = vmatpush1.bf16.msra.mxu0 0
    %692 = vmatprep.mubr.bf16.mxu0 0
    %693 = vmatmul.mubr.bf16.gmra.mrb[0].mxu0 %v655
    %v694 = vpop.f32.mrb[0].mxu0
    %v695 = vadd.f32 0.0, %v694
    %v696 = vpop.f32.mrb[0].mxu0
    %v697 = vpop.f32.mrb[0].mxu0
    %v698 = vpop.f32.mrb[0].mxu0
    %699 = vdwg.mxu0
    %701 = vrot.lane.b32.xlu0 %v481, 112
    %v702 = vpop.permute.xlu0 %701
    %704 = vrot.lane.b32.xlu0 %v483, 112
    %v705 = vpop.permute.xlu0 %704
    %v707 = vsel %vm487, %v702, 0
    %v710 = vsel %vm487, %v705, 0
    %712 = vmatprep.subr.bf16.mxu0 0
    %713 = vmatpush1.bf16.xpose.msra.mxu0 %v710
    %714 = vmatprep.subr.bf16.mxu0 0
    %715 = vmatpush1.bf16.xpose.msra.mxu0 0
    %716 = vmatprep.subr.bf16.mxu0 0
    %717 = vmatpush1.bf16.xpose.msra.mxu0 0
    %718 = vmatprep.subr.bf16.mxu0 0
    %719 = vmatpush1.bf16.xpose.msra.mxu0 0
    %720 = vmatprep.subr.bf16.mxu0 0
    %721 = vmatpush1.bf16.xpose.msra.mxu0 0
    %722 = vmatprep.subr.bf16.mxu0 0
    %723 = vmatpush1.bf16.xpose.msra.mxu0 0
    %724 = vmatprep.subr.bf16.mxu0 0
    %725 = vmatpush1.bf16.xpose.msra.mxu0 0
    %726 = vmatprep.subr.bf16.mxu0 0
    %727 = vmatpush1.bf16.xpose.msra.mxu0 0
    %728 = vmatprep.subr.bf16.mxu0 0
    %729 = vmatpush1.bf16.xpose.msra.mxu0 0
    %730 = vmatprep.subr.bf16.mxu0 0
    %731 = vmatpush1.bf16.xpose.msra.mxu0 0
    %732 = vmatprep.subr.bf16.mxu0 0
    %733 = vmatpush1.bf16.xpose.msra.mxu0 0
    %734 = vmatprep.subr.bf16.mxu0 0
    %735 = vmatpush1.bf16.xpose.msra.mxu0 0
    %736 = vmatprep.subr.bf16.mxu0 0
    %737 = vmatpush1.bf16.xpose.msra.mxu0 0
    %738 = vmatprep.subr.bf16.mxu0 0
    %739 = vmatpush1.bf16.xpose.msra.mxu0 0
    %740 = vmatprep.subr.bf16.mxu0 0
    %741 = vmatpush1.bf16.xpose.msra.mxu0 0
    %742 = vmatprep.subr.bf16.mxu0 0
    %743 = vmatpush1.bf16.xpose.msra.mxu0 0
    %744 = vmatprep.mubr.bf16.mxu0 0
    %745 = vmatmul.mubr.bf16.gmra.mrb[0].mxu0 %v707
    %v746 = vpop.f32.mrb[0].mxu0
    %v747 = vadd.f32 0.0, %v746
    %v748 = vpop.f32.mrb[0].mxu0
    %v749 = vpop.f32.mrb[0].mxu0
    %v750 = vpop.f32.mrb[0].mxu0
    %751 = vdwg.mxu0
    %753 = vrot.lane.b32.xlu0 %v482, 112
    %v754 = vpop.permute.xlu0 %753
    %756 = vrot.lane.b32.xlu0 %v484, 112
    %v757 = vpop.permute.xlu0 %756
    %v759 = vsel %vm487, %v754, 0
    %v762 = vsel %vm487, %v757, 0
    %764 = vmatprep.subr.bf16.mxu0 0
    %765 = vmatpush1.bf16.xpose.msra.mxu0 %v762
    %766 = vmatprep.subr.bf16.mxu0 0
    %767 = vmatpush1.bf16.xpose.msra.mxu0 0
    %768 = vmatprep.subr.bf16.mxu0 0
    %769 = vmatpush1.bf16.xpose.msra.mxu0 0
    %770 = vmatprep.subr.bf16.mxu0 0
    %771 = vmatpush1.bf16.xpose.msra.mxu0 0
    %772 = vmatprep.subr.bf16.mxu0 0
    %773 = vmatpush1.bf16.xpose.msra.mxu0 0
    %774 = vmatprep.subr.bf16.mxu0 0
    %775 = vmatpush1.bf16.xpose.msra.mxu0 0
    %776 = vmatprep.subr.bf16.mxu0 0
    %777 = vmatpush1.bf16.xpose.msra.mxu0 0
    %778 = vmatprep.subr.bf16.mxu0 0
    %779 = vmatpush1.bf16.xpose.msra.mxu0 0
    %780 = vmatprep.subr.bf16.mxu0 0
    %781 = vmatpush1.bf16.xpose.msra.mxu0 0
    %782 = vmatprep.subr.bf16.mxu0 0
    %783 = vmatpush1.bf16.xpose.msra.mxu0 0
    %784 = vmatprep.subr.bf16.mxu0 0
    %785 = vmatpush1.bf16.xpose.msra.mxu0 0
    %786 = vmatprep.subr.bf16.mxu0 0
    %787 = vmatpush1.bf16.xpose.msra.mxu0 0
    %788 = vmatprep.subr.bf16.mxu0 0
    %789 = vmatpush1.bf16.xpose.msra.mxu0 0
    %790 = vmatprep.subr.bf16.mxu0 0
    %791 = vmatpush1.bf16.xpose.msra.mxu0 0
    %792 = vmatprep.subr.bf16.mxu0 0
    %793 = vmatpush1.bf16.xpose.msra.mxu0 0
    %794 = vmatprep.subr.bf16.mxu0 0
    %795 = vmatpush1.bf16.xpose.msra.mxu0 0
    %796 = vmatprep.mubr.bf16.mxu0 0
    %797 = vmatmul.mubr.bf16.gmra.mrb[0].mxu0 %v759
    %v798 = vpop.f32.mrb[0].mxu0
    %v799 = vadd.f32 0.0, %v798
    %v800 = vpop.f32.mrb[0].mxu0
    %v801 = vpop.f32.mrb[0].mxu0
    %v802 = vpop.f32.mrb[0].mxu0
    %803 = vdwg.mxu0
    %v804 = vmul.f32 %v747, 0.25
    %v805 = vmul.f32 %v799, 0.25
    %v806 = vsel %vm582, %v804, -inf
    %807 = vmax.xlane.f32.xlu0 %v806
    %v808 = vpop.xlane.xlu0 %807
    %v809 = vsel %vm582, %v805, -inf
    %810 = vmax.xlane.f32.xlu0 %v809
    %v811 = vpop.xlane.xlu0 %810
    %v812 = vsub.f32 %v804, %v808
    %v813 = vsub.f32 %v805, %v811
    %v814 = vmul.f32 %v812, 1.442695
    %v815 = vpow.pop %v814
    %v816 = vmul.f32 %v813, 1.442695
    %v817 = vpow.pop %v816
    %v818 = vsel %vm582, %v815, 0.0
    %819 = vadd.xlane.f32.xlu0 %v818
    %v820 = vpop.xlane.xlu0 %819
    %v821 = vsel %vm582, %v817, 0.0
    %822 = vadd.xlane.f32.xlu0 %v821
    %v823 = vpop.xlane.xlu0 %822
    %v824 = vrcp.pop %v820
    %v825 = vrcp.pop %v823
    %v826 = vmul.f32 %v815, %v824
    %v827 = vmul.f32 %v817, %v825
    %v828 = vpack.c.bf16 %v826, %v826
    %v829 = vpack.c.bf16 %v827, %v827
    %831 = vrot.lane.b32.xlu0 %v485, 112
    %v832 = vpop.permute.xlu0 %831
    %v834 = vsel %vm582, %v828, 0
    %v837 = vsel %vm610, %v832, 0
    %839 = vmatprep.subr.bf16.mxu0 0
    %840 = vmatpush1.bf16.msra.mxu0 %v837
    %841 = vmatprep.subr.bf16.mxu0 0
    %842 = vmatpush1.bf16.msra.mxu0 0
    %843 = vmatprep.subr.bf16.mxu0 0
    %844 = vmatpush1.bf16.msra.mxu0 0
    %845 = vmatprep.subr.bf16.mxu0 0
    %846 = vmatpush1.bf16.msra.mxu0 0
    %847 = vmatprep.subr.bf16.mxu0 0
    %848 = vmatpush1.bf16.msra.mxu0 0
    %849 = vmatprep.subr.bf16.mxu0 0
    %850 = vmatpush1.bf16.msra.mxu0 0
    %851 = vmatprep.subr.bf16.mxu0 0
    %852 = vmatpush1.bf16.msra.mxu0 0
    %853 = vmatprep.subr.bf16.mxu0 0
    %854 = vmatpush1.bf16.msra.mxu0 0
    %855 = vmatprep.subr.bf16.mxu0 0
    %856 = vmatpush1.bf16.msra.mxu0 0
    %857 = vmatprep.subr.bf16.mxu0 0
    %858 = vmatpush1.bf16.msra.mxu0 0
    %859 = vmatprep.subr.bf16.mxu0 0
    %860 = vmatpush1.bf16.msra.mxu0 0
    %861 = vmatprep.subr.bf16.mxu0 0
    %862 = vmatpush1.bf16.msra.mxu0 0
    %863 = vmatprep.subr.bf16.mxu0 0
    %864 = vmatpush1.bf16.msra.mxu0 0
    %865 = vmatprep.subr.bf16.mxu0 0
    %866 = vmatpush1.bf16.msra.mxu0 0
    %867 = vmatprep.subr.bf16.mxu0 0
    %868 = vmatpush1.bf16.msra.mxu0 0
    %869 = vmatprep.subr.bf16.mxu0 0
    %870 = vmatpush1.bf16.msra.mxu0 0
    %871 = vmatprep.mubr.bf16.mxu0 0
    %872 = vmatmul.mubr.bf16.gmra.mrb[0].mxu0 %v834
    %v873 = vpop.f32.mrb[0].mxu0
    %v874 = vadd.f32 0.0, %v873
    %v875 = vpop.f32.mrb[0].mxu0
    %v876 = vpop.f32.mrb[0].mxu0
    %v877 = vpop.f32.mrb[0].mxu0
    %878 = vdwg.mxu0
    %880 = vrot.lane.b32.xlu0 %v486, 112
    %v881 = vpop.permute.xlu0 %880
    %v883 = vsel %vm582, %v829, 0
    %v886 = vsel %vm610, %v881, 0
    %888 = vmatprep.subr.bf16.mxu0 0
    %889 = vmatpush1.bf16.msra.mxu0 %v886
    %890 = vmatprep.subr.bf16.mxu0 0
    %891 = vmatpush1.bf16.msra.mxu0 0
    %892 = vmatprep.subr.bf16.mxu0 0
    %893 = vmatpush1.bf16.msra.mxu0 0
    %894 = vmatprep.subr.bf16.mxu0 0
    %895 = vmatpush1.bf16.msra.mxu0 0
    %896 = vmatprep.subr.bf16.mxu0 0
    %897 = vmatpush1.bf16.msra.mxu0 0
    %898 = vmatprep.subr.bf16.mxu0 0
    %899 = vmatpush1.bf16.msra.mxu0 0
    %900 = vmatprep.subr.bf16.mxu0 0
    %901 = vmatpush1.bf16.msra.mxu0 0
    %902 = vmatprep.subr.bf16.mxu0 0
    %903 = vmatpush1.bf16.msra.mxu0 0
    %904 = vmatprep.subr.bf16.mxu0 0
    %905 = vmatpush1.bf16.msra.mxu0 0
    %906 = vmatprep.subr.bf16.mxu0 0
    %907 = vmatpush1.bf16.msra.mxu0 0
    %908 = vmatprep.subr.bf16.mxu0 0
    %909 = vmatpush1.bf16.msra.mxu0 0
    %910 = vmatprep.subr.bf16.mxu0 0
    %911 = vmatpush1.bf16.msra.mxu0 0
    %912 = vmatprep.subr.bf16.mxu0 0
    %913 = vmatpush1.bf16.msra.mxu0 0
    %914 = vmatprep.subr.bf16.mxu0 0
    %915 = vmatpush1.bf16.msra.mxu0 0
    %916 = vmatprep.subr.bf16.mxu0 0
    %917 = vmatpush1.bf16.msra.mxu0 0
    %918 = vmatprep.subr.bf16.mxu0 0
    %919 = vmatpush1.bf16.msra.mxu0 0
    %920 = vmatprep.mubr.bf16.mxu0 0
    %921 = vmatmul.mubr.bf16.gmra.mrb[0].mxu0 %v883
    %v922 = vpop.f32.mrb[0].mxu0
    %v923 = vadd.f32 0.0, %v922
    %v924 = vpop.f32.mrb[0].mxu0
    %v925 = vpop.f32.mrb[0].mxu0
    %v926 = vpop.f32.mrb[0].mxu0
    %927 = vdwg.mxu0
    %930 = vrot.lane.b32.xlu0 %v874, 16
    %v931 = vpop.permute.xlu0 %930
    %932 = vrot.lane.b32.xlu0 %v923, 16
    %v933 = vpop.permute.xlu0 %932
    %v936 = vsel %vm487, %v649, %v931
    %v937 = vsel %vm487, %v695, %v933
    %v938 = vld [vmem:[#allocation11] sm:$0xf]
    %v939 = vld [vmem:[#allocation11 + $0x4] sm:$0xf]
    %v940 = vld [vmem:[#allocation11 + $0x8] sm:$0xf]
    %v941 = vld [vmem:[#allocation11 + $0xc] sm:$0xf]
    %v942 = vpack.c.bf16 %v937, %v936
    %v943 = vld [vmem:[#allocation13] sm:$0x1]
    %v945 = vlaneseq
    %v946 = vshrl.u32 %v945, 7
    %v947 = vsub.s32 0, %v946
    %v948 = vrot.slane %v943, %v947
    %v954 = vunpack.c.l.b16 %v938
    %v955 = vunpack.c.l.b16 %v939
    %v956 = vunpack.c.l.b16 %v940
    %v957 = vunpack.c.l.b16 %v941
    %v958 = vpack.c.b16 %v955, %v954
    %v959 = vpack.c.b16 %v957, %v956
    %v963 = vsel %vm241, %v942, 0
    %965 = vmatprep.subr.bf16.mxu0 0
    %966 = vmatpush1.bf16.msra.mxu0 %v958
    %967 = vmatprep.subr.bf16.mxu0 0
    %968 = vmatpush1.bf16.msra.mxu0 %v959
    %969 = vmatprep.subr.bf16.mxu0 0
    %970 = vmatpush1.bf16.msra.mxu0 0
    %971 = vmatprep.subr.bf16.mxu0 0
    %972 = vmatpush1.bf16.msra.mxu0 0
    %973 = vmatprep.subr.bf16.mxu0 0
    %974 = vmatpush1.bf16.msra.mxu0 0
    %975 = vmatprep.subr.bf16.mxu0 0
    %976 = vmatpush1.bf16.msra.mxu0 0
    %977 = vmatprep.subr.bf16.mxu0 0
    %978 = vmatpush1.bf16.msra.mxu0 0
    %979 = vmatprep.subr.bf16.mxu0 0
    %980 = vmatpush1.bf16.msra.mxu0 0
    %981 = vmatprep.subr.bf16.mxu0 0
    %982 = vmatpush1.bf16.msra.mxu0 0
    %983 = vmatprep.subr.bf16.mxu0 0
    %984 = vmatpush1.bf16.msra.mxu0 0
    %985 = vmatprep.subr.bf16.mxu0 0
    %986 = vmatpush1.bf16.msra.mxu0 0
    %987 = vmatprep.subr.bf16.mxu0 0
    %988 = vmatpush1.bf16.msra.mxu0 0
    %989 = vmatprep.subr.bf16.mxu0 0
    %990 = vmatpush1.bf16.msra.mxu0 0
    %991 = vmatprep.subr.bf16.mxu0 0
    %992 = vmatpush1.bf16.msra.mxu0 0
    %993 = vmatprep.subr.bf16.mxu0 0
    %994 = vmatpush1.bf16.msra.mxu0 0
    %995 = vmatprep.subr.bf16.mxu0 0
    %996 = vmatpush1.bf16.msra.mxu0 0
    %997 = vmatprep.mubr.bf16.mxu0 0
    %998 = vmatmul.mubr.bf16.gmra.mrb[0].mxu0 %v963
    %v999 = vpop.f32.mrb[0].mxu0
    %v1000 = vadd.f32 %v948, %v999
    %v1001 = vpop.f32.mrb[0].mxu0
    %v1002 = vpop.f32.mrb[0].mxu0
    %v1003 = vadd.f32 %v948, %v1002
    %v1004 = vpop.f32.mrb[0].mxu0
    %1005 = vdwg.mxu0
    %v1006 = vadd.f32 %v283, %v1000
    %v1007 = vadd.f32 %v284, %v1003
    %v1008 = vld [vmem:[#allocation14] sm:$0x1]
    %v1009 = vld [vmem:[#allocation16] sm:$0x1]
    %v1010 = vsel %vm241, %v1006, 0.0
    %1011 = vadd.xlane.f32.xlu0 %v1010
    %v1012 = vpop.xlane.xlu0 %1011
    %v1013 = vsel %vm241, %v1007, 0.0
    %1014 = vadd.xlane.f32.xlu0 %v1013
    %v1015 = vpop.xlane.xlu0 %1014
    %v1016 = vmul.f32 %v1012, %v248
    %v1017 = vmul.f32 %v1015, %v248
    %v1018 = vsub.f32 %v1006, %v1016
    %v1019 = vsub.f32 %v1007, %v1017
    %v1020 = vmul.f32 %v1018, %v1018
    %v1021 = vmul.f32 %v1019, %v1019
    %v1022 = vsel %vm241, %v1020, 0.0
    %1023 = vadd.xlane.f32.xlu0 %v1022
    %v1024 = vpop.xlane.xlu0 %1023
    %v1025 = vsel %vm241, %v1021, 0.0
    %1026 = vadd.xlane.f32.xlu0 %v1025
    %v1027 = vpop.xlane.xlu0 %1026
    %v1028 = vmul.f32 %v1024, %v248
    %v1029 = vmul.f32 %v1027, %v248
    %v1030 = vadd.f32 %v1028, 1e-12
    %v1031 = vadd.f32 %v1029, 1e-12
    %v1032 = vrsqrt.pop %v1030
    %v1033 = vrsqrt.pop %v1031
    %v1034 = vmul.f32 %v1018, %v1032
    %v1035 = vmul.f32 %v1019, %v1033
    %v1037 = vlaneseq
    %v1038 = vshrl.u32 %v1037, 7
    %v1039 = vsub.s32 0, %v1038
    %v1040 = vrot.slane %v1008, %v1039
    %v1042 = vmul.f32 %v1034, %v1040
    %v1043 = vmul.f32 %v1035, %v1040
    %v1045 = vlaneseq
    %v1046 = vshrl.u32 %v1045, 7
    %v1047 = vsub.s32 0, %v1046
    %v1048 = vrot.slane %v1009, %v1047
    %v1050 = vadd.f32 %v1042, %v1048
    %v1051 = vadd.f32 %v1043, %v1048
    %v1052 = vld [vmem:[%s13] sm:$0xf]
    %v1053 = vld [vmem:[%s13 + $0x4] sm:$0xf]
    %v1054 = vld [vmem:[%s13 + $0x8] sm:$0xf]
    %v1055 = vld [vmem:[%s13 + $0xc] sm:$0xf]
    %v1056 = vpack.c.bf16 %v1051, %v1050
    %v1057 = vld [vmem:[#allocation17] sm:$0x1]
    %v1059 = vlaneseq
    %v1060 = vshrl.u32 %v1059, 7
    %v1061 = vsub.s32 0, %v1060
    %v1062 = vrot.slane %v1057, %v1061
    %v1068 = vunpack.c.l.b16 %v1052
    %v1069 = vunpack.c.l.b16 %v1053
    %v1070 = vunpack.c.l.b16 %v1054
    %v1071 = vunpack.c.l.b16 %v1055
    %v1072 = vpack.c.b16 %v1069, %v1068
    %v1073 = vpack.c.b16 %v1071, %v1070
    %v1077 = vsel %vm241, %v1056, 0
    %1079 = vmatprep.subr.bf16.mxu0 0
    %1080 = vmatpush1.bf16.msra.mxu0 %v1072
    %1081 = vmatprep.subr.bf16.mxu0 0
    %1082 = vmatpush1.bf16.msra.mxu0 %v1073
    %1083 = vmatprep.subr.bf16.mxu0 0
    %1084 = vmatpush1.bf16.msra.mxu0 0
    %1085 = vmatprep.subr.bf16.mxu0 0
    %1086 = vmatpush1.bf16.msra.mxu0 0
    %1087 = vmatprep.subr.bf16.mxu0 0
    %1088 = vmatpush1.bf16.msra.mxu0 0
    %1089 = vmatprep.subr.bf16.mxu0 0
    %1090 = vmatpush1.bf16.msra.mxu0 0
    %1091 = vmatprep.subr.bf16.mxu0 0
    %1092 = vmatpush1.bf16.msra.mxu0 0
    %1093 = vmatprep.subr.bf16.mxu0 0
    %1094 = vmatpush1.bf16.msra.mxu0 0
    %1095 = vmatprep.subr.bf16.mxu0 0
    %1096 = vmatpush1.bf16.msra.mxu0 0
    %1097 = vmatprep.subr.bf16.mxu0 0
    %1098 = vmatpush1.bf16.msra.mxu0 0
    %1099 = vmatprep.subr.bf16.mxu0 0
    %1100 = vmatpush1.bf16.msra.mxu0 0
    %1101 = vmatprep.subr.bf16.mxu0 0
    %1102 = vmatpush1.bf16.msra.mxu0 0
    %1103 = vmatprep.subr.bf16.mxu0 0
    %1104 = vmatpush1.bf16.msra.mxu0 0
    %1105 = vmatprep.subr.bf16.mxu0 0
    %1106 = vmatpush1.bf16.msra.mxu0 0
    %1107 = vmatprep.subr.bf16.mxu0 0
    %1108 = vmatpush1.bf16.msra.mxu0 0
    %1109 = vmatprep.subr.bf16.mxu0 0
    %1110 = vmatpush1.bf16.msra.mxu0 0
    %1111 = vmatprep.mubr.bf16.mxu0 0
    %1112 = vmatmul.mubr.bf16.gmra.mrb[0].mxu0 %v1077
    %v1113 = vpop.f32.mrb[0].mxu0
    %v1114 = vadd.f32 %v1062, %v1113
    %v1115 = vpop.f32.mrb[0].mxu0
    %v1116 = vpop.f32.mrb[0].mxu0
    %v1117 = vadd.f32 %v1062, %v1116
    %v1118 = vpop.f32.mrb[0].mxu0
    %1119 = vdwg.mxu0
    %v1120 = vmul.f32 %v1114, %v1114
    %v1121 = vmul.f32 %v1117, %v1117
    %v1122 = vmul.f32 %v1114, %v1120
    %v1123 = vmul.f32 %v1117, %v1121
    %v1124 = vmul.f32 %v1122, 0.044715
    %v1125 = vmul.f32 %v1123, 0.044715
    %v1126 = vadd.f32 %v1114, %v1124
    %v1127 = vadd.f32 %v1117, %v1125
    %v1128 = vmul.f32 %v1126, 0.7978846
    %v1129 = vmul.f32 %v1127, 0.7978846
    %v1130 = vtanh.pop %v1128
    %v1131 = vtanh.pop %v1129
    %v1132 = vadd.f32 %v1130, 1.0
    %v1133 = vadd.f32 %v1131, 1.0
    %v1134 = vmul.f32 %v1132, 0.5
    %v1135 = vmul.f32 %v1133, 0.5
    %v1136 = vmul.f32 %v1114, %v1134
    %v1137 = vmul.f32 %v1117, %v1135
    %v1138 = vld [vmem:[%s15] sm:$0xf]
    %v1139 = vld [vmem:[%s15 + $0x4] sm:$0xf]
    %v1140 = vld [vmem:[%s15 + $0x8] sm:$0xf]
    %v1141 = vld [vmem:[%s15 + $0xc] sm:$0xf]
    %v1142 = vld [vmem:[%s15 + $0x10] sm:$0xf]
    %v1143 = vld [vmem:[%s15 + $0x14] sm:$0xf]
    %v1144 = vld [vmem:[%s15 + $0x18] sm:$0xf]
    %v1145 = vld [vmem:[%s15 + $0x1c] sm:$0xf]
    %v1146 = vpack.c.bf16 %v1137, %v1136
    %v1147 = vld [vmem:[#allocation19] sm:$0x1]
    %v1149 = vlaneseq
    %v1150 = vshrl.u32 %v1149, 7
    %v1151 = vsub.s32 0, %v1150
    %v1152 = vrot.slane %v1147, %v1151
    %v1162 = vunpack.c.l.b16 %v1138
    %v1163 = vunpack.c.l.b16 %v1139
    %v1164 = vunpack.c.l.b16 %v1140
    %v1165 = vunpack.c.l.b16 %v1141
    %v1166 = vunpack.c.l.b16 %v1142
    %v1167 = vunpack.c.l.b16 %v1143
    %v1168 = vunpack.c.l.b16 %v1144
    %v1169 = vunpack.c.l.b16 %v1145
    %v1170 = vpack.c.b16 %v1163, %v1162
    %v1171 = vpack.c.b16 %v1165, %v1164
    %v1172 = vpack.c.b16 %v1167, %v1166
    %v1173 = vpack.c.b16 %v1169, %v1168
    %vm1178 = vcmask 523264
    %v1180 = vsel %vm1178, %v1146, 0
    %1182 = vmatprep.subr.bf16.mxu0 0
    %1183 = vmatpush1.bf16.msra.mxu0 %v1170
    %1184 = vmatprep.subr.bf16.mxu0 0
    %1185 = vmatpush1.bf16.msra.mxu0 %v1171
    %1186 = vmatprep.subr.bf16.mxu0 0
    %1187 = vmatpush1.bf16.msra.mxu0 %v1172
    %1188 = vmatprep.subr.bf16.mxu0 0
    %1189 = vmatpush1.bf16.msra.mxu0 %v1173
    %1190 = vmatprep.subr.bf16.mxu0 0
    %1191 = vmatpush1.bf16.msra.mxu0 0
    %1192 = vmatprep.subr.bf16.mxu0 0
    %1193 = vmatpush1.bf16.msra.mxu0 0
    %1194 = vmatprep.subr.bf16.mxu0 0
    %1195 = vmatpush1.bf16.msra.mxu0 0
    %1196 = vmatprep.subr.bf16.mxu0 0
    %1197 = vmatpush1.bf16.msra.mxu0 0
    %1198 = vmatprep.subr.bf16.mxu0 0
    %1199 = vmatpush1.bf16.msra.mxu0 0
    %1200 = vmatprep.subr.bf16.mxu0 0
    %1201 = vmatpush1.bf16.msra.mxu0 0
    %1202 = vmatprep.subr.bf16.mxu0 0
    %1203 = vmatpush1.bf16.msra.mxu0 0
    %1204 = vmatprep.subr.bf16.mxu0 0
    %1205 = vmatpush1.bf16.msra.mxu0 0
    %1206 = vmatprep.subr.bf16.mxu0 0
    %1207 = vmatpush1.bf16.msra.mxu0 0
    %1208 = vmatprep.subr.bf16.mxu0 0
    %1209 = vmatpush1.bf16.msra.mxu0 0
    %1210 = vmatprep.subr.bf16.mxu0 0
    %1211 = vmatpush1.bf16.msra.mxu0 0
    %1212 = vmatprep.subr.bf16.mxu0 0
    %1213 = vmatpush1.bf16.msra.mxu0 0
    %1214 = vmatprep.mubr.bf16.mxu0 0
    %1215 = vmatmul.mubr.bf16.gmra.mrb[0].mxu0 %v1180
    %v1216 = vpop.f32.mrb[0].mxu0
    %v1217 = vadd.f32 %v1152, %v1216
    %v1218 = vpop.f32.mrb[0].mxu0
    %v1219 = vpop.f32.mrb[0].mxu0
    %v1220 = vadd.f32 %v1152, %v1219
    %v1221 = vpop.f32.mrb[0].mxu0
    %1222 = vdwg.mxu0
    %v1223 = vadd.f32 %v1050, %v1217
    %v1224 = vadd.f32 %v1051, %v1220
    %v1225 = vld [vmem:[#allocation20] sm:$0x1]
    %v1226 = vld [vmem:[%s18] sm:$0x1]
    %v1227 = vsel %vm241, %v1223, 0.0
    %1228 = vadd.xlane.f32.xlu0 %v1227
    %v1229 = vpop.xlane.xlu0 %1228
    %v1230 = vsel %vm241, %v1224, 0.0
    %1231 = vadd.xlane.f32.xlu0 %v1230
    %v1232 = vpop.xlane.xlu0 %1231
    %v1233 = vmul.f32 %v1229, %v248
    %v1234 = vmul.f32 %v1232, %v248
    %v1235 = vsub.f32 %v1223, %v1233
    %v1236 = vsub.f32 %v1224, %v1234
    %v1237 = vmul.f32 %v1235, %v1235
    %v1238 = vmul.f32 %v1236, %v1236
    %v1239 = vsel %vm241, %v1237, 0.0
    %1240 = vadd.xlane.f32.xlu0 %v1239
    %v1241 = vpop.xlane.xlu0 %1240
    %v1242 = vsel %vm241, %v1238, 0.0
    %1243 = vadd.xlane.f32.xlu0 %v1242
    %v1244 = vpop.xlane.xlu0 %1243
    %v1245 = vmul.f32 %v1241, %v248
    %v1246 = vmul.f32 %v1244, %v248
    %v1247 = vadd.f32 %v1245, 1e-12
    %v1248 = vadd.f32 %v1246, 1e-12
    %v1249 = vrsqrt.pop %v1247
    %v1250 = vrsqrt.pop %v1248
    %v1251 = vmul.f32 %v1235, %v1249
    %v1252 = vmul.f32 %v1236, %v1250
    %v1254 = vlaneseq
    %v1255 = vshrl.u32 %v1254, 7
    %v1256 = vsub.s32 0, %v1255
    %v1257 = vrot.slane %v1225, %v1256
    %v1259 = vmul.f32 %v1251, %v1257
    %v1260 = vmul.f32 %v1252, %v1257
    %v1262 = vlaneseq
    %v1263 = vshrl.u32 %v1262, 7
    %v1264 = vsub.s32 0, %v1263
    %v1265 = vrot.slane %v1226, %v1264
    %v1267 = vadd.f32 %v1259, %v1265
    %v1268 = vadd.f32 %v1260, %v1265
    %v1269 = vpack.c.bf16 %v1268, %v1267
    %s1270 = scalar_lea.vmem %s3, 16
    %v1271 = vld [vmem:[%s1270] sm:$0xf]
    %v1272 = vld [vmem:[%s1270 + $0x4] sm:$0xf]
    %v1273 = vld [vmem:[%s1270 + $0x8] sm:$0xf]
    %v1274 = vld [vmem:[%s1270 + $0xc] sm:$0xf]
    %s1275 = scalar_lea.vmem [#allocation7], 1
    %v1276 = vld [vmem:[%s1275] sm:$0x1]
    %v1278 = vlaneseq
    %v1279 = vshrl.u32 %v1278, 7
    %v1280 = vsub.s32 0, %v1279
    %v1281 = vrot.slane %v1276, %v1280
    %v1287 = vunpack.c.l.b16 %v1271
    %v1288 = vunpack.c.l.b16 %v1272
    %v1289 = vunpack.c.l.b16 %v1273
    %v1290 = vunpack.c.l.b16 %v1274
    %v1291 = vpack.c.b16 %v1288, %v1287
    %v1292 = vpack.c.b16 %v1290, %v1289
    %v1296 = vsel %vm241, %v1269, 0
    %1298 = vmatprep.subr.bf16.mxu0 0
    %1299 = vmatpush1.bf16.msra.mxu0 %v1291
    %1300 = vmatprep.subr.bf16.mxu0 0
    %1301 = vmatpush1.bf16.msra.mxu0 %v1292
    %1302 = vmatprep.subr.bf16.mxu0 0
    %1303 = vmatpush1.bf16.msra.mxu0 0
    %1304 = vmatprep.subr.bf16.mxu0 0
    %1305 = vmatpush1.bf16.msra.mxu0 0
    %1306 = vmatprep.subr.bf16.mxu0 0
    %1307 = vmatpush1.bf16.msra.mxu0 0
    %1308 = vmatprep.subr.bf16.mxu0 0
    %1309 = vmatpush1.bf16.msra.mxu0 0
    %1310 = vmatprep.subr.bf16.mxu0 0
    %1311 = vmatpush1.bf16.msra.mxu0 0
    %1312 = vmatprep.subr.bf16.mxu0 0
    %1313 = vmatpush1.bf16.msra.mxu0 0
    %1314 = vmatprep.subr.bf16.mxu0 0
    %1315 = vmatpush1.bf16.msra.mxu0 0
    %1316 = vmatprep.subr.bf16.mxu0 0
    %1317 = vmatpush1.bf16.msra.mxu0 0
    %1318 = vmatprep.subr.bf16.mxu0 0
    %1319 = vmatpush1.bf16.msra.mxu0 0
    %1320 = vmatprep.subr.bf16.mxu0 0
    %1321 = vmatpush1.bf16.msra.mxu0 0
    %1322 = vmatprep.subr.bf16.mxu0 0
    %1323 = vmatpush1.bf16.msra.mxu0 0
    %1324 = vmatprep.subr.bf16.mxu0 0
    %1325 = vmatpush1.bf16.msra.mxu0 0
    %1326 = vmatprep.subr.bf16.mxu0 0
    %1327 = vmatpush1.bf16.msra.mxu0 0
    %1328 = vmatprep.subr.bf16.mxu0 0
    %1329 = vmatpush1.bf16.msra.mxu0 0
    %1330 = vmatprep.mubr.bf16.mxu0 0
    %1331 = vmatmul.mubr.bf16.gmra.mrb[0].mxu0 %v1296
    %v1332 = vpop.f32.mrb[0].mxu0
    %v1333 = vadd.f32 %v1281, %v1332
    %v1334 = vpop.f32.mrb[0].mxu0
    %v1335 = vpop.f32.mrb[0].mxu0
    %v1336 = vadd.f32 %v1281, %v1335
    %v1337 = vpop.f32.mrb[0].mxu0
    %1338 = vdwg.mxu0
    %s1339 = scalar_lea.vmem %s5, 16
    %v1340 = vld [vmem:[%s1339] sm:$0xf]
    %v1341 = vld [vmem:[%s1339 + $0x4] sm:$0xf]
    %v1342 = vld [vmem:[%s1339 + $0x8] sm:$0xf]
    %v1343 = vld [vmem:[%s1339 + $0xc] sm:$0xf]
    %s1344 = scalar_lea.vmem [#allocation8], 1
    %v1345 = vld [vmem:[%s1344] sm:$0x1]
    %v1347 = vlaneseq
    %v1348 = vshrl.u32 %v1347, 7
    %v1349 = vsub.s32 0, %v1348
    %v1350 = vrot.slane %v1345, %v1349
    %v1356 = vunpack.c.l.b16 %v1340
    %v1357 = vunpack.c.l.b16 %v1341
    %v1358 = vunpack.c.l.b16 %v1342
    %v1359 = vunpack.c.l.b16 %v1343
    %v1360 = vpack.c.b16 %v1357, %v1356
    %v1361 = vpack.c.b16 %v1359, %v1358
    %1364 = vmatprep.subr.bf16.mxu0 0
    %1365 = vmatpush1.bf16.msra.mxu0 %v1360
    %1366 = vmatprep.subr.bf16.mxu0 0
    %1367 = vmatpush1.bf16.msra.mxu0 %v1361
    %1368 = vmatprep.subr.bf16.mxu0 0
    %1369 = vmatpush1.bf16.msra.mxu0 0
    %1370 = vmatprep.subr.bf16.mxu0 0
    %1371 = vmatpush1.bf16.msra.mxu0 0
    %1372 = vmatprep.subr.bf16.mxu0 0
    %1373 = vmatpush1.bf16.msra.mxu0 0
    %1374 = vmatprep.subr.bf16.mxu0 0
    %1375 = vmatpush1.bf16.msra.mxu0 0
    %1376 = vmatprep.subr.bf16.mxu0 0
    %1377 = vmatpush1.bf16.msra.mxu0 0
    %1378 = vmatprep.subr.bf16.mxu0 0
    %1379 = vmatpush1.bf16.msra.mxu0 0
    %1380 = vmatprep.subr.bf16.mxu0 0
    %1381 = vmatpush1.bf16.msra.mxu0 0
    %1382 = vmatprep.subr.bf16.mxu0 0
    %1383 = vmatpush1.bf16.msra.mxu0 0
    %1384 = vmatprep.subr.bf16.mxu0 0
    %1385 = vmatpush1.bf16.msra.mxu0 0
    %1386 = vmatprep.subr.bf16.mxu0 0
    %1387 = vmatpush1.bf16.msra.mxu0 0
    %1388 = vmatprep.subr.bf16.mxu0 0
    %1389 = vmatpush1.bf16.msra.mxu0 0
    %1390 = vmatprep.subr.bf16.mxu0 0
    %1391 = vmatpush1.bf16.msra.mxu0 0
    %1392 = vmatprep.subr.bf16.mxu0 0
    %1393 = vmatpush1.bf16.msra.mxu0 0
    %1394 = vmatprep.subr.bf16.mxu0 0
    %1395 = vmatpush1.bf16.msra.mxu0 0
    %1396 = vmatprep.mubr.bf16.mxu0 0
    %1397 = vmatmul.mubr.bf16.gmra.mrb[0].mxu0 %v1296
    %v1398 = vpop.f32.mrb[0].mxu0
    %v1399 = vadd.f32 %v1350, %v1398
    %v1400 = vpop.f32.mrb[0].mxu0
    %v1401 = vpop.f32.mrb[0].mxu0
    %v1402 = vadd.f32 %v1350, %v1401
    %v1403 = vpop.f32.mrb[0].mxu0
    %1404 = vdwg.mxu0
    %s1405 = scalar_lea.vmem %s7, 16
    %v1406 = vld [vmem:[%s1405] sm:$0xf]
    %v1407 = vld [vmem:[%s1405 + $0x4] sm:$0xf]
    %v1408 = vld [vmem:[%s1405 + $0x8] sm:$0xf]
    %v1409 = vld [vmem:[%s1405 + $0xc] sm:$0xf]
    %s1410 = scalar_lea.vmem [#allocation10], 1
    %v1411 = vld [vmem:[%s1410] sm:$0x1]
    %v1413 = vlaneseq
    %v1414 = vshrl.u32 %v1413, 7
    %v1415 = vsub.s32 0, %v1414
    %v1416 = vrot.slane %v1411, %v1415
    %v1422 = vunpack.c.l.b16 %v1406
    %v1423 = vunpack.c.l.b16 %v1407
    %v1424 = vunpack.c.l.b16 %v1408
    %v1425 = vunpack.c.l.b16 %v1409
    %v1426 = vpack.c.b16 %v1423, %v1422
    %v1427 = vpack.c.b16 %v1425, %v1424
    %1430 = vmatprep.subr.bf16.mxu0 0
    %1431 = vmatpush1.bf16.msra.mxu0 %v1426
    %1432 = vmatprep.subr.bf16.mxu0 0
    %1433 = vmatpush1.bf16.msra.mxu0 %v1427
    %1434 = vmatprep.subr.bf16.mxu0 0
    %1435 = vmatpush1.bf16.msra.mxu0 0
    %1436 = vmatprep.subr.bf16.mxu0 0
    %1437 = vmatpush1.bf16.msra.mxu0 0
    %1438 = vmatprep.subr.bf16.mxu0 0
    %1439 = vmatpush1.bf16.msra.mxu0 0
    %1440 = vmatprep.subr.bf16.mxu0 0
    %1441 = vmatpush1.bf16.msra.mxu0 0
    %1442 = vmatprep.subr.bf16.mxu0 0
    %1443 = vmatpush1.bf16.msra.mxu0 0
    %1444 = vmatprep.subr.bf16.mxu0 0
    %1445 = vmatpush1.bf16.msra.mxu0 0
    %1446 = vmatprep.subr.bf16.mxu0 0
    %1447 = vmatpush1.bf16.msra.mxu0 0
    %1448 = vmatprep.subr.bf16.mxu0 0
    %1449 = vmatpush1.bf16.msra.mxu0 0
    %1450 = vmatprep.subr.bf16.mxu0 0
    %1451 = vmatpush1.bf16.msra.mxu0 0
    %1452 = vmatprep.subr.bf16.mxu0 0
    %1453 = vmatpush1.bf16.msra.mxu0 0
    %1454 = vmatprep.subr.bf16.mxu0 0
    %1455 = vmatpush1.bf16.msra.mxu0 0
    %1456 = vmatprep.subr.bf16.mxu0 0
    %1457 = vmatpush1.bf16.msra.mxu0 0
    %1458 = vmatprep.subr.bf16.mxu0 0
    %1459 = vmatpush1.bf16.msra.mxu0 0
    %1460 = vmatprep.subr.bf16.mxu0 0
    %1461 = vmatpush1.bf16.msra.mxu0 0
    %1462 = vmatprep.mubr.bf16.mxu0 0
    %1463 = vmatmul.mubr.bf16.gmra.mrb[0].mxu0 %v1296
    %v1464 = vpop.f32.mrb[0].mxu0
    %v1465 = vadd.f32 %v1416, %v1464
    %v1466 = vpop.f32.mrb[0].mxu0
    %v1467 = vpop.f32.mrb[0].mxu0
    %v1468 = vadd.f32 %v1416, %v1467
    %v1469 = vpop.f32.mrb[0].mxu0
    %1470 = vdwg.mxu0
    %v1471 = vpack.c.bf16 %v1333, %v1333
    %v1472 = vpack.c.bf16 %v1336, %v1336
    %v1473 = vpack.c.bf16 %v1399, %v1399
    %v1474 = vpack.c.bf16 %v1402, %v1402
    %v1475 = vpack.c.bf16 %v1465, %v1465
    %v1476 = vpack.c.bf16 %v1468, %v1468
    %v1478 = vsel %vm487, %v1471, 0
    %v1481 = vsel %vm487, %v1473, 0
    %1483 = vmatprep.subr.bf16.mxu0 0
    %1484 = vmatpush1.bf16.xpose.msra.mxu0 %v1481
    %1485 = vmatprep.subr.bf16.mxu0 0
    %1486 = vmatpush1.bf16.xpose.msra.mxu0 0
    %1487 = vmatprep.subr.bf16.mxu0 0
    %1488 = vmatpush1.bf16.xpose.msra.mxu0 0
    %1489 = vmatprep.subr.bf16.mxu0 0
    %1490 = vmatpush1.bf16.xpose.msra.mxu0 0
    %1491 = vmatprep.subr.bf16.mxu0 0
    %1492 = vmatpush1.bf16.xpose.msra.mxu0 0
    %1493 = vmatprep.subr.bf16.mxu0 0
    %1494 = vmatpush1.bf16.xpose.msra.mxu0 0
    %1495 = vmatprep.subr.bf16.mxu0 0
    %1496 = vmatpush1.bf16.xpose.msra.mxu0 0
    %1497 = vmatprep.subr.bf16.mxu0 0
    %1498 = vmatpush1.bf16.xpose.msra.mxu0 0
    %1499 = vmatprep.subr.bf16.mxu0 0
    %1500 = vmatpush1.bf16.xpose.msra.mxu0 0
    %1501 = vmatprep.subr.bf16.mxu0 0
    %1502 = vmatpush1.bf16.xpose.msra.mxu0 0
    %1503 = vmatprep.subr.bf16.mxu0 0
    %1504 = vmatpush1.bf16.xpose.msra.mxu0 0
    %1505 = vmatprep.subr.bf16.mxu0 0
    %1506 = vmatpush1.bf16.xpose.msra.mxu0 0
    %1507 = vmatprep.subr.bf16.mxu0 0
    %1508 = vmatpush1.bf16.xpose.msra.mxu0 0
    %1509 = vmatprep.subr.bf16.mxu0 0
    %1510 = vmatpush1.bf16.xpose.msra.mxu0 0
    %1511 = vmatprep.subr.bf16.mxu0 0
    %1512 = vmatpush1.bf16.xpose.msra.mxu0 0
    %1513 = vmatprep.subr.bf16.mxu0 0
    %1514 = vmatpush1.bf16.xpose.msra.mxu0 0
    %1515 = vmatprep.mubr.bf16.mxu0 0
    %1516 = vmatmul.mubr.bf16.gmra.mrb[0].mxu0 %v1478
    %v1517 = vpop.f32.mrb[0].mxu0
    %v1518 = vadd.f32 0.0, %v1517
    %v1519 = vpop.f32.mrb[0].mxu0
    %v1520 = vpop.f32.mrb[0].mxu0
    %v1521 = vpop.f32.mrb[0].mxu0
    %1522 = vdwg.mxu0
    %v1524 = vsel %vm487, %v1472, 0
    %v1527 = vsel %vm487, %v1474, 0
    %1529 = vmatprep.subr.bf16.mxu0 0
    %1530 = vmatpush1.bf16.xpose.msra.mxu0 %v1527
    %1531 = vmatprep.subr.bf16.mxu0 0
    %1532 = vmatpush1.bf16.xpose.msra.mxu0 0
    %1533 = vmatprep.subr.bf16.mxu0 0
    %1534 = vmatpush1.bf16.xpose.msra.mxu0 0
    %1535 = vmatprep.subr.bf16.mxu0 0
    %1536 = vmatpush1.bf16.xpose.msra.mxu0 0
    %1537 = vmatprep.subr.bf16.mxu0 0
    %1538 = vmatpush1.bf16.xpose.msra.mxu0 0
    %1539 = vmatprep.subr.bf16.mxu0 0
    %1540 = vmatpush1.bf16.xpose.msra.mxu0 0
    %1541 = vmatprep.subr.bf16.mxu0 0
    %1542 = vmatpush1.bf16.xpose.msra.mxu0 0
    %1543 = vmatprep.subr.bf16.mxu0 0
    %1544 = vmatpush1.bf16.xpose.msra.mxu0 0
    %1545 = vmatprep.subr.bf16.mxu0 0
    %1546 = vmatpush1.bf16.xpose.msra.mxu0 0
    %1547 = vmatprep.subr.bf16.mxu0 0
    %1548 = vmatpush1.bf16.xpose.msra.mxu0 0
    %1549 = vmatprep.subr.bf16.mxu0 0
    %1550 = vmatpush1.bf16.xpose.msra.mxu0 0
    %1551 = vmatprep.subr.bf16.mxu0 0
    %1552 = vmatpush1.bf16.xpose.msra.mxu0 0
    %1553 = vmatprep.subr.bf16.mxu0 0
    %1554 = vmatpush1.bf16.xpose.msra.mxu0 0
    %1555 = vmatprep.subr.bf16.mxu0 0
    %1556 = vmatpush1.bf16.xpose.msra.mxu0 0
    %1557 = vmatprep.subr.bf16.mxu0 0
    %1558 = vmatpush1.bf16.xpose.msra.mxu0 0
    %1559 = vmatprep.subr.bf16.mxu0 0
    %1560 = vmatpush1.bf16.xpose.msra.mxu0 0
    %1561 = vmatprep.mubr.bf16.mxu0 0
    %1562 = vmatmul.mubr.bf16.gmra.mrb[0].mxu0 %v1524
    %v1563 = vpop.f32.mrb[0].mxu0
    %v1564 = vadd.f32 0.0, %v1563
    %v1565 = vpop.f32.mrb[0].mxu0
    %v1566 = vpop.f32.mrb[0].mxu0
    %v1567 = vpop.f32.mrb[0].mxu0
    %1568 = vdwg.mxu0
    %v1569 = vmul.f32 %v1518, 0.25
    %v1570 = vmul.f32 %v1564, 0.25
    %v1571 = vsel %vm582, %v1569, -inf
    %1572 = vmax.xlane.f32.xlu0 %v1571
    %v1573 = vpop.xlane.xlu0 %1572
    %v1574 = vsel %vm582, %v1570, -inf
    %1575 = vmax.xlane.f32.xlu0 %v1574
    %v1576 = vpop.xlane.xlu0 %1575
    %v1577 = vsub.f32 %v1569, %v1573
    %v1578 = vsub.f32 %v1570, %v1576
    %v1579 = vmul.f32 %v1577, 1.442695
    %v1580 = vpow.pop %v1579
    %v1581 = vmul.f32 %v1578, 1.442695
    %v1582 = vpow.pop %v1581
    %v1583 = vsel %vm582, %v1580, 0.0
    %1584 = vadd.xlane.f32.xlu0 %v1583
    %v1585 = vpop.xlane.xlu0 %1584
    %v1586 = vsel %vm582, %v1582, 0.0
    %1587 = vadd.xlane.f32.xlu0 %v1586
    %v1588 = vpop.xlane.xlu0 %1587
    %v1589 = vrcp.pop %v1585
    %v1590 = vrcp.pop %v1588
    %v1591 = vmul.f32 %v1580, %v1589
    %v1592 = vmul.f32 %v1582, %v1590
    %v1593 = vpack.c.bf16 %v1591, %v1591
    %v1594 = vpack.c.bf16 %v1592, %v1592
    %v1596 = vsel %vm582, %v1593, 0
    %v1599 = vsel %vm610, %v1475, 0
    %1601 = vmatprep.subr.bf16.mxu0 0
    %1602 = vmatpush1.bf16.msra.mxu0 %v1599
    %1603 = vmatprep.subr.bf16.mxu0 0
    %1604 = vmatpush1.bf16.msra.mxu0 0
    %1605 = vmatprep.subr.bf16.mxu0 0
    %1606 = vmatpush1.bf16.msra.mxu0 0
    %1607 = vmatprep.subr.bf16.mxu0 0
    %1608 = vmatpush1.bf16.msra.mxu0 0
    %1609 = vmatprep.subr.bf16.mxu0 0
    %1610 = vmatpush1.bf16.msra.mxu0 0
    %1611 = vmatprep.subr.bf16.mxu0 0
    %1612 = vmatpush1.bf16.msra.mxu0 0
    %1613 = vmatprep.subr.bf16.mxu0 0
    %1614 = vmatpush1.bf16.msra.mxu0 0
    %1615 = vmatprep.subr.bf16.mxu0 0
    %1616 = vmatpush1.bf16.msra.mxu0 0
    %1617 = vmatprep.subr.bf16.mxu0 0
    %1618 = vmatpush1.bf16.msra.mxu0 0
    %1619 = vmatprep.subr.bf16.mxu0 0
    %1620 = vmatpush1.bf16.msra.mxu0 0
    %1621 = vmatprep.subr.bf16.mxu0 0
    %1622 = vmatpush1.bf16.msra.mxu0 0
    %1623 = vmatprep.subr.bf16.mxu0 0
    %1624 = vmatpush1.bf16.msra.mxu0 0
    %1625 = vmatprep.subr.bf16.mxu0 0
    %1626 = vmatpush1.bf16.msra.mxu0 0
    %1627 = vmatprep.subr.bf16.mxu0 0
    %1628 = vmatpush1.bf16.msra.mxu0 0
    %1629 = vmatprep.subr.bf16.mxu0 0
    %1630 = vmatpush1.bf16.msra.mxu0 0
    %1631 = vmatprep.subr.bf16.mxu0 0
    %1632 = vmatpush1.bf16.msra.mxu0 0
    %1633 = vmatprep.mubr.bf16.mxu0 0
    %1634 = vmatmul.mubr.bf16.gmra.mrb[0].mxu0 %v1596
    %v1635 = vpop.f32.mrb[0].mxu0
    %v1636 = vadd.f32 0.0, %v1635
    %v1637 = vpop.f32.mrb[0].mxu0
    %v1638 = vpop.f32.mrb[0].mxu0
    %v1639 = vpop.f32.mrb[0].mxu0
    %1640 = vdwg.mxu0
    %v1642 = vsel %vm582, %v1594, 0
    %v1645 = vsel %vm610, %v1476, 0
    %1647 = vmatprep.subr.bf16.mxu0 0
    %1648 = vmatpush1.bf16.msra.mxu0 %v1645
    %1649 = vmatprep.subr.bf16.mxu0 0
    %1650 = vmatpush1.bf16.msra.mxu0 0
    %1651 = vmatprep.subr.bf16.mxu0 0
    %1652 = vmatpush1.bf16.msra.mxu0 0
    %1653 = vmatprep.subr.bf16.mxu0 0
    %1654 = vmatpush1.bf16.msra.mxu0 0
    %1655 = vmatprep.subr.bf16.mxu0 0
    %1656 = vmatpush1.bf16.msra.mxu0 0
    %1657 = vmatprep.subr.bf16.mxu0 0
    %1658 = vmatpush1.bf16.msra.mxu0 0
    %1659 = vmatprep.subr.bf16.mxu0 0
    %1660 = vmatpush1.bf16.msra.mxu0 0
    %1661 = vmatprep.subr.bf16.mxu0 0
    %1662 = vmatpush1.bf16.msra.mxu0 0
    %1663 = vmatprep.subr.bf16.mxu0 0
    %1664 = vmatpush1.bf16.msra.mxu0 0
    %1665 = vmatprep.subr.bf16.mxu0 0
    %1666 = vmatpush1.bf16.msra.mxu0 0
    %1667 = vmatprep.subr.bf16.mxu0 0
    %1668 = vmatpush1.bf16.msra.mxu0 0
    %1669 = vmatprep.subr.bf16.mxu0 0
    %1670 = vmatpush1.bf16.msra.mxu0 0
    %1671 = vmatprep.subr.bf16.mxu0 0
    %1672 = vmatpush1.bf16.msra.mxu0 0
    %1673 = vmatprep.subr.bf16.mxu0 0
    %1674 = vmatpush1.bf16.msra.mxu0 0
    %1675 = vmatprep.subr.bf16.mxu0 0
    %1676 = vmatpush1.bf16.msra.mxu0 0
    %1677 = vmatprep.subr.bf16.mxu0 0
    %1678 = vmatpush1.bf16.msra.mxu0 0
    %1679 = vmatprep.mubr.bf16.mxu0 0
    %1680 = vmatmul.mubr.bf16.gmra.mrb[0].mxu0 %v1642
    %v1681 = vpop.f32.mrb[0].mxu0
    %v1682 = vadd.f32 0.0, %v1681
    %v1683 = vpop.f32.mrb[0].mxu0
    %v1684 = vpop.f32.mrb[0].mxu0
    %v1685 = vpop.f32.mrb[0].mxu0
    %1686 = vdwg.mxu0
    %1688 = vrot.lane.b32.xlu0 %v1471, 112
    %v1689 = vpop.permute.xlu0 %1688
    %1691 = vrot.lane.b32.xlu0 %v1473, 112
    %v1692 = vpop.permute.xlu0 %1691
    %v1694 = vsel %vm487, %v1689, 0
    %v1697 = vsel %vm487, %v1692, 0
    %1699 = vmatprep.subr.bf16.mxu0 0
    %1700 = vmatpush1.bf16.xpose.msra.mxu0 %v1697
    %1701 = vmatprep.subr.bf16.mxu0 0
    %1702 = vmatpush1.bf16.xpose.msra.mxu0 0
    %1703 = vmatprep.subr.bf16.mxu0 0
    %1704 = vmatpush1.bf16.xpose.msra.mxu0 0
    %1705 = vmatprep.subr.bf16.mxu0 0
    %1706 = vmatpush1.bf16.xpose.msra.mxu0 0
    %1707 = vmatprep.subr.bf16.mxu0 0
    %1708 = vmatpush1.bf16.xpose.msra.mxu0 0
    %1709 = vmatprep.subr.bf16.mxu0 0
    %1710 = vmatpush1.bf16.xpose.msra.mxu0 0
    %1711 = vmatprep.subr.bf16.mxu0 0
    %1712 = vmatpush1.bf16.xpose.msra.mxu0 0
    %1713 = vmatprep.subr.bf16.mxu0 0
    %1714 = vmatpush1.bf16.xpose.msra.mxu0 0
    %1715 = vmatprep.subr.bf16.mxu0 0
    %1716 = vmatpush1.bf16.xpose.msra.mxu0 0
    %1717 = vmatprep.subr.bf16.mxu0 0
    %1718 = vmatpush1.bf16.xpose.msra.mxu0 0
    %1719 = vmatprep.subr.bf16.mxu0 0
    %1720 = vmatpush1.bf16.xpose.msra.mxu0 0
    %1721 = vmatprep.subr.bf16.mxu0 0
    %1722 = vmatpush1.bf16.xpose.msra.mxu0 0
    %1723 = vmatprep.subr.bf16.mxu0 0
    %1724 = vmatpush1.bf16.xpose.msra.mxu0 0
    %1725 = vmatprep.subr.bf16.mxu0 0
    %1726 = vmatpush1.bf16.xpose.msra.mxu0 0
    %1727 = vmatprep.subr.bf16.mxu0 0
    %1728 = vmatpush1.bf16.xpose.msra.mxu0 0
    %1729 = vmatprep.subr.bf16.mxu0 0
    %1730 = vmatpush1.bf16.xpose.msra.mxu0 0
    %1731 = vmatprep.mubr.bf16.mxu0 0
    %1732 = vmatmul.mubr.bf16.gmra.mrb[0].mxu0 %v1694
    %v1733 = vpop.f32.mrb[0].mxu0
    %v1734 = vadd.f32 0.0, %v1733
    %v1735 = vpop.f32.mrb[0].mxu0
    %v1736 = vpop.f32.mrb[0].mxu0
    %v1737 = vpop.f32.mrb[0].mxu0
    %1738 = vdwg.mxu0
    %1740 = vrot.lane.b32.xlu0 %v1472, 112
    %v1741 = vpop.permute.xlu0 %1740
    %1743 = vrot.lane.b32.xlu0 %v1474, 112
    %v1744 = vpop.permute.xlu0 %1743
    %v1746 = vsel %vm487, %v1741, 0
    %v1749 = vsel %vm487, %v1744, 0
    %1751 = vmatprep.subr.bf16.mxu0 0
    %1752 = vmatpush1.bf16.xpose.msra.mxu0 %v1749
    %1753 = vmatprep.subr.bf16.mxu0 0
    %1754 = vmatpush1.bf16.xpose.msra.mxu0 0
    %1755 = vmatprep.subr.bf16.mxu0 0
    %1756 = vmatpush1.bf16.xpose.msra.mxu0 0
    %1757 = vmatprep.subr.bf16.mxu0 0
    %1758 = vmatpush1.bf16.xpose.msra.mxu0 0
    %1759 = vmatprep.subr.bf16.mxu0 0
    %1760 = vmatpush1.bf16.xpose.msra.mxu0 0
    %1761 = vmatprep.subr.bf16.mxu0 0
    %1762 = vmatpush1.bf16.xpose.msra.mxu0 0
    %1763 = vmatprep.subr.bf16.mxu0 0
    %1764 = vmatpush1.bf16.xpose.msra.mxu0 0
    %1765 = vmatprep.subr.bf16.mxu0 0
    %1766 = vmatpush1.bf16.xpose.msra.mxu0 0
    %1767 = vmatprep.subr.bf16.mxu0 0
    %1768 = vmatpush1.bf16.xpose.msra.mxu0 0
    %1769 = vmatprep.subr.bf16.mxu0 0
    %1770 = vmatpush1.bf16.xpose.msra.mxu0 0
    %1771 = vmatprep.subr.bf16.mxu0 0
    %1772 = vmatpush1.bf16.xpose.msra.mxu0 0
    %1773 = vmatprep.subr.bf16.mxu0 0
    %1774 = vmatpush1.bf16.xpose.msra.mxu0 0
    %1775 = vmatprep.subr.bf16.mxu0 0
    %1776 = vmatpush1.bf16.xpose.msra.mxu0 0
    %1777 = vmatprep.subr.bf16.mxu0 0
    %1778 = vmatpush1.bf16.xpose.msra.mxu0 0
    %1779 = vmatprep.subr.bf16.mxu0 0
    %1780 = vmatpush1.bf16.xpose.msra.mxu0 0
    %1781 = vmatprep.subr.bf16.mxu0 0
    %1782 = vmatpush1.bf16.xpose.msra.mxu0 0
    %1783 = vmatprep.mubr.bf16.mxu0 0
    %1784 = vmatmul.mubr.bf16.gmra.mrb[0].mxu0 %v1746
    %v1785 = vpop.f32.mrb[0].mxu0
    %v1786 = vadd.f32 0.0, %v1785
    %v1787 = vpop.f32.mrb[0].mxu0
    %v1788 = vpop.f32.mrb[0].mxu0
    %v1789 = vpop.f32.mrb[0].mxu0
    %1790 = vdwg.mxu0
    %v1791 = vmul.f32 %v1734, 0.25
    %v1792 = vmul.f32 %v1786, 0.25
    %v1793 = vsel %vm582, %v1791, -inf
    %1794 = vmax.xlane.f32.xlu0 %v1793
    %v1795 = vpop.xlane.xlu0 %1794
    %v1796 = vsel %vm582, %v1792, -inf
    %1797 = vmax.xlane.f32.xlu0 %v1796
    %v1798 = vpop.xlane.xlu0 %1797
    %v1799 = vsub.f32 %v1791, %v1795
    %v1800 = vsub.f32 %v1792, %v1798
    %v1801 = vmul.f32 %v1799, 1.442695
    %v1802 = vpow.pop %v1801
    %v1803 = vmul.f32 %v1800, 1.442695
    %v1804 = vpow.pop %v1803
    %v1805 = vsel %vm582, %v1802, 0.0
    %1806 = vadd.xlane.f32.xlu0 %v1805
    %v1807 = vpop.xlane.xlu0 %1806
    %v1808 = vsel %vm582, %v1804, 0.0
    %1809 = vadd.xlane.f32.xlu0 %v1808
    %v1810 = vpop.xlane.xlu0 %1809
    %v1811 = vrcp.pop %v1807
    %v1812 = vrcp.pop %v1810
    %v1813 = vmul.f32 %v1802, %v1811
    %v1814 = vmul.f32 %v1804, %v1812
    %v1815 = vpack.c.bf16 %v1813, %v1813
    %v1816 = vpack.c.bf16 %v1814, %v1814
    %1818 = vrot.lane.b32.xlu0 %v1475, 112
    %v1819 = vpop.permute.xlu0 %1818
    %v1821 = vsel %vm582, %v1815, 0
    %v1824 = vsel %vm610, %v1819, 0
    %1826 = vmatprep.subr.bf16.mxu0 0
    %1827 = vmatpush1.bf16.msra.mxu0 %v1824
    %1828 = vmatprep.subr.bf16.mxu0 0
    %1829 = vmatpush1.bf16.msra.mxu0 0
    %1830 = vmatprep.subr.bf16.mxu0 0
    %1831 = vmatpush1.bf16.msra.mxu0 0
    %1832 = vmatprep.subr.bf16.mxu0 0
    %1833 = vmatpush1.bf16.msra.mxu0 0
    %1834 = vmatprep.subr.bf16.mxu0 0
    %1835 = vmatpush1.bf16.msra.mxu0 0
    %1836 = vmatprep.subr.bf16.mxu0 0
    %1837 = vmatpush1.bf16.msra.mxu0 0
    %1838 = vmatprep.subr.bf16.mxu0 0
    %1839 = vmatpush1.bf16.msra.mxu0 0
    %1840 = vmatprep.subr.bf16.mxu0 0
    %1841 = vmatpush1.bf16.msra.mxu0 0
    %1842 = vmatprep.subr.bf16.mxu0 0
    %1843 = vmatpush1.bf16.msra.mxu0 0
    %1844 = vmatprep.subr.bf16.mxu0 0
    %1845 = vmatpush1.bf16.msra.mxu0 0
    %1846 = vmatprep.subr.bf16.mxu0 0
    %1847 = vmatpush1.bf16.msra.mxu0 0
    %1848 = vmatprep.subr.bf16.mxu0 0
    %1849 = vmatpush1.bf16.msra.mxu0 0
    %1850 = vmatprep.subr.bf16.mxu0 0
    %1851 = vmatpush1.bf16.msra.mxu0 0
    %1852 = vmatprep.subr.bf16.mxu0 0
    %1853 = vmatpush1.bf16.msra.mxu0 0
    %1854 = vmatprep.subr.bf16.mxu0 0
    %1855 = vmatpush1.bf16.msra.mxu0 0
    %1856 = vmatprep.subr.bf16.mxu0 0
    %1857 = vmatpush1.bf16.msra.mxu0 0
    %1858 = vmatprep.mubr.bf16.mxu0 0
    %1859 = vmatmul.mubr.bf16.gmra.mrb[0].mxu0 %v1821
    %v1860 = vpop.f32.mrb[0].mxu0
    %v1861 = vadd.f32 0.0, %v1860
    %v1862 = vpop.f32.mrb[0].mxu0
    %v1863 = vpop.f32.mrb[0].mxu0
    %v1864 = vpop.f32.mrb[0].mxu0
    %1865 = vdwg.mxu0
    %1867 = vrot.lane.b32.xlu0 %v1476, 112
    %v1868 = vpop.permute.xlu0 %1867
    %v1870 = vsel %vm582, %v1816, 0
    %v1873 = vsel %vm610, %v1868, 0
    %1875 = vmatprep.subr.bf16.mxu0 0
    %1876 = vmatpush1.bf16.msra.mxu0 %v1873
    %1877 = vmatprep.subr.bf16.mxu0 0
    %1878 = vmatpush1.bf16.msra.mxu0 0
    %1879 = vmatprep.subr.bf16.mxu0 0
    %1880 = vmatpush1.bf16.msra.mxu0 0
    %1881 = vmatprep.subr.bf16.mxu0 0
    %1882 = vmatpush1.bf16.msra.mxu0 0
    %1883 = vmatprep.subr.bf16.mxu0 0
    %1884 = vmatpush1.bf16.msra.mxu0 0
    %1885 = vmatprep.subr.bf16.mxu0 0
    %1886 = vmatpush1.bf16.msra.mxu0 0
    %1887 = vmatprep.subr.bf16.mxu0 0
    %1888 = vmatpush1.bf16.msra.mxu0 0
    %1889 = vmatprep.subr.bf16.mxu0 0
    %1890 = vmatpush1.bf16.msra.mxu0 0
    %1891 = vmatprep.subr.bf16.mxu0 0
    %1892 = vmatpush1.bf16.msra.mxu0 0
    %1893 = vmatprep.subr.bf16.mxu0 0
    %1894 = vmatpush1.bf16.msra.mxu0 0
    %1895 = vmatprep.subr.bf16.mxu0 0
    %1896 = vmatpush1.bf16.msra.mxu0 0
    %1897 = vmatprep.subr.bf16.mxu0 0
    %1898 = vmatpush1.bf16.msra.mxu0 0
    %1899 = vmatprep.subr.bf16.mxu0 0
    %1900 = vmatpush1.bf16.msra.mxu0 0
    %1901 = vmatprep.subr.bf16.mxu0 0
    %1902 = vmatpush1.bf16.msra.mxu0 0
    %1903 = vmatprep.subr.bf16.mxu0 0
    %1904 = vmatpush1.bf16.msra.mxu0 0
    %1905 = vmatprep.subr.bf16.mxu0 0
    %1906 = vmatpush1.bf16.msra.mxu0 0
    %1907 = vmatprep.mubr.bf16.mxu0 0
    %1908 = vmatmul.mubr.bf16.gmra.mrb[0].mxu0 %v1870
    %v1909 = vpop.f32.mrb[0].mxu0
    %v1910 = vadd.f32 0.0, %v1909
    %v1911 = vpop.f32.mrb[0].mxu0
    %v1912 = vpop.f32.mrb[0].mxu0
    %v1913 = vpop.f32.mrb[0].mxu0
    %1914 = vdwg.mxu0
    %1917 = vrot.lane.b32.xlu0 %v1861, 16
    %v1918 = vpop.permute.xlu0 %1917
    %1919 = vrot.lane.b32.xlu0 %v1910, 16
    %v1920 = vpop.permute.xlu0 %1919
    %v1923 = vsel %vm487, %v1636, %v1918
    %v1924 = vsel %vm487, %v1682, %v1920
    %s1925 = scalar_lea.vmem [#allocation11], 16
    %v1926 = vld [vmem:[%s1925] sm:$0xf]
    %v1927 = vld [vmem:[%s1925 + $0x4] sm:$0xf]
    %v1928 = vld [vmem:[%s1925 + $0x8] sm:$0xf]
    %v1929 = vld [vmem:[%s1925 + $0xc] sm:$0xf]
    %v1930 = vpack.c.bf16 %v1924, %v1923
    %s1931 = scalar_lea.vmem [#allocation13], 1
    %v1932 = vld [vmem:[%s1931] sm:$0x1]
    %v1934 = vlaneseq
    %v1935 = vshrl.u32 %v1934, 7
    %v1936 = vsub.s32 0, %v1935
    %v1937 = vrot.slane %v1932, %v1936
    %v1943 = vunpack.c.l.b16 %v1926
    %v1944 = vunpack.c.l.b16 %v1927
    %v1945 = vunpack.c.l.b16 %v1928
    %v1946 = vunpack.c.l.b16 %v1929
    %v1947 = vpack.c.b16 %v1944, %v1943
    %v1948 = vpack.c.b16 %v1946, %v1945
    %v1952 = vsel %vm241, %v1930, 0
    %1954 = vmatprep.subr.bf16.mxu0 0
    %1955 = vmatpush1.bf16.msra.mxu0 %v1947
    %1956 = vmatprep.subr.bf16.mxu0 0
    %1957 = vmatpush1.bf16.msra.mxu0 %v1948
    %1958 = vmatprep.subr.bf16.mxu0 0
    %1959 = vmatpush1.bf16.msra.mxu0 0
    %1960 = vmatprep.subr.bf16.mxu0 0
    %1961 = vmatpush1.bf16.msra.mxu0 0
    %1962 = vmatprep.subr.bf16.mxu0 0
    %1963 = vmatpush1.bf16.msra.mxu0 0
    %1964 = vmatprep.subr.bf16.mxu0 0
    %1965 = vmatpush1.bf16.msra.mxu0 0
    %1966 = vmatprep.subr.bf16.mxu0 0
    %1967 = vmatpush1.bf16.msra.mxu0 0
    %1968 = vmatprep.subr.bf16.mxu0 0
    %1969 = vmatpush1.bf16.msra.mxu0 0
    %1970 = vmatprep.subr.bf16.mxu0 0
    %1971 = vmatpush1.bf16.msra.mxu0 0
    %1972 = vmatprep.subr.bf16.mxu0 0
    %1973 = vmatpush1.bf16.msra.mxu0 0
    %1974 = vmatprep.subr.bf16.mxu0 0
    %1975 = vmatpush1.bf16.msra.mxu0 0
    %1976 = vmatprep.subr.bf16.mxu0 0
    %1977 = vmatpush1.bf16.msra.mxu0 0
    %1978 = vmatprep.subr.bf16.mxu0 0
    %1979 = vmatpush1.bf16.msra.mxu0 0
    %1980 = vmatprep.subr.bf16.mxu0 0
    %1981 = vmatpush1.bf16.msra.mxu0 0
    %1982 = vmatprep.subr.bf16.mxu0 0
    %1983 = vmatpush1.bf16.msra.mxu0 0
    %1984 = vmatprep.subr.bf16.mxu0 0
    %1985 = vmatpush1.bf16.msra.mxu0 0
    %1986 = vmatprep.mubr.bf16.mxu0 0
    %1987 = vmatmul.mubr.bf16.gmra.mrb[0].mxu0 %v1952
    %v1988 = vpop.f32.mrb[0].mxu0
    %v1989 = vadd.f32 %v1937, %v1988
    %v1990 = vpop.f32.mrb[0].mxu0
    %v1991 = vpop.f32.mrb[0].mxu0
    %v1992 = vadd.f32 %v1937, %v1991
    %v1993 = vpop.f32.mrb[0].mxu0
    %1994 = vdwg.mxu0
    %v1995 = vadd.f32 %v1267, %v1989
    %v1996 = vadd.f32 %v1268, %v1992
    %s1997 = scalar_lea.vmem [#allocation14], 1
    %v1998 = vld [vmem:[%s1997] sm:$0x1]
    %s1999 = scalar_lea.vmem [#allocation16], 1
    %v2000 = vld [vmem:[%s1999] sm:$0x1]
    %v2001 = vsel %vm241, %v1995, 0.0
    %2002 = vadd.xlane.f32.xlu0 %v2001
    %v2003 = vpop.xlane.xlu0 %2002
    %v2004 = vsel %vm241, %v1996, 0.0
    %2005 = vadd.xlane.f32.xlu0 %v2004
    %v2006 = vpop.xlane.xlu0 %2005
    %v2007 = vmul.f32 %v2003, %v248
    %v2008 = vmul.f32 %v2006, %v248
    %v2009 = vsub.f32 %v1995, %v2007
    %v2010 = vsub.f32 %v1996, %v2008
    %v2011 = vmul.f32 %v2009, %v2009
    %v2012 = vmul.f32 %v2010, %v2010
    %v2013 = vsel %vm241, %v2011, 0.0
    %2014 = vadd.xlane.f32.xlu0 %v2013
    %v2015 = vpop.xlane.xlu0 %2014
    %v2016 = vsel %vm241, %v2012, 0.0
    %2017 = vadd.xlane.f32.xlu0 %v2016
    %v2018 = vpop.xlane.xlu0 %2017
    %v2019 = vmul.f32 %v2015, %v248
    %v2020 = vmul.f32 %v2018, %v248
    %v2021 = vadd.f32 %v2019, 1e-12
    %v2022 = vadd.f32 %v2020, 1e-12
    %v2023 = vrsqrt.pop %v2021
    %v2024 = vrsqrt.pop %v2022
    %v2025 = vmul.f32 %v2009, %v2023
    %v2026 = vmul.f32 %v2010, %v2024
    %v2028 = vlaneseq
    %v2029 = vshrl.u32 %v2028, 7
    %v2030 = vsub.s32 0, %v2029
    %v2031 = vrot.slane %v1998, %v2030
    %v2033 = vmul.f32 %v2025, %v2031
    %v2034 = vmul.f32 %v2026, %v2031
    %v2036 = vlaneseq
    %v2037 = vshrl.u32 %v2036, 7
    %v2038 = vsub.s32 0, %v2037
    %v2039 = vrot.slane %v2000, %v2038
    %v2041 = vadd.f32 %v2033, %v2039
    %v2042 = vadd.f32 %v2034, %v2039
    %s2043 = scalar_lea.vmem %s13, 16
    %v2044 = vld [vmem:[%s2043] sm:$0xf]
    %v2045 = vld [vmem:[%s2043 + $0x4] sm:$0xf]
    %v2046 = vld [vmem:[%s2043 + $0x8] sm:$0xf]
    %v2047 = vld [vmem:[%s2043 + $0xc] sm:$0xf]
    %v2048 = vpack.c.bf16 %v2042, %v2041
    %s2049 = scalar_lea.vmem [#allocation17], 1
    %v2050 = vld [vmem:[%s2049] sm:$0x1]
    %v2052 = vlaneseq
    %v2053 = vshrl.u32 %v2052, 7
    %v2054 = vsub.s32 0, %v2053
    %v2055 = vrot.slane %v2050, %v2054
    %v2061 = vunpack.c.l.b16 %v2044
    %v2062 = vunpack.c.l.b16 %v2045
    %v2063 = vunpack.c.l.b16 %v2046
    %v2064 = vunpack.c.l.b16 %v2047
    %v2065 = vpack.c.b16 %v2062, %v2061
    %v2066 = vpack.c.b16 %v2064, %v2063
    %v2070 = vsel %vm241, %v2048, 0
    %2072 = vmatprep.subr.bf16.mxu0 0
    %2073 = vmatpush1.bf16.msra.mxu0 %v2065
    %2074 = vmatprep.subr.bf16.mxu0 0
    %2075 = vmatpush1.bf16.msra.mxu0 %v2066
    %2076 = vmatprep.subr.bf16.mxu0 0
    %2077 = vmatpush1.bf16.msra.mxu0 0
    %2078 = vmatprep.subr.bf16.mxu0 0
    %2079 = vmatpush1.bf16.msra.mxu0 0
    %2080 = vmatprep.subr.bf16.mxu0 0
    %2081 = vmatpush1.bf16.msra.mxu0 0
    %2082 = vmatprep.subr.bf16.mxu0 0
    %2083 = vmatpush1.bf16.msra.mxu0 0
    %2084 = vmatprep.subr.bf16.mxu0 0
    %2085 = vmatpush1.bf16.msra.mxu0 0
    %2086 = vmatprep.subr.bf16.mxu0 0
    %2087 = vmatpush1.bf16.msra.mxu0 0
    %2088 = vmatprep.subr.bf16.mxu0 0
    %2089 = vmatpush1.bf16.msra.mxu0 0
    %2090 = vmatprep.subr.bf16.mxu0 0
    %2091 = vmatpush1.bf16.msra.mxu0 0
    %2092 = vmatprep.subr.bf16.mxu0 0
    %2093 = vmatpush1.bf16.msra.mxu0 0
    %2094 = vmatprep.subr.bf16.mxu0 0
    %2095 = vmatpush1.bf16.msra.mxu0 0
    %2096 = vmatprep.subr.bf16.mxu0 0
    %2097 = vmatpush1.bf16.msra.mxu0 0
    %2098 = vmatprep.subr.bf16.mxu0 0
    %2099 = vmatpush1.bf16.msra.mxu0 0
    %2100 = vmatprep.subr.bf16.mxu0 0
    %2101 = vmatpush1.bf16.msra.mxu0 0
    %2102 = vmatprep.subr.bf16.mxu0 0
    %2103 = vmatpush1.bf16.msra.mxu0 0
    %2104 = vmatprep.mubr.bf16.mxu0 0
    %2105 = vmatmul.mubr.bf16.gmra.mrb[0].mxu0 %v2070
    %v2106 = vpop.f32.mrb[0].mxu0
    %v2107 = vadd.f32 %v2055, %v2106
    %v2108 = vpop.f32.mrb[0].mxu0
    %v2109 = vpop.f32.mrb[0].mxu0
    %v2110 = vadd.f32 %v2055, %v2109
    %v2111 = vpop.f32.mrb[0].mxu0
    %2112 = vdwg.mxu0
    %v2113 = vmul.f32 %v2107, %v2107
    %v2114 = vmul.f32 %v2110, %v2110
    %v2115 = vmul.f32 %v2107, %v2113
    %v2116 = vmul.f32 %v2110, %v2114
    %v2117 = vmul.f32 %v2115, 0.044715
    %v2118 = vmul.f32 %v2116, 0.044715
    %v2119 = vadd.f32 %v2107, %v2117
    %v2120 = vadd.f32 %v2110, %v2118
    %v2121 = vmul.f32 %v2119, 0.7978846
    %v2122 = vmul.f32 %v2120, 0.7978846
    %v2123 = vtanh.pop %v2121
    %v2124 = vtanh.pop %v2122
    %v2125 = vadd.f32 %v2123, 1.0
    %v2126 = vadd.f32 %v2124, 1.0
    %v2127 = vmul.f32 %v2125, 0.5
    %v2128 = vmul.f32 %v2126, 0.5
    %v2129 = vmul.f32 %v2107, %v2127
    %v2130 = vmul.f32 %v2110, %v2128
    %s2131 = scalar_lea.vmem %s15, 32
    %v2132 = vld [vmem:[%s2131] sm:$0xf]
    %v2133 = vld [vmem:[%s2131 + $0x4] sm:$0xf]
    %v2134 = vld [vmem:[%s2131 + $0x8] sm:$0xf]
    %v2135 = vld [vmem:[%s2131 + $0xc] sm:$0xf]
    %v2136 = vld [vmem:[%s2131 + $0x10] sm:$0xf]
    %v2137 = vld [vmem:[%s2131 + $0x14] sm:$0xf]
    %v2138 = vld [vmem:[%s2131 + $0x18] sm:$0xf]
    %v2139 = vld [vmem:[%s2131 + $0x1c] sm:$0xf]
    %v2140 = vpack.c.bf16 %v2130, %v2129
    %s2141 = scalar_lea.vmem [#allocation19], 1
    %v2142 = vld [vmem:[%s2141] sm:$0x1]
    %v2144 = vlaneseq
    %v2145 = vshrl.u32 %v2144, 7
    %v2146 = vsub.s32 0, %v2145
    %v2147 = vrot.slane %v2142, %v2146
    %v2157 = vunpack.c.l.b16 %v2132
    %v2158 = vunpack.c.l.b16 %v2133
    %v2159 = vunpack.c.l.b16 %v2134
    %v2160 = vunpack.c.l.b16 %v2135
    %v2161 = vunpack.c.l.b16 %v2136
    %v2162 = vunpack.c.l.b16 %v2137
    %v2163 = vunpack.c.l.b16 %v2138
    %v2164 = vunpack.c.l.b16 %v2139
    %v2165 = vpack.c.b16 %v2158, %v2157
    %v2166 = vpack.c.b16 %v2160, %v2159
    %v2167 = vpack.c.b16 %v2162, %v2161
    %v2168 = vpack.c.b16 %v2164, %v2163
    %v2174 = vsel %vm1178, %v2140, 0
    %2176 = vmatprep.subr.bf16.mxu0 0
    %2177 = vmatpush1.bf16.msra.mxu0 %v2165
    %2178 = vmatprep.subr.bf16.mxu0 0
    %2179 = vmatpush1.bf16.msra.mxu0 %v2166
    %2180 = vmatprep.subr.bf16.mxu0 0
    %2181 = vmatpush1.bf16.msra.mxu0 %v2167
    %2182 = vmatprep.subr.bf16.mxu0 0
    %2183 = vmatpush1.bf16.msra.mxu0 %v2168
    %2184 = vmatprep.subr.bf16.mxu0 0
    %2185 = vmatpush1.bf16.msra.mxu0 0
    %2186 = vmatprep.subr.bf16.mxu0 0
    %2187 = vmatpush1.bf16.msra.mxu0 0
    %2188 = vmatprep.subr.bf16.mxu0 0
    %2189 = vmatpush1.bf16.msra.mxu0 0
    %2190 = vmatprep.subr.bf16.mxu0 0
    %2191 = vmatpush1.bf16.msra.mxu0 0
    %2192 = vmatprep.subr.bf16.mxu0 0
    %2193 = vmatpush1.bf16.msra.mxu0 0
    %2194 = vmatprep.subr.bf16.mxu0 0
    %2195 = vmatpush1.bf16.msra.mxu0 0
    %2196 = vmatprep.subr.bf16.mxu0 0
    %2197 = vmatpush1.bf16.msra.mxu0 0
    %2198 = vmatprep.subr.bf16.mxu0 0
    %2199 = vmatpush1.bf16.msra.mxu0 0
    %2200 = vmatprep.subr.bf16.mxu0 0
    %2201 = vmatpush1.bf16.msra.mxu0 0
    %2202 = vmatprep.subr.bf16.mxu0 0
    %2203 = vmatpush1.bf16.msra.mxu0 0
    %2204 = vmatprep.subr.bf16.mxu0 0
    %2205 = vmatpush1.bf16.msra.mxu0 0
    %2206 = vmatprep.subr.bf16.mxu0 0
    %2207 = vmatpush1.bf16.msra.mxu0 0
    %2208 = vmatprep.mubr.bf16.mxu0 0
    %2209 = vmatmul.mubr.bf16.gmra.mrb[0].mxu0 %v2174
    %v2210 = vpop.f32.mrb[0].mxu0
    %v2211 = vadd.f32 %v2147, %v2210
    %v2212 = vpop.f32.mrb[0].mxu0
    %v2213 = vpop.f32.mrb[0].mxu0
    %v2214 = vadd.f32 %v2147, %v2213
    %v2215 = vpop.f32.mrb[0].mxu0
    %2216 = vdwg.mxu0
    %v2217 = vadd.f32 %v2041, %v2211
    %v2218 = vadd.f32 %v2042, %v2214
    %s2219 = scalar_lea.vmem [#allocation20], 1
    %v2220 = vld [vmem:[%s2219] sm:$0x1]
    %s2221 = scalar_lea.vmem %s18, 1
    %v2222 = vld [vmem:[%s2221] sm:$0x1]
    %v2223 = vsel %vm241, %v2217, 0.0
    %2224 = vadd.xlane.f32.xlu0 %v2223
    %v2225 = vpop.xlane.xlu0 %2224
    %v2226 = vsel %vm241, %v2218, 0.0
    %2227 = vadd.xlane.f32.xlu0 %v2226
    %v2228 = vpop.xlane.xlu0 %2227
    %v2229 = vmul.f32 %v2225, %v248
    %v2230 = vmul.f32 %v2228, %v248
    %v2231 = vsub.f32 %v2217, %v2229
    %v2232 = vsub.f32 %v2218, %v2230
    %v2233 = vmul.f32 %v2231, %v2231
    %v2234 = vmul.f32 %v2232, %v2232
    %v2235 = vsel %vm241, %v2233, 0.0
    %2236 = vadd.xlane.f32.xlu0 %v2235
    %v2237 = vpop.xlane.xlu0 %2236
    %v2238 = vsel %vm241, %v2234, 0.0
    %2239 = vadd.xlane.f32.xlu0 %v2238
    %v2240 = vpop.xlane.xlu0 %2239
    %v2241 = vmul.f32 %v2237, %v248
    %v2242 = vmul.f32 %v2240, %v248
    %v2243 = vadd.f32 %v2241, 1e-12
    %v2244 = vadd.f32 %v2242, 1e-12
    %v2245 = vrsqrt.pop %v2243
    %v2246 = vrsqrt.pop %v2244
    %v2247 = vmul.f32 %v2231, %v2245
    %v2248 = vmul.f32 %v2232, %v2246
    %v2250 = vlaneseq
    %v2251 = vshrl.u32 %v2250, 7
    %v2252 = vsub.s32 0, %v2251
    %v2253 = vrot.slane %v2220, %v2252
    %v2255 = vmul.f32 %v2247, %v2253
    %v2256 = vmul.f32 %v2248, %v2253
    %v2258 = vlaneseq
    %v2259 = vshrl.u32 %v2258, 7
    %v2260 = vsub.s32 0, %v2259
    %v2261 = vrot.slane %v2222, %v2260
    %v2263 = vadd.f32 %v2255, %v2261
    %v2264 = vadd.f32 %v2256, %v2261
    %v2265 = vld [vmem:[%s19] sm:$0xf]
    %v2266 = vld [vmem:[%s19 + $0x4] sm:$0xf]
    %v2267 = vld [vmem:[%s19 + $0x8] sm:$0xf]
    %v2268 = vld [vmem:[%s19 + $0xc] sm:$0xf]
    %v2269 = vpack.c.bf16 %v2263, %v2263
    %v2270 = vpack.c.bf16 %v2264, %v2264
    %v2271 = vld [vmem:[%s20] sm:$0x1]
    %v2273 = vlaneseq
    %v2274 = vshrl.u32 %v2273, 7
    %v2275 = vsub.s32 0, %v2274
    %v2276 = vrot.slane %v2271, %v2275
    %v2280 = vunpack.c.l.b16 %v2269
    %v2281 = vunpack.c.l.b16 %v2270
    %v2282 = vrot.slane %v2281, 7
    %vm2283 = vcmask 1041409
    %v2284 = vsel %vm2283, %v2282, %v2280
    %v2285 = vpack.c.b16 %v2284, %v2284
    %v2290 = vunpack.c.l.b16 %v2265
    %v2291 = vunpack.c.l.b16 %v2266
    %v2292 = vunpack.c.l.b16 %v2267
    %v2293 = vunpack.c.l.b16 %v2268
    %v2294 = vpack.c.b16 %v2291, %v2290
    %v2295 = vpack.c.b16 %v2293, %v2292
    %v2299 = vsel %vm241, %v2285, 0
    %2301 = vmatprep.subr.bf16.mxu0 0
    %2302 = vmatpush1.bf16.msra.mxu0 %v2294
    %2303 = vmatprep.subr.bf16.mxu0 0
    %2304 = vmatpush1.bf16.msra.mxu0 %v2295
    %2305 = vmatprep.subr.bf16.mxu0 0
    %2306 = vmatpush1.bf16.msra.mxu0 0
    %2307 = vmatprep.subr.bf16.mxu0 0
    %2308 = vmatpush1.bf16.msra.mxu0 0
    %2309 = vmatprep.subr.bf16.mxu0 0
    %2310 = vmatpush1.bf16.msra.mxu0 0
    %2311 = vmatprep.subr.bf16.mxu0 0
    %2312 = vmatpush1.bf16.msra.mxu0 0
    %2313 = vmatprep.subr.bf16.mxu0 0
    %2314 = vmatpush1.bf16.msra.mxu0 0
    %2315 = vmatprep.subr.bf16.mxu0 0
    %2316 = vmatpush1.bf16.msra.mxu0 0
    %2317 = vmatprep.subr.bf16.mxu0 0
    %2318 = vmatpush1.bf16.msra.mxu0 0
    %2319 = vmatprep.subr.bf16.mxu0 0
    %2320 = vmatpush1.bf16.msra.mxu0 0
    %2321 = vmatprep.subr.bf16.mxu0 0
    %2322 = vmatpush1.bf16.msra.mxu0 0
    %2323 = vmatprep.subr.bf16.mxu0 0
    %2324 = vmatpush1.bf16.msra.mxu0 0
    %2325 = vmatprep.subr.bf16.mxu0 0
    %2326 = vmatpush1.bf16.msra.mxu0 0
    %2327 = vmatprep.subr.bf16.mxu0 0
    %2328 = vmatpush1.bf16.msra.mxu0 0
    %2329 = vmatprep.subr.bf16.mxu0 0
    %2330 = vmatpush1.bf16.msra.mxu0 0
    %2331 = vmatprep.subr.bf16.mxu0 0
    %2332 = vmatpush1.bf16.msra.mxu0 0
    %2333 = vmatprep.mubr.bf16.mxu0 0
    %2334 = vmatmul.mubr.bf16.gmra.mrb[0].mxu0 %v2299
    %v2335 = vpop.f32.mrb[0].mxu0
    %v2336 = vadd.f32 %v2276, %v2335
    %v2337 = vpop.f32.mrb[0].mxu0
    %v2338 = vpop.f32.mrb[0].mxu0
    %v2339 = vpop.f32.mrb[0].mxu0
    %2340 = vdwg.mxu0
    %v2341 = vtanh.pop %v2336
    %v2342 = vld [vmem:[%s21] sm:$0xf]
    %v2343 = vld [vmem:[%s21 + $0x4] sm:$0xf]
    %v2344 = vld [vmem:[%s21 + $0x8] sm:$0xf]
    %v2345 = vld [vmem:[%s21 + $0xc] sm:$0xf]
    %v2346 = vpack.c.bf16 %v2341, %v2341
    %v2347 = vld [vmem:[%s22] sm:$0x1]
    %v2349 = vlaneseq
    %v2350 = vshrl.u32 %v2349, 7
    %v2351 = vsub.s32 0, %v2350
    %v2352 = vrot.slane %v2347, %v2351
    %v2358 = vunpack.c.l.b16 %v2342
    %v2359 = vunpack.c.l.b16 %v2343
    %v2360 = vunpack.c.l.b16 %v2344
    %v2361 = vunpack.c.l.b16 %v2345
    %v2362 = vpack.c.b16 %v2359, %v2358
    %v2363 = vpack.c.b16 %v2361, %v2360
    %v2367 = vsel %vm241, %v2346, 0
    %2369 = vmatprep.subr.bf16.mxu0 0
    %2370 = vmatpush1.bf16.msra.mxu0 %v2362
    %2371 = vmatprep.subr.bf16.mxu0 0
    %2372 = vmatpush1.bf16.msra.mxu0 %v2363
    %2373 = vmatprep.subr.bf16.mxu0 0
    %2374 = vmatpush1.bf16.msra.mxu0 0
    %2375 = vmatprep.subr.bf16.mxu0 0
    %2376 = vmatpush1.bf16.msra.mxu0 0
    %2377 = vmatprep.subr.bf16.mxu0 0
    %2378 = vmatpush1.bf16.msra.mxu0 0
    %2379 = vmatprep.subr.bf16.mxu0 0
    %2380 = vmatpush1.bf16.msra.mxu0 0
    %2381 = vmatprep.subr.bf16.mxu0 0
    %2382 = vmatpush1.bf16.msra.mxu0 0
    %2383 = vmatprep.subr.bf16.mxu0 0
    %2384 = vmatpush1.bf16.msra.mxu0 0
    %2385 = vmatprep.subr.bf16.mxu0 0
    %2386 = vmatpush1.bf16.msra.mxu0 0
    %2387 = vmatprep.subr.bf16.mxu0 0
    %2388 = vmatpush1.bf16.msra.mxu0 0
    %2389 = vmatprep.subr.bf16.mxu0 0
    %2390 = vmatpush1.bf16.msra.mxu0 0
    %2391 = vmatprep.subr.bf16.mxu0 0
    %2392 = vmatpush1.bf16.msra.mxu0 0
    %2393 = vmatprep.subr.bf16.mxu0 0
    %2394 = vmatpush1.bf16.msra.mxu0 0
    %2395 = vmatprep.subr.bf16.mxu0 0
    %2396 = vmatpush1.bf16.msra.mxu0 0
    %2397 = vmatprep.subr.bf16.mxu0 0
    %2398 = vmatpush1.bf16.msra.mxu0 0
    %2399 = vmatprep.subr.bf16.mxu0 0
    %2400 = vmatpush1.bf16.msra.mxu0 0
    %2401 = vmatprep.mubr.bf16.mxu0 0
    %2402 = vmatmul.mubr.bf16.gmra.mrb[0].mxu0 %v2367
    %v2403 = vpop.f32.mrb[0].mxu0
    %v2404 = vadd.f32 %v2352, %v2403
    %v2405 = vpop.f32.mrb[0].mxu0
    %v2406 = vpop.f32.mrb[0].mxu0
    %v2407 = vpop.f32.mrb[0].mxu0
    %2408 = vdwg.mxu0
    %vm2409 = vcmask 9216
    %2410 = vst.msk [vmem:[#allocation22] sm:$0x3] %vm2409, %v2404
    // Predicated region
    $region142: #{tpu_custom_call.1} parent=1 // pred_check
      _
    $region143: #{tpu_custom_call.1} parent=1 // pred_check_branch
      %2412 = sbr.rel (0) target = $region145
    $region144: #{tpu_custom_call.1} parent=1 // pred_region
      %s2414 = ssub.s32 32, 32
      %2415 = vsyncadd [#allocation4], %s2414
      %s2417 = sshll.u32 [#allocation22], 4
      %s2418 = int_to_ptr.vmem [resolvable:$true] %s2417
      %2420 = dma.vmem_to_hbm [thread:$0]  %s2418, 32, %s23, [#allocation4]
    $region145: #{tpu_custom_call.1} parent=1 // pred_fallthru
      _
    // Predicated region
    $region146: #{tpu_custom_call.1} parent=1 // pred_check
      _
    $region147: #{tpu_custom_call.1} parent=1 // pred_check_branch
      %2422 = sbr.rel (0) target = $region149
    $region148: #{tpu_custom_call.1} parent=1 // pred_region
      %2423 = dma.done [#allocation4], 32
    $region149: #{tpu_custom_call.1} parent=1 // pred_fallthru
      _
    %2424 = vsyncpa [#allocation3], 1
    %2425 = vsyncpa [#allocation6], 1
    %2426 = vsyncpa [#allocation9], 1
    %2427 = vsyncpa [#allocation12], 1
    %2428 = vsyncpa [#allocation15], 1
    %2429 = vsyncpa [#allocation18], 1
    %2430 = vsyncpa [#allocation21], 1
    %2431 = vsyncpa [#allocation4], 1

</llo_original>
